<compile_context>
chip_gen: v5e
topology: v5e:2x2
jax: 0.10.0
libtpu: 0.0.40
codegen_flags: <defaults>
</compile_context>

<pallas_src>
import functools

import jax
import jax.numpy as jnp
from jax import lax
from jax.experimental import pallas as pl
from jax.experimental.pallas import tpu as pltpu

# ---- static configuration ---------------------------------------------------
CIN = 4                         # in_channels
H = W = 17                      # aux-head input spatial size
C0 = 128                        # conv0 out channels
C1 = 768                        # conv1 out channels
CONV1_K = 5                     # conv1 kernel size
POOL_K, POOL_S = 5, 3           # avg_pool2d
P = (H - POOL_K) // POOL_S + 1  # = 5 pooled spatial size
PP = P * P                      # 25 pooled positions (== conv1 taps)
PP_PAD = 32                     # pooled-position axis padded to a sublane multiple
NUM_CLASSES = 5
N_ATTR = 3
NHEAD = NUM_CLASSES + N_ATTR    # fused class+attr head width
BN_EPS = 1e-3

NT = 2                          # C1 halves ("parallel" grid axis -> both TCs on v7x)
TN = C1 // NT                   # 384 (multiple of 128 -> lane aligned)

_CP = pltpu.CompilerParams(
    dimension_semantics=("parallel",),
    vmem_limit_bytes=32 * 1024 * 1024,
)


# ---- the fused kernel ---------------------------------------------------------
def _fused_kernel(x2d_ref, pm_ref, w0_ref, s0_ref, b0_ref,
                  w1_ref, s1_ref, b1_ref, wca_ref,
                  out_ref, a0_ref):
    """avg_pool + conv0/BN/ReLU + conv1/BN/ReLU + fused fc heads (one C1 slice).

    x2d_ref: (N*CIN, H*W) f32        pm_ref:  (H*W, PP_PAD) f32 pooling matrix
    w0_ref:  (CIN, C0)               s0/b0:   (1, C0) folded BN0 affine
    w1_ref:  (PP, C0, TN) bf16       s1/b1:   (1, TN) folded BN1 affine (this slice)
    wca_ref: (TN, NHEAD)             out_ref: (1, N, NHEAD) partial head sums
    a0_ref:  VMEM scratch (N, PP_PAD, C0) bf16
    """
    n = x2d_ref.shape[0] // CIN

    # --- stage 1: avg_pool2d(k=5,s=3) as a single matmul against a constant pooling
    #     matrix, then the 1x1 conv0 as CIN broadcast-FMAs + folded BN + ReLU.
    pooled = jnp.dot(x2d_ref[...], pm_ref[...],
                     preferred_element_type=jnp.float32)          # (N*CIN, PP_PAD)
    pooled_t = pooled.T                                           # (PP_PAD, N*CIN)
    w0 = w0_ref[...]
    scale0 = s0_ref[...]
    shift0 = b0_ref[...]
    for b in range(n):
        pn = pooled_t[:, b * CIN:(b + 1) * CIN]                   # (PP_PAD, CIN)
        acc0 = pn[:, 0:1] * w0[0:1, :]
        for c in range(1, CIN):
            acc0 = acc0 + pn[:, c:c + 1] * w0[c:c + 1, :]         # (PP_PAD, C0)
        a0_ref[b] = jnp.maximum(acc0 * scale0 + shift0, 0.0).astype(jnp.bfloat16)

    # --- stage 2: conv1 (5x5 valid on the 5x5 map == matmul over the 25 taps),
    #     bf16 operands, f32 accumulation, folded BN + ReLU.  Only this C1 slice.
    tn = w1_ref.shape[2]
    acc = jnp.zeros((n, tn), jnp.float32)
    for p in range(PP):
        acc = acc + jnp.dot(a0_ref[:, p, :], w1_ref[p],
                            preferred_element_type=jnp.float32)
    feat = jnp.maximum(acc * s1_ref[...] + b1_ref[...], 0.0)      # (N, TN) f32

    # --- stage 3: fused class + attribute heads, partial sum over this C1 slice.
    out_ref[0] = jnp.dot(feat, wca_ref[...], preferred_element_type=jnp.float32)


# ---- wrapper -------------------------------------------------------------------
def inception_aux_forward(x, params):
    assert x.shape[1:] == (CIN, H, W), "kernel specialized to 17x17 aux input"
    n = x.shape[0]
    x2d = x.reshape(n * CIN, H * W)     # free (contiguous) reshape, no transpose

    partial = pl.pallas_call(
        _fused_kernel,
        out_shape=jax.ShapeDtypeStruct((NT, n, NHEAD), jnp.float32),
        grid=(NT,),
        in_specs=[
            pl.BlockSpec((n * CIN, H * W), lambda i: (0, 0)),      # x2d
            pl.BlockSpec((H * W, PP_PAD), lambda i: (0, 0)),       # pooling matrix
            pl.BlockSpec((CIN, C0), lambda i: (0, 0)),             # w0
            pl.BlockSpec((1, C0), lambda i: (0, 0)),               # scale0
            pl.BlockSpec((1, C0), lambda i: (0, 0)),               # shift0
            pl.BlockSpec((PP, C0, TN), lambda i: (0, 0, i)),       # w1 (bf16), C1-sliced
            pl.BlockSpec((1, TN), lambda i: (0, i)),               # scale1 slice
            pl.BlockSpec((1, TN), lambda i: (0, i)),               # shift1 slice
            pl.BlockSpec((TN, NHEAD), lambda i: (i, 0)),           # fused head weight slice
        ],
        out_specs=pl.BlockSpec((1, n, NHEAD), lambda i: (i, 0, 0)),
        scratch_shapes=[pltpu.VMEM((n, PP_PAD, C0), jnp.bfloat16)],
        compiler_params=_CP,
    )(x2d, params["pool_mat"], params["w0"], params["scale0"], params["shift0"],
      params["w1r"], params["scale1"], params["shift1"], params["wca"])

    # tiny epilogue (fused by XLA with the output slicing): reduce the per-half partial
    # head sums, add biases, and apply cy_fc (connect_CY) to the class logits.
    heads = partial.sum(axis=0)                            # (n, NHEAD)
    cls = heads[:, :NUM_CLASSES] + params["bc"]
    attrs = heads[:, NUM_CLASSES:] + params["ba"]
    out0 = cls + attrs @ params["wcy"] + params["bcy"]
    # matches torch output list: [class logits (with cy_fc added), attr_1, ..., attr_n]
    return [out0] + [attrs[:, i:i + 1] for i in range(N_ATTR)]


# ---- deterministic parameter construction ---------------------------------------
def _pooling_matrix():
    """(H*W, PP_PAD) matrix: column p averages the 5x5 stride-3 window p (zero-padded)."""
    hw = jnp.arange(H * W)
    hh = hw // W
    ww = hw % W
    p = jnp.arange(PP_PAD)
    oh = p // P
    ow = p % P
    valid = p < PP
    in_h = (hh[:, None] >= oh[None, :] * POOL_S) & (hh[:, None] < oh[None, :] * POOL_S + POOL_K)
    in_w = (ww[:, None] >= ow[None, :] * POOL_S) & (ww[:, None] < ow[None, :] * POOL_S + POOL_K)
    return (in_h & in_w & valid[None, :]).astype(jnp.float32) / float(POOL_K * POOL_K)


def init_params(key):
    ks = jax.random.split(key, 16)
    f32 = jnp.float32
    # conv0: Conv2d(CIN, 128, k=1, bias=False) + BN(128, eps=1e-3)
    w0_t = 0.1 * jax.random.normal(ks[0], (C0, CIN, 1, 1), f32)              # OIHW
    g0 = 1.0 + 0.1 * jax.random.normal(ks[1], (C0,), f32)
    b0 = 0.1 * jax.random.normal(ks[2], (C0,), f32)
    m0 = 0.05 * jax.random.normal(ks[3], (C0,), f32)
    v0 = 0.9 + 0.2 * jax.random.uniform(ks[4], (C0,), dtype=f32)
    # conv1: Conv2d(128, 768, k=5, bias=False) + BN(768, eps=1e-3); stddev attr = 0.01
    w1_t = 0.01 * jax.random.normal(ks[5], (C1, C0, CONV1_K, CONV1_K), f32)  # OIHW
    g1 = 1.0 + 0.1 * jax.random.normal(ks[6], (C1,), f32)
    b1 = 0.1 * jax.random.normal(ks[7], (C1,), f32)
    m1 = 0.05 * jax.random.normal(ks[8], (C1,), f32)
    v1 = 0.9 + 0.2 * jax.random.uniform(ks[9], (C1,), dtype=f32)
    # all_fc[0] = FC(768, num_classes); all_fc[1:] = FC(768, 1) x n_attr; stddev = 0.001
    wc_t = 0.001 * jax.random.normal(ks[10], (NUM_CLASSES, C1), f32)
    bc = 0.01 * jax.random.normal(ks[11], (NUM_CLASSES,), f32)
    wa_t = 0.001 * jax.random.normal(ks[12], (N_ATTR, C1), f32)
    ba = 0.01 * jax.random.normal(ks[13], (N_ATTR,), f32)
    # cy_fc = FC(n_attributes, num_classes)  (connect_CY=True, expand_dim=0)
    wcy_t = 0.1 * jax.random.normal(ks[14], (NUM_CLASSES, N_ATTR), f32)
    bcy = 0.01 * jax.random.normal(ks[15], (NUM_CLASSES,), f32)

    s0 = g0 / jnp.sqrt(v0 + BN_EPS)
    s1 = g1 / jnp.sqrt(v1 + BN_EPS)
    params = dict(
        pool_mat=_pooling_matrix(),                                          # (H*W, PP_PAD)
        w0=w0_t.reshape(C0, CIN).T,                                          # (CIN, C0)
        scale0=s0.reshape(1, C0), shift0=(b0 - m0 * s0).reshape(1, C0),
        # conv1 weight in (tap p=kh*5+kw, ci, co) order, bf16 to halve HBM traffic
        w1r=jnp.transpose(w1_t, (2, 3, 1, 0)).reshape(PP, C0, C1).astype(jnp.bfloat16),
        scale1=s1.reshape(1, C1), shift1=(b1 - m1 * s1).reshape(1, C1),
        wca=jnp.concatenate([wc_t.T, wa_t.T], axis=1),                       # (C1, NHEAD)
        bc=bc.reshape(1, NUM_CLASSES), ba=ba.reshape(1, N_ATTR),
        wcy=wcy_t.T, bcy=bcy.reshape(1, NUM_CLASSES),
    )
    torch_like = dict(w0_t=w0_t, g0=g0, b0=b0, m0=m0, v0=v0,
                      w1_t=w1_t, g1=g1, b1=b1, m1=m1, v1=v1,
                      wc_t=wc_t, bc=bc, wa_t=wa_t, ba=ba, wcy_t=wcy_t, bcy=bcy)
    return params, torch_like


# ---- pure-JAX (XLA) reference for validation ------------------------------------
def reference_forward(x, tp):
    pooled = lax.reduce_window(x, 0.0, lax.add, (1, 1, POOL_K, POOL_K),
                               (1, 1, POOL_S, POOL_S), "VALID") / float(POOL_K * POOL_K)

    def basic_conv(y, w, g, b, m, v):
        y = lax.conv_general_dilated(y, w, (1, 1), "VALID",
                                     dimension_numbers=("NCHW", "OIHW", "NCHW"))
        s = (g / jnp.sqrt(v + BN_EPS))[None, :, None, None]
        y = (y - m[None, :, None, None]) * s + b[None, :, None, None]
        return jnp.maximum(y, 0.0)

    y = basic_conv(pooled, tp["w0_t"], tp["g0"], tp["b0"], tp["m0"], tp["v0"])
    y = basic_conv(y, tp["w1_t"], tp["g1"], tp["b1"], tp["m1"], tp["v1"])
    feat = jnp.mean(y, axis=(2, 3))
    cls = feat @ tp["wc_t"].T + tp["bc"]
    attrs = feat @ tp["wa_t"].T + tp["ba"]
    out0 = cls + attrs @ tp["wcy_t"].T + tp["bcy"]
    return [out0] + [attrs[:, i:i + 1] for i in range(N_ATTR)]


# ---- main ------------------------------------------------------------------------
if __name__ == "__main__":
    key = jax.random.PRNGKey(0)
    pkey, xkey = jax.random.split(key)
    params, torch_like = init_params(pkey)
    x = jax.random.normal(xkey, (2, CIN, H, W), jnp.float32)

    fwd = jax.jit(functools.partial(inception_aux_forward, params=params))
    outs = jax.block_until_ready(fwd(x))

    refs = reference_forward(x, torch_like)
    assert len(outs) == 1 + N_ATTR
    # tolerance reflects the bf16 conv1-weight/activation path (f32 reference).
    for o, r in zip(outs, refs):
        assert o.shape == r.shape, (o.shape, r.shape)
        err = float(jnp.max(jnp.abs(o - r)))
        if not jnp.allclose(o, r, atol=3e-3, rtol=3e-3):
            raise AssertionError(f"mismatch vs reference, max abs err = {err}")

    print("KERNEL_OK")
</pallas_src>

<mosaic_0001>
module attributes {stable_mosaic.version = 11 : i64} {
  func.func @_fused_kernel(%arg0: i32, %arg1: memref<8x289xf32, #tpu.memory_space<vmem>>, %arg2: memref<289x32xf32, #tpu.memory_space<vmem>>, %arg3: memref<4x128xf32, #tpu.memory_space<vmem>>, %arg4: memref<1x128xf32, #tpu.memory_space<vmem>>, %arg5: memref<1x128xf32, #tpu.memory_space<vmem>>, %arg6: memref<25x128x384xbf16, #tpu.memory_space<vmem>>, %arg7: memref<1x384xf32, #tpu.memory_space<vmem>>, %arg8: memref<1x384xf32, #tpu.memory_space<vmem>>, %arg9: memref<384x8xf32, #tpu.memory_space<vmem>>, %arg10: memref<1x2x8xf32, #tpu.memory_space<vmem>>, %arg11: memref<2x32x128xbf16, #tpu.memory_space<vmem>>) attributes {dimension_semantics = [#tpu.dimension_semantics<parallel>], iteration_bounds = array<i64: 2>, scalar_prefetch = 0 : i64, scratch_operands = 1 : i64, tpu.core_type = #tpu.core_type<tc>, window_params = [{pipeline_mode = #tpu.pipeline_mode<synchronous>, transform_indices = @transform_0, window_bounds = array<i64: 8, 289>}, {pipeline_mode = #tpu.pipeline_mode<synchronous>, transform_indices = @transform_1, window_bounds = array<i64: 289, 32>}, {pipeline_mode = #tpu.pipeline_mode<synchronous>, transform_indices = @transform_2, window_bounds = array<i64: 4, 128>}, {pipeline_mode = #tpu.pipeline_mode<synchronous>, transform_indices = @transform_3, window_bounds = array<i64: 1, 128>}, {pipeline_mode = #tpu.pipeline_mode<synchronous>, transform_indices = @transform_4, window_bounds = array<i64: 1, 128>}, {transform_indices = @transform_5, window_bounds = array<i64: 25, 128, 384>}, {transform_indices = @transform_6, window_bounds = array<i64: 1, 384>}, {transform_indices = @transform_7, window_bounds = array<i64: 1, 384>}, {transform_indices = @transform_8, window_bounds = array<i64: 384, 8>}, {transform_indices = @transform_9, window_bounds = array<i64: 1, 2, 8>}]} {
    %c0 = arith.constant 0 : index
    %c0_0 = arith.constant 0 : index
    %0 = vector.load %arg1[%c0, %c0_0] : memref<8x289xf32, #tpu.memory_space<vmem>>, vector<8x289xf32>
    %c0_1 = arith.constant 0 : index
    %c0_2 = arith.constant 0 : index
    %1 = vector.load %arg2[%c0_1, %c0_2] : memref<289x32xf32, #tpu.memory_space<vmem>>, vector<289x32xf32>
    %cst = arith.constant dense<0.000000e+00> : vector<8x32xf32>
    %2 = tpu.matmul %0, %1, %cst {dimension_numbers = #tpu.dot_dimension_numbers<[1], [0], [0], [1], [0, 0, 1, 1], [], []>} : vector<8x289xf32>, vector<289x32xf32>, vector<8x32xf32> -> vector<8x32xf32>
    %3 = tpu.transpose %2, [1, 0] : vector<8x32xf32> -> vector<32x8xf32>
    %c0_3 = arith.constant 0 : index
    %c0_4 = arith.constant 0 : index
    %4 = vector.load %arg3[%c0_3, %c0_4] : memref<4x128xf32, #tpu.memory_space<vmem>>, vector<4x128xf32>
    %c0_5 = arith.constant 0 : index
    %c0_6 = arith.constant 0 : index
    %5 = vector.load %arg4[%c0_5, %c0_6] : memref<1x128xf32, #tpu.memory_space<vmem>>, vector<1x128xf32>
    %c0_7 = arith.constant 0 : index
    %c0_8 = arith.constant 0 : index
    %6 = vector.load %arg5[%c0_7, %c0_8] : memref<1x128xf32, #tpu.memory_space<vmem>>, vector<1x128xf32>
    %7 = vector.extract_strided_slice %3 {offsets = [0, 0], sizes = [32, 4], strides = [1, 1]} : vector<32x8xf32> to vector<32x4xf32>
    %8 = vector.extract_strided_slice %7 {offsets = [0, 0], sizes = [32, 1], strides = [1, 1]} : vector<32x4xf32> to vector<32x1xf32>
    %9 = vector.extract_strided_slice %4 {offsets = [0, 0], sizes = [1, 128], strides = [1, 1]} : vector<4x128xf32> to vector<1x128xf32>
    %10 = vector.broadcast %8 : vector<32x1xf32> to vector<32x128xf32>
    %11 = vector.broadcast %9 : vector<1x128xf32> to vector<32x128xf32>
    %12 = arith.mulf %10, %11 : vector<32x128xf32>
    %13 = vector.extract_strided_slice %7 {offsets = [0, 1], sizes = [32, 1], strides = [1, 1]} : vector<32x4xf32> to vector<32x1xf32>
    %14 = vector.extract_strided_slice %4 {offsets = [1, 0], sizes = [1, 128], strides = [1, 1]} : vector<4x128xf32> to vector<1x128xf32>
    %15 = vector.broadcast %13 : vector<32x1xf32> to vector<32x128xf32>
    %16 = vector.broadcast %14 : vector<1x128xf32> to vector<32x128xf32>
    %17 = arith.mulf %15, %16 : vector<32x128xf32>
    %18 = arith.addf %12, %17 : vector<32x128xf32>
    %19 = vector.extract_strided_slice %7 {offsets = [0, 2], sizes = [32, 1], strides = [1, 1]} : vector<32x4xf32> to vector<32x1xf32>
    %20 = vector.extract_strided_slice %4 {offsets = [2, 0], sizes = [1, 128], strides = [1, 1]} : vector<4x128xf32> to vector<1x128xf32>
    %21 = vector.broadcast %19 : vector<32x1xf32> to vector<32x128xf32>
    %22 = vector.broadcast %20 : vector<1x128xf32> to vector<32x128xf32>
    %23 = arith.mulf %21, %22 : vector<32x128xf32>
    %24 = arith.addf %18, %23 : vector<32x128xf32>
    %25 = vector.extract_strided_slice %7 {offsets = [0, 3], sizes = [32, 1], strides = [1, 1]} : vector<32x4xf32> to vector<32x1xf32>
    %26 = vector.extract_strided_slice %4 {offsets = [3, 0], sizes = [1, 128], strides = [1, 1]} : vector<4x128xf32> to vector<1x128xf32>
    %27 = vector.broadcast %25 : vector<32x1xf32> to vector<32x128xf32>
    %28 = vector.broadcast %26 : vector<1x128xf32> to vector<32x128xf32>
    %29 = arith.mulf %27, %28 : vector<32x128xf32>
    %30 = arith.addf %24, %29 : vector<32x128xf32>
    %31 = vector.broadcast %5 : vector<1x128xf32> to vector<32x128xf32>
    %32 = arith.mulf %30, %31 : vector<32x128xf32>
    %33 = vector.broadcast %6 : vector<1x128xf32> to vector<32x128xf32>
    %34 = arith.addf %32, %33 : vector<32x128xf32>
    %cst_9 = arith.constant 0.000000e+00 : f32
    %35 = vector.broadcast %cst_9 : f32 to vector<32x128xf32>
    %36 = arith.maximumf %34, %35 : vector<32x128xf32>
    %37 = arith.truncf %36 : vector<32x128xf32> to vector<32x128xbf16>
    %c0_10 = arith.constant 0 : index
    %c0_11 = arith.constant 0 : index
    %c0_12 = arith.constant 0 : index
    %38 = vector.load %arg11[%c0_10, %c0_11, %c0_12] : memref<2x32x128xbf16, #tpu.memory_space<vmem>>, vector<1x32x128xbf16>
    %39 = vector.shape_cast %38 : vector<1x32x128xbf16> to vector<32x128xbf16>
    %40 = vector.shape_cast %37 : vector<32x128xbf16> to vector<1x32x128xbf16>
    tpu.vector_store %arg11[%c0_10, %c0_11, %c0_12], %40 {strides = array<i32>} : memref<2x32x128xbf16, #tpu.memory_space<vmem>>, vector<1x32x128xbf16>,
    %41 = vector.extract_strided_slice %3 {offsets = [0, 4], sizes = [32, 4], strides = [1, 1]} : vector<32x8xf32> to vector<32x4xf32>
    %42 = vector.extract_strided_slice %41 {offsets = [0, 0], sizes = [32, 1], strides = [1, 1]} : vector<32x4xf32> to vector<32x1xf32>
    %43 = vector.extract_strided_slice %4 {offsets = [0, 0], sizes = [1, 128], strides = [1, 1]} : vector<4x128xf32> to vector<1x128xf32>
    %44 = vector.broadcast %42 : vector<32x1xf32> to vector<32x128xf32>
    %45 = vector.broadcast %43 : vector<1x128xf32> to vector<32x128xf32>
    %46 = arith.mulf %44, %45 : vector<32x128xf32>
    %47 = vector.extract_strided_slice %41 {offsets = [0, 1], sizes = [32, 1], strides = [1, 1]} : vector<32x4xf32> to vector<32x1xf32>
    %48 = vector.extract_strided_slice %4 {offsets = [1, 0], sizes = [1, 128], strides = [1, 1]} : vector<4x128xf32> to vector<1x128xf32>
    %49 = vector.broadcast %47 : vector<32x1xf32> to vector<32x128xf32>
    %50 = vector.broadcast %48 : vector<1x128xf32> to vector<32x128xf32>
    %51 = arith.mulf %49, %50 : vector<32x128xf32>
    %52 = arith.addf %46, %51 : vector<32x128xf32>
    %53 = vector.extract_strided_slice %41 {offsets = [0, 2], sizes = [32, 1], strides = [1, 1]} : vector<32x4xf32> to vector<32x1xf32>
    %54 = vector.extract_strided_slice %4 {offsets = [2, 0], sizes = [1, 128], strides = [1, 1]} : vector<4x128xf32> to vector<1x128xf32>
    %55 = vector.broadcast %53 : vector<32x1xf32> to vector<32x128xf32>
    %56 = vector.broadcast %54 : vector<1x128xf32> to vector<32x128xf32>
    %57 = arith.mulf %55, %56 : vector<32x128xf32>
    %58 = arith.addf %52, %57 : vector<32x128xf32>
    %59 = vector.extract_strided_slice %41 {offsets = [0, 3], sizes = [32, 1], strides = [1, 1]} : vector<32x4xf32> to vector<32x1xf32>
    %60 = vector.extract_strided_slice %4 {offsets = [3, 0], sizes = [1, 128], strides = [1, 1]} : vector<4x128xf32> to vector<1x128xf32>
    %61 = vector.broadcast %59 : vector<32x1xf32> to vector<32x128xf32>
    %62 = vector.broadcast %60 : vector<1x128xf32> to vector<32x128xf32>
    %63 = arith.mulf %61, %62 : vector<32x128xf32>
    %64 = arith.addf %58, %63 : vector<32x128xf32>
    %65 = vector.broadcast %5 : vector<1x128xf32> to vector<32x128xf32>
    %66 = arith.mulf %64, %65 : vector<32x128xf32>
    %67 = vector.broadcast %6 : vector<1x128xf32> to vector<32x128xf32>
    %68 = arith.addf %66, %67 : vector<32x128xf32>
    %cst_13 = arith.constant 0.000000e+00 : f32
    %69 = vector.broadcast %cst_13 : f32 to vector<32x128xf32>
    %70 = arith.maximumf %68, %69 : vector<32x128xf32>
    %71 = arith.truncf %70 : vector<32x128xf32> to vector<32x128xbf16>
    %c1 = arith.constant 1 : index
    %c0_14 = arith.constant 0 : index
    %c0_15 = arith.constant 0 : index
    %72 = vector.load %arg11[%c1, %c0_14, %c0_15] : memref<2x32x128xbf16, #tpu.memory_space<vmem>>, vector<1x32x128xbf16>
    %73 = vector.shape_cast %72 : vector<1x32x128xbf16> to vector<32x128xbf16>
    %74 = vector.shape_cast %71 : vector<32x128xbf16> to vector<1x32x128xbf16>
    tpu.vector_store %arg11[%c1, %c0_14, %c0_15], %74 {strides = array<i32>} : memref<2x32x128xbf16, #tpu.memory_space<vmem>>, vector<1x32x128xbf16>,
    %cst_16 = arith.constant 0.000000e+00 : f32
    %75 = vector.broadcast %cst_16 : f32 to vector<2x384xf32>
    %c0_17 = arith.constant 0 : index
    %c0_18 = arith.constant 0 : index
    %c0_19 = arith.constant 0 : index
    %76 = vector.load %arg11[%c0_17, %c0_18, %c0_19] : memref<2x32x128xbf16, #tpu.memory_space<vmem>>, vector<2x1x128xbf16>
    %77 = vector.shape_cast %76 : vector<2x1x128xbf16> to vector<2x128xbf16>
    %c0_20 = arith.constant 0 : index
    %c0_21 = arith.constant 0 : index
    %c0_22 = arith.constant 0 : index
    %78 = vector.load %arg6[%c0_20, %c0_21, %c0_22] : memref<25x128x384xbf16, #tpu.memory_space<vmem>>, vector<1x128x384xbf16>
    %79 = vector.shape_cast %78 : vector<1x128x384xbf16> to vector<128x384xbf16>
    %cst_23 = arith.constant dense<0.000000e+00> : vector<2x384xf32>
    %80 = tpu.matmul %77, %79, %cst_23 {dimension_numbers = #tpu.dot_dimension_numbers<[1], [0], [0], [1], [0, 0, 1, 1], [], []>} : vector<2x128xbf16>, vector<128x384xbf16>, vector<2x384xf32> -> vector<2x384xf32>
    %81 = arith.addf %75, %80 : vector<2x384xf32>
    %c0_24 = arith.constant 0 : index
    %c1_25 = arith.constant 1 : index
    %c0_26 = arith.constant 0 : index
    %82 = vector.load %arg11[%c0_24, %c1_25, %c0_26] : memref<2x32x128xbf16, #tpu.memory_space<vmem>>, vector<2x1x128xbf16>
    %83 = vector.shape_cast %82 : vector<2x1x128xbf16> to vector<2x128xbf16>
    %c1_27 = arith.constant 1 : index
    %c0_28 = arith.constant 0 : index
    %c0_29 = arith.constant 0 : index
    %84 = vector.load %arg6[%c1_27, %c0_28, %c0_29] : memref<25x128x384xbf16, #tpu.memory_space<vmem>>, vector<1x128x384xbf16>
    %85 = vector.shape_cast %84 : vector<1x128x384xbf16> to vector<128x384xbf16>
    %cst_30 = arith.constant dense<0.000000e+00> : vector<2x384xf32>
    %86 = tpu.matmul %83, %85, %cst_30 {dimension_numbers = #tpu.dot_dimension_numbers<[1], [0], [0], [1], [0, 0, 1, 1], [], []>} : vector<2x128xbf16>, vector<128x384xbf16>, vector<2x384xf32> -> vector<2x384xf32>
    %87 = arith.addf %81, %86 : vector<2x384xf32>
    %c0_31 = arith.constant 0 : index
    %c2 = arith.constant 2 : index
    %c0_32 = arith.constant 0 : index
    %88 = vector.load %arg11[%c0_31, %c2, %c0_32] : memref<2x32x128xbf16, #tpu.memory_space<vmem>>, vector<2x1x128xbf16>
    %89 = vector.shape_cast %88 : vector<2x1x128xbf16> to vector<2x128xbf16>
    %c2_33 = arith.constant 2 : index
    %c0_34 = arith.constant 0 : index
    %c0_35 = arith.constant 0 : index
    %90 = vector.load %arg6[%c2_33, %c0_34, %c0_35] : memref<25x128x384xbf16, #tpu.memory_space<vmem>>, vector<1x128x384xbf16>
    %91 = vector.shape_cast %90 : vector<1x128x384xbf16> to vector<128x384xbf16>
    %cst_36 = arith.constant dense<0.000000e+00> : vector<2x384xf32>
    %92 = tpu.matmul %89, %91, %cst_36 {dimension_numbers = #tpu.dot_dimension_numbers<[1], [0], [0], [1], [0, 0, 1, 1], [], []>} : vector<2x128xbf16>, vector<128x384xbf16>, vector<2x384xf32> -> vector<2x384xf32>
    %93 = arith.addf %87, %92 : vector<2x384xf32>
    %c0_37 = arith.constant 0 : index
    %c3 = arith.constant 3 : index
    %c0_38 = arith.constant 0 : index
    %94 = vector.load %arg11[%c0_37, %c3, %c0_38] : memref<2x32x128xbf16, #tpu.memory_space<vmem>>, vector<2x1x128xbf16>
    %95 = vector.shape_cast %94 : vector<2x1x128xbf16> to vector<2x128xbf16>
    %c3_39 = arith.constant 3 : index
    %c0_40 = arith.constant 0 : index
    %c0_41 = arith.constant 0 : index
    %96 = vector.load %arg6[%c3_39, %c0_40, %c0_41] : memref<25x128x384xbf16, #tpu.memory_space<vmem>>, vector<1x128x384xbf16>
    %97 = vector.shape_cast %96 : vector<1x128x384xbf16> to vector<128x384xbf16>
    %cst_42 = arith.constant dense<0.000000e+00> : vector<2x384xf32>
    %98 = tpu.matmul %95, %97, %cst_42 {dimension_numbers = #tpu.dot_dimension_numbers<[1], [0], [0], [1], [0, 0, 1, 1], [], []>} : vector<2x128xbf16>, vector<128x384xbf16>, vector<2x384xf32> -> vector<2x384xf32>
    %99 = arith.addf %93, %98 : vector<2x384xf32>
    %c0_43 = arith.constant 0 : index
    %c4 = arith.constant 4 : index
    %c0_44 = arith.constant 0 : index
    %100 = vector.load %arg11[%c0_43, %c4, %c0_44] : memref<2x32x128xbf16, #tpu.memory_space<vmem>>, vector<2x1x128xbf16>
    %101 = vector.shape_cast %100 : vector<2x1x128xbf16> to vector<2x128xbf16>
    %c4_45 = arith.constant 4 : index
    %c0_46 = arith.constant 0 : index
    %c0_47 = arith.constant 0 : index
    %102 = vector.load %arg6[%c4_45, %c0_46, %c0_47] : memref<25x128x384xbf16, #tpu.memory_space<vmem>>, vector<1x128x384xbf16>
    %103 = vector.shape_cast %102 : vector<1x128x384xbf16> to vector<128x384xbf16>
    %cst_48 = arith.constant dense<0.000000e+00> : vector<2x384xf32>
    %104 = tpu.matmul %101, %103, %cst_48 {dimension_numbers = #tpu.dot_dimension_numbers<[1], [0], [0], [1], [0, 0, 1, 1], [], []>} : vector<2x128xbf16>, vector<128x384xbf16>, vector<2x384xf32> -> vector<2x384xf32>
    %105 = arith.addf %99, %104 : vector<2x384xf32>
    %c0_49 = arith.constant 0 : index
    %c5 = arith.constant 5 : index
    %c0_50 = arith.constant 0 : index
    %106 = vector.load %arg11[%c0_49, %c5, %c0_50] : memref<2x32x128xbf16, #tpu.memory_space<vmem>>, vector<2x1x128xbf16>
    %107 = vector.shape_cast %106 : vector<2x1x128xbf16> to vector<2x128xbf16>
    %c5_51 = arith.constant 5 : index
    %c0_52 = arith.constant 0 : index
    %c0_53 = arith.constant 0 : index
    %108 = vector.load %arg6[%c5_51, %c0_52, %c0_53] : memref<25x128x384xbf16, #tpu.memory_space<vmem>>, vector<1x128x384xbf16>
    %109 = vector.shape_cast %108 : vector<1x128x384xbf16> to vector<128x384xbf16>
    %cst_54 = arith.constant dense<0.000000e+00> : vector<2x384xf32>
    %110 = tpu.matmul %107, %109, %cst_54 {dimension_numbers = #tpu.dot_dimension_numbers<[1], [0], [0], [1], [0, 0, 1, 1], [], []>} : vector<2x128xbf16>, vector<128x384xbf16>, vector<2x384xf32> -> vector<2x384xf32>
    %111 = arith.addf %105, %110 : vector<2x384xf32>
    %c0_55 = arith.constant 0 : index
    %c6 = arith.constant 6 : index
    %c0_56 = arith.constant 0 : index
    %112 = vector.load %arg11[%c0_55, %c6, %c0_56] : memref<2x32x128xbf16, #tpu.memory_space<vmem>>, vector<2x1x128xbf16>
    %113 = vector.shape_cast %112 : vector<2x1x128xbf16> to vector<2x128xbf16>
    %c6_57 = arith.constant 6 : index
    %c0_58 = arith.constant 0 : index
    %c0_59 = arith.constant 0 : index
    %114 = vector.load %arg6[%c6_57, %c0_58, %c0_59] : memref<25x128x384xbf16, #tpu.memory_space<vmem>>, vector<1x128x384xbf16>
    %115 = vector.shape_cast %114 : vector<1x128x384xbf16> to vector<128x384xbf16>
    %cst_60 = arith.constant dense<0.000000e+00> : vector<2x384xf32>
    %116 = tpu.matmul %113, %115, %cst_60 {dimension_numbers = #tpu.dot_dimension_numbers<[1], [0], [0], [1], [0, 0, 1, 1], [], []>} : vector<2x128xbf16>, vector<128x384xbf16>, vector<2x384xf32> -> vector<2x384xf32>
    %117 = arith.addf %111, %116 : vector<2x384xf32>
    %c0_61 = arith.constant 0 : index
    %c7 = arith.constant 7 : index
    %c0_62 = arith.constant 0 : index
    %118 = vector.load %arg11[%c0_61, %c7, %c0_62] : memref<2x32x128xbf16, #tpu.memory_space<vmem>>, vector<2x1x128xbf16>
    %119 = vector.shape_cast %118 : vector<2x1x128xbf16> to vector<2x128xbf16>
    %c7_63 = arith.constant 7 : index
    %c0_64 = arith.constant 0 : index
    %c0_65 = arith.constant 0 : index
    %120 = vector.load %arg6[%c7_63, %c0_64, %c0_65] : memref<25x128x384xbf16, #tpu.memory_space<vmem>>, vector<1x128x384xbf16>
    %121 = vector.shape_cast %120 : vector<1x128x384xbf16> to vector<128x384xbf16>
    %cst_66 = arith.constant dense<0.000000e+00> : vector<2x384xf32>
    %122 = tpu.matmul %119, %121, %cst_66 {dimension_numbers = #tpu.dot_dimension_numbers<[1], [0], [0], [1], [0, 0, 1, 1], [], []>} : vector<2x128xbf16>, vector<128x384xbf16>, vector<2x384xf32> -> vector<2x384xf32>
    %123 = arith.addf %117, %122 : vector<2x384xf32>
    %c0_67 = arith.constant 0 : index
    %c8 = arith.constant 8 : index
    %c0_68 = arith.constant 0 : index
    %124 = vector.load %arg11[%c0_67, %c8, %c0_68] : memref<2x32x128xbf16, #tpu.memory_space<vmem>>, vector<2x1x128xbf16>
    %125 = vector.shape_cast %124 : vector<2x1x128xbf16> to vector<2x128xbf16>
    %c8_69 = arith.constant 8 : index
    %c0_70 = arith.constant 0 : index
    %c0_71 = arith.constant 0 : index
    %126 = vector.load %arg6[%c8_69, %c0_70, %c0_71] : memref<25x128x384xbf16, #tpu.memory_space<vmem>>, vector<1x128x384xbf16>
    %127 = vector.shape_cast %126 : vector<1x128x384xbf16> to vector<128x384xbf16>
    %cst_72 = arith.constant dense<0.000000e+00> : vector<2x384xf32>
    %128 = tpu.matmul %125, %127, %cst_72 {dimension_numbers = #tpu.dot_dimension_numbers<[1], [0], [0], [1], [0, 0, 1, 1], [], []>} : vector<2x128xbf16>, vector<128x384xbf16>, vector<2x384xf32> -> vector<2x384xf32>
    %129 = arith.addf %123, %128 : vector<2x384xf32>
    %c0_73 = arith.constant 0 : index
    %c9 = arith.constant 9 : index
    %c0_74 = arith.constant 0 : index
    %130 = vector.load %arg11[%c0_73, %c9, %c0_74] : memref<2x32x128xbf16, #tpu.memory_space<vmem>>, vector<2x1x128xbf16>
    %131 = vector.shape_cast %130 : vector<2x1x128xbf16> to vector<2x128xbf16>
    %c9_75 = arith.constant 9 : index
    %c0_76 = arith.constant 0 : index
    %c0_77 = arith.constant 0 : index
    %132 = vector.load %arg6[%c9_75, %c0_76, %c0_77] : memref<25x128x384xbf16, #tpu.memory_space<vmem>>, vector<1x128x384xbf16>
    %133 = vector.shape_cast %132 : vector<1x128x384xbf16> to vector<128x384xbf16>
    %cst_78 = arith.constant dense<0.000000e+00> : vector<2x384xf32>
    %134 = tpu.matmul %131, %133, %cst_78 {dimension_numbers = #tpu.dot_dimension_numbers<[1], [0], [0], [1], [0, 0, 1, 1], [], []>} : vector<2x128xbf16>, vector<128x384xbf16>, vector<2x384xf32> -> vector<2x384xf32>
    %135 = arith.addf %129, %134 : vector<2x384xf32>
    %c0_79 = arith.constant 0 : index
    %c10 = arith.constant 10 : index
    %c0_80 = arith.constant 0 : index
    %136 = vector.load %arg11[%c0_79, %c10, %c0_80] : memref<2x32x128xbf16, #tpu.memory_space<vmem>>, vector<2x1x128xbf16>
    %137 = vector.shape_cast %136 : vector<2x1x128xbf16> to vector<2x128xbf16>
    %c10_81 = arith.constant 10 : index
    %c0_82 = arith.constant 0 : index
    %c0_83 = arith.constant 0 : index
    %138 = vector.load %arg6[%c10_81, %c0_82, %c0_83] : memref<25x128x384xbf16, #tpu.memory_space<vmem>>, vector<1x128x384xbf16>
    %139 = vector.shape_cast %138 : vector<1x128x384xbf16> to vector<128x384xbf16>
    %cst_84 = arith.constant dense<0.000000e+00> : vector<2x384xf32>
    %140 = tpu.matmul %137, %139, %cst_84 {dimension_numbers = #tpu.dot_dimension_numbers<[1], [0], [0], [1], [0, 0, 1, 1], [], []>} : vector<2x128xbf16>, vector<128x384xbf16>, vector<2x384xf32> -> vector<2x384xf32>
    %141 = arith.addf %135, %140 : vector<2x384xf32>
    %c0_85 = arith.constant 0 : index
    %c11 = arith.constant 11 : index
    %c0_86 = arith.constant 0 : index
    %142 = vector.load %arg11[%c0_85, %c11, %c0_86] : memref<2x32x128xbf16, #tpu.memory_space<vmem>>, vector<2x1x128xbf16>
    %143 = vector.shape_cast %142 : vector<2x1x128xbf16> to vector<2x128xbf16>
    %c11_87 = arith.constant 11 : index
    %c0_88 = arith.constant 0 : index
    %c0_89 = arith.constant 0 : index
    %144 = vector.load %arg6[%c11_87, %c0_88, %c0_89] : memref<25x128x384xbf16, #tpu.memory_space<vmem>>, vector<1x128x384xbf16>
    %145 = vector.shape_cast %144 : vector<1x128x384xbf16> to vector<128x384xbf16>
    %cst_90 = arith.constant dense<0.000000e+00> : vector<2x384xf32>
    %146 = tpu.matmul %143, %145, %cst_90 {dimension_numbers = #tpu.dot_dimension_numbers<[1], [0], [0], [1], [0, 0, 1, 1], [], []>} : vector<2x128xbf16>, vector<128x384xbf16>, vector<2x384xf32> -> vector<2x384xf32>
    %147 = arith.addf %141, %146 : vector<2x384xf32>
    %c0_91 = arith.constant 0 : index
    %c12 = arith.constant 12 : index
    %c0_92 = arith.constant 0 : index
    %148 = vector.load %arg11[%c0_91, %c12, %c0_92] : memref<2x32x128xbf16, #tpu.memory_space<vmem>>, vector<2x1x128xbf16>
    %149 = vector.shape_cast %148 : vector<2x1x128xbf16> to vector<2x128xbf16>
    %c12_93 = arith.constant 12 : index
    %c0_94 = arith.constant 0 : index
    %c0_95 = arith.constant 0 : index
    %150 = vector.load %arg6[%c12_93, %c0_94, %c0_95] : memref<25x128x384xbf16, #tpu.memory_space<vmem>>, vector<1x128x384xbf16>
    %151 = vector.shape_cast %150 : vector<1x128x384xbf16> to vector<128x384xbf16>
    %cst_96 = arith.constant dense<0.000000e+00> : vector<2x384xf32>
    %152 = tpu.matmul %149, %151, %cst_96 {dimension_numbers = #tpu.dot_dimension_numbers<[1], [0], [0], [1], [0, 0, 1, 1], [], []>} : vector<2x128xbf16>, vector<128x384xbf16>, vector<2x384xf32> -> vector<2x384xf32>
    %153 = arith.addf %147, %152 : vector<2x384xf32>
    %c0_97 = arith.constant 0 : index
    %c13 = arith.constant 13 : index
    %c0_98 = arith.constant 0 : index
    %154 = vector.load %arg11[%c0_97, %c13, %c0_98] : memref<2x32x128xbf16, #tpu.memory_space<vmem>>, vector<2x1x128xbf16>
    %155 = vector.shape_cast %154 : vector<2x1x128xbf16> to vector<2x128xbf16>
    %c13_99 = arith.constant 13 : index
    %c0_100 = arith.constant 0 : index
    %c0_101 = arith.constant 0 : index
    %156 = vector.load %arg6[%c13_99, %c0_100, %c0_101] : memref<25x128x384xbf16, #tpu.memory_space<vmem>>, vector<1x128x384xbf16>
    %157 = vector.shape_cast %156 : vector<1x128x384xbf16> to vector<128x384xbf16>
    %cst_102 = arith.constant dense<0.000000e+00> : vector<2x384xf32>
    %158 = tpu.matmul %155, %157, %cst_102 {dimension_numbers = #tpu.dot_dimension_numbers<[1], [0], [0], [1], [0, 0, 1, 1], [], []>} : vector<2x128xbf16>, vector<128x384xbf16>, vector<2x384xf32> -> vector<2x384xf32>
    %159 = arith.addf %153, %158 : vector<2x384xf32>
    %c0_103 = arith.constant 0 : index
    %c14 = arith.constant 14 : index
    %c0_104 = arith.constant 0 : index
    %160 = vector.load %arg11[%c0_103, %c14, %c0_104] : memref<2x32x128xbf16, #tpu.memory_space<vmem>>, vector<2x1x128xbf16>
    %161 = vector.shape_cast %160 : vector<2x1x128xbf16> to vector<2x128xbf16>
    %c14_105 = arith.constant 14 : index
    %c0_106 = arith.constant 0 : index
    %c0_107 = arith.constant 0 : index
    %162 = vector.load %arg6[%c14_105, %c0_106, %c0_107] : memref<25x128x384xbf16, #tpu.memory_space<vmem>>, vector<1x128x384xbf16>
    %163 = vector.shape_cast %162 : vector<1x128x384xbf16> to vector<128x384xbf16>
    %cst_108 = arith.constant dense<0.000000e+00> : vector<2x384xf32>
    %164 = tpu.matmul %161, %163, %cst_108 {dimension_numbers = #tpu.dot_dimension_numbers<[1], [0], [0], [1], [0, 0, 1, 1], [], []>} : vector<2x128xbf16>, vector<128x384xbf16>, vector<2x384xf32> -> vector<2x384xf32>
    %165 = arith.addf %159, %164 : vector<2x384xf32>
    %c0_109 = arith.constant 0 : index
    %c15 = arith.constant 15 : index
    %c0_110 = arith.constant 0 : index
    %166 = vector.load %arg11[%c0_109, %c15, %c0_110] : memref<2x32x128xbf16, #tpu.memory_space<vmem>>, vector<2x1x128xbf16>
    %167 = vector.shape_cast %166 : vector<2x1x128xbf16> to vector<2x128xbf16>
    %c15_111 = arith.constant 15 : index
    %c0_112 = arith.constant 0 : index
    %c0_113 = arith.constant 0 : index
    %168 = vector.load %arg6[%c15_111, %c0_112, %c0_113] : memref<25x128x384xbf16, #tpu.memory_space<vmem>>, vector<1x128x384xbf16>
    %169 = vector.shape_cast %168 : vector<1x128x384xbf16> to vector<128x384xbf16>
    %cst_114 = arith.constant dense<0.000000e+00> : vector<2x384xf32>
    %170 = tpu.matmul %167, %169, %cst_114 {dimension_numbers = #tpu.dot_dimension_numbers<[1], [0], [0], [1], [0, 0, 1, 1], [], []>} : vector<2x128xbf16>, vector<128x384xbf16>, vector<2x384xf32> -> vector<2x384xf32>
    %171 = arith.addf %165, %170 : vector<2x384xf32>
    %c0_115 = arith.constant 0 : index
    %c16 = arith.constant 16 : index
    %c0_116 = arith.constant 0 : index
    %172 = vector.load %arg11[%c0_115, %c16, %c0_116] : memref<2x32x128xbf16, #tpu.memory_space<vmem>>, vector<2x1x128xbf16>
    %173 = vector.shape_cast %172 : vector<2x1x128xbf16> to vector<2x128xbf16>
    %c16_117 = arith.constant 16 : index
    %c0_118 = arith.constant 0 : index
    %c0_119 = arith.constant 0 : index
    %174 = vector.load %arg6[%c16_117, %c0_118, %c0_119] : memref<25x128x384xbf16, #tpu.memory_space<vmem>>, vector<1x128x384xbf16>
    %175 = vector.shape_cast %174 : vector<1x128x384xbf16> to vector<128x384xbf16>
    %cst_120 = arith.constant dense<0.000000e+00> : vector<2x384xf32>
    %176 = tpu.matmul %173, %175, %cst_120 {dimension_numbers = #tpu.dot_dimension_numbers<[1], [0], [0], [1], [0, 0, 1, 1], [], []>} : vector<2x128xbf16>, vector<128x384xbf16>, vector<2x384xf32> -> vector<2x384xf32>
    %177 = arith.addf %171, %176 : vector<2x384xf32>
    %c0_121 = arith.constant 0 : index
    %c17 = arith.constant 17 : index
    %c0_122 = arith.constant 0 : index
    %178 = vector.load %arg11[%c0_121, %c17, %c0_122] : memref<2x32x128xbf16, #tpu.memory_space<vmem>>, vector<2x1x128xbf16>
    %179 = vector.shape_cast %178 : vector<2x1x128xbf16> to vector<2x128xbf16>
    %c17_123 = arith.constant 17 : index
    %c0_124 = arith.constant 0 : index
    %c0_125 = arith.constant 0 : index
    %180 = vector.load %arg6[%c17_123, %c0_124, %c0_125] : memref<25x128x384xbf16, #tpu.memory_space<vmem>>, vector<1x128x384xbf16>
    %181 = vector.shape_cast %180 : vector<1x128x384xbf16> to vector<128x384xbf16>
    %cst_126 = arith.constant dense<0.000000e+00> : vector<2x384xf32>
    %182 = tpu.matmul %179, %181, %cst_126 {dimension_numbers = #tpu.dot_dimension_numbers<[1], [0], [0], [1], [0, 0, 1, 1], [], []>} : vector<2x128xbf16>, vector<128x384xbf16>, vector<2x384xf32> -> vector<2x384xf32>
    %183 = arith.addf %177, %182 : vector<2x384xf32>
    %c0_127 = arith.constant 0 : index
    %c18 = arith.constant 18 : index
    %c0_128 = arith.constant 0 : index
    %184 = vector.load %arg11[%c0_127, %c18, %c0_128] : memref<2x32x128xbf16, #tpu.memory_space<vmem>>, vector<2x1x128xbf16>
    %185 = vector.shape_cast %184 : vector<2x1x128xbf16> to vector<2x128xbf16>
    %c18_129 = arith.constant 18 : index
    %c0_130 = arith.constant 0 : index
    %c0_131 = arith.constant 0 : index
    %186 = vector.load %arg6[%c18_129, %c0_130, %c0_131] : memref<25x128x384xbf16, #tpu.memory_space<vmem>>, vector<1x128x384xbf16>
    %187 = vector.shape_cast %186 : vector<1x128x384xbf16> to vector<128x384xbf16>
    %cst_132 = arith.constant dense<0.000000e+00> : vector<2x384xf32>
    %188 = tpu.matmul %185, %187, %cst_132 {dimension_numbers = #tpu.dot_dimension_numbers<[1], [0], [0], [1], [0, 0, 1, 1], [], []>} : vector<2x128xbf16>, vector<128x384xbf16>, vector<2x384xf32> -> vector<2x384xf32>
    %189 = arith.addf %183, %188 : vector<2x384xf32>
    %c0_133 = arith.constant 0 : index
    %c19 = arith.constant 19 : index
    %c0_134 = arith.constant 0 : index
    %190 = vector.load %arg11[%c0_133, %c19, %c0_134] : memref<2x32x128xbf16, #tpu.memory_space<vmem>>, vector<2x1x128xbf16>
    %191 = vector.shape_cast %190 : vector<2x1x128xbf16> to vector<2x128xbf16>
    %c19_135 = arith.constant 19 : index
    %c0_136 = arith.constant 0 : index
    %c0_137 = arith.constant 0 : index
    %192 = vector.load %arg6[%c19_135, %c0_136, %c0_137] : memref<25x128x384xbf16, #tpu.memory_space<vmem>>, vector<1x128x384xbf16>
    %193 = vector.shape_cast %192 : vector<1x128x384xbf16> to vector<128x384xbf16>
    %cst_138 = arith.constant dense<0.000000e+00> : vector<2x384xf32>
    %194 = tpu.matmul %191, %193, %cst_138 {dimension_numbers = #tpu.dot_dimension_numbers<[1], [0], [0], [1], [0, 0, 1, 1], [], []>} : vector<2x128xbf16>, vector<128x384xbf16>, vector<2x384xf32> -> vector<2x384xf32>
    %195 = arith.addf %189, %194 : vector<2x384xf32>
    %c0_139 = arith.constant 0 : index
    %c20 = arith.constant 20 : index
    %c0_140 = arith.constant 0 : index
    %196 = vector.load %arg11[%c0_139, %c20, %c0_140] : memref<2x32x128xbf16, #tpu.memory_space<vmem>>, vector<2x1x128xbf16>
    %197 = vector.shape_cast %196 : vector<2x1x128xbf16> to vector<2x128xbf16>
    %c20_141 = arith.constant 20 : index
    %c0_142 = arith.constant 0 : index
    %c0_143 = arith.constant 0 : index
    %198 = vector.load %arg6[%c20_141, %c0_142, %c0_143] : memref<25x128x384xbf16, #tpu.memory_space<vmem>>, vector<1x128x384xbf16>
    %199 = vector.shape_cast %198 : vector<1x128x384xbf16> to vector<128x384xbf16>
    %cst_144 = arith.constant dense<0.000000e+00> : vector<2x384xf32>
    %200 = tpu.matmul %197, %199, %cst_144 {dimension_numbers = #tpu.dot_dimension_numbers<[1], [0], [0], [1], [0, 0, 1, 1], [], []>} : vector<2x128xbf16>, vector<128x384xbf16>, vector<2x384xf32> -> vector<2x384xf32>
    %201 = arith.addf %195, %200 : vector<2x384xf32>
    %c0_145 = arith.constant 0 : index
    %c21 = arith.constant 21 : index
    %c0_146 = arith.constant 0 : index
    %202 = vector.load %arg11[%c0_145, %c21, %c0_146] : memref<2x32x128xbf16, #tpu.memory_space<vmem>>, vector<2x1x128xbf16>
    %203 = vector.shape_cast %202 : vector<2x1x128xbf16> to vector<2x128xbf16>
    %c21_147 = arith.constant 21 : index
    %c0_148 = arith.constant 0 : index
    %c0_149 = arith.constant 0 : index
    %204 = vector.load %arg6[%c21_147, %c0_148, %c0_149] : memref<25x128x384xbf16, #tpu.memory_space<vmem>>, vector<1x128x384xbf16>
    %205 = vector.shape_cast %204 : vector<1x128x384xbf16> to vector<128x384xbf16>
    %cst_150 = arith.constant dense<0.000000e+00> : vector<2x384xf32>
    %206 = tpu.matmul %203, %205, %cst_150 {dimension_numbers = #tpu.dot_dimension_numbers<[1], [0], [0], [1], [0, 0, 1, 1], [], []>} : vector<2x128xbf16>, vector<128x384xbf16>, vector<2x384xf32> -> vector<2x384xf32>
    %207 = arith.addf %201, %206 : vector<2x384xf32>
    %c0_151 = arith.constant 0 : index
    %c22 = arith.constant 22 : index
    %c0_152 = arith.constant 0 : index
    %208 = vector.load %arg11[%c0_151, %c22, %c0_152] : memref<2x32x128xbf16, #tpu.memory_space<vmem>>, vector<2x1x128xbf16>
    %209 = vector.shape_cast %208 : vector<2x1x128xbf16> to vector<2x128xbf16>
    %c22_153 = arith.constant 22 : index
    %c0_154 = arith.constant 0 : index
    %c0_155 = arith.constant 0 : index
    %210 = vector.load %arg6[%c22_153, %c0_154, %c0_155] : memref<25x128x384xbf16, #tpu.memory_space<vmem>>, vector<1x128x384xbf16>
    %211 = vector.shape_cast %210 : vector<1x128x384xbf16> to vector<128x384xbf16>
    %cst_156 = arith.constant dense<0.000000e+00> : vector<2x384xf32>
    %212 = tpu.matmul %209, %211, %cst_156 {dimension_numbers = #tpu.dot_dimension_numbers<[1], [0], [0], [1], [0, 0, 1, 1], [], []>} : vector<2x128xbf16>, vector<128x384xbf16>, vector<2x384xf32> -> vector<2x384xf32>
    %213 = arith.addf %207, %212 : vector<2x384xf32>
    %c0_157 = arith.constant 0 : index
    %c23 = arith.constant 23 : index
    %c0_158 = arith.constant 0 : index
    %214 = vector.load %arg11[%c0_157, %c23, %c0_158] : memref<2x32x128xbf16, #tpu.memory_space<vmem>>, vector<2x1x128xbf16>
    %215 = vector.shape_cast %214 : vector<2x1x128xbf16> to vector<2x128xbf16>
    %c23_159 = arith.constant 23 : index
    %c0_160 = arith.constant 0 : index
    %c0_161 = arith.constant 0 : index
    %216 = vector.load %arg6[%c23_159, %c0_160, %c0_161] : memref<25x128x384xbf16, #tpu.memory_space<vmem>>, vector<1x128x384xbf16>
    %217 = vector.shape_cast %216 : vector<1x128x384xbf16> to vector<128x384xbf16>
    %cst_162 = arith.constant dense<0.000000e+00> : vector<2x384xf32>
    %218 = tpu.matmul %215, %217, %cst_162 {dimension_numbers = #tpu.dot_dimension_numbers<[1], [0], [0], [1], [0, 0, 1, 1], [], []>} : vector<2x128xbf16>, vector<128x384xbf16>, vector<2x384xf32> -> vector<2x384xf32>
    %219 = arith.addf %213, %218 : vector<2x384xf32>
    %c0_163 = arith.constant 0 : index
    %c24 = arith.constant 24 : index
    %c0_164 = arith.constant 0 : index
    %220 = vector.load %arg11[%c0_163, %c24, %c0_164] : memref<2x32x128xbf16, #tpu.memory_space<vmem>>, vector<2x1x128xbf16>
    %221 = vector.shape_cast %220 : vector<2x1x128xbf16> to vector<2x128xbf16>
    %c24_165 = arith.constant 24 : index
    %c0_166 = arith.constant 0 : index
    %c0_167 = arith.constant 0 : index
    %222 = vector.load %arg6[%c24_165, %c0_166, %c0_167] : memref<25x128x384xbf16, #tpu.memory_space<vmem>>, vector<1x128x384xbf16>
    %223 = vector.shape_cast %222 : vector<1x128x384xbf16> to vector<128x384xbf16>
    %cst_168 = arith.constant dense<0.000000e+00> : vector<2x384xf32>
    %224 = tpu.matmul %221, %223, %cst_168 {dimension_numbers = #tpu.dot_dimension_numbers<[1], [0], [0], [1], [0, 0, 1, 1], [], []>} : vector<2x128xbf16>, vector<128x384xbf16>, vector<2x384xf32> -> vector<2x384xf32>
    %225 = arith.addf %219, %224 : vector<2x384xf32>
    %c0_169 = arith.constant 0 : index
    %c0_170 = arith.constant 0 : index
    %226 = vector.load %arg7[%c0_169, %c0_170] : memref<1x384xf32, #tpu.memory_space<vmem>>, vector<1x384xf32>
    %227 = vector.broadcast %226 : vector<1x384xf32> to vector<2x384xf32>
    %228 = arith.mulf %225, %227 : vector<2x384xf32>
    %c0_171 = arith.constant 0 : index
    %c0_172 = arith.constant 0 : index
    %229 = vector.load %arg8[%c0_171, %c0_172] : memref<1x384xf32, #tpu.memory_space<vmem>>, vector<1x384xf32>
    %230 = vector.broadcast %229 : vector<1x384xf32> to vector<2x384xf32>
    %231 = arith.addf %228, %230 : vector<2x384xf32>
    %cst_173 = arith.constant 0.000000e+00 : f32
    %232 = vector.broadcast %cst_173 : f32 to vector<2x384xf32>
    %233 = arith.maximumf %231, %232 : vector<2x384xf32>
    %c0_174 = arith.constant 0 : index
    %c0_175 = arith.constant 0 : index
    %234 = vector.load %arg9[%c0_174, %c0_175] : memref<384x8xf32, #tpu.memory_space<vmem>>, vector<384x8xf32>
    %cst_176 = arith.constant dense<0.000000e+00> : vector<2x8xf32>
    %235 = tpu.matmul %233, %234, %cst_176 {dimension_numbers = #tpu.dot_dimension_numbers<[1], [0], [0], [1], [0, 0, 1, 1], [], []>} : vector<2x384xf32>, vector<384x8xf32>, vector<2x8xf32> -> vector<2x8xf32>
    %c0_177 = arith.constant 0 : index
    %c0_178 = arith.constant 0 : index
    %c0_179 = arith.constant 0 : index
    %236 = vector.load %arg10[%c0_177, %c0_178, %c0_179] : memref<1x2x8xf32, #tpu.memory_space<vmem>>, vector<1x2x8xf32>
    %237 = vector.shape_cast %236 : vector<1x2x8xf32> to vector<2x8xf32>
    %238 = vector.shape_cast %235 : vector<2x8xf32> to vector<1x2x8xf32>
    tpu.vector_store %arg10[%c0_177, %c0_178, %c0_179], %238 {strides = array<i32>} : memref<1x2x8xf32, #tpu.memory_space<vmem>>, vector<1x2x8xf32>,
    return
  }
  func.func @transform_0(%arg0: i32) -> (i32, i32) {
    %c0_i32 = arith.constant 0 : i32
    %c0_i32_0 = arith.constant 0 : i32
    %c0_i32_1 = arith.constant 0 : i32
    return %c0_i32, %c0_i32_0 : i32, i32
  }
  func.func @transform_1(%arg0: i32) -> (i32, i32) {
    %c0_i32 = arith.constant 0 : i32
    %c0_i32_0 = arith.constant 0 : i32
    %c0_i32_1 = arith.constant 0 : i32
    return %c0_i32, %c0_i32_0 : i32, i32
  }
  func.func @transform_2(%arg0: i32) -> (i32, i32) {
    %c0_i32 = arith.constant 0 : i32
    %c0_i32_0 = arith.constant 0 : i32
    %c0_i32_1 = arith.constant 0 : i32
    return %c0_i32, %c0_i32_0 : i32, i32
  }
  func.func @transform_3(%arg0: i32) -> (i32, i32) {
    %c0_i32 = arith.constant 0 : i32
    %c0_i32_0 = arith.constant 0 : i32
    %c0_i32_1 = arith.constant 0 : i32
    return %c0_i32, %c0_i32_0 : i32, i32
  }
  func.func @transform_4(%arg0: i32) -> (i32, i32) {
    %c0_i32 = arith.constant 0 : i32
    %c0_i32_0 = arith.constant 0 : i32
    %c0_i32_1 = arith.constant 0 : i32
    return %c0_i32, %c0_i32_0 : i32, i32
  }
  func.func @transform_5(%arg0: i32) -> (i32, i32, i32) {
    %c0_i32 = arith.constant 0 : i32
    %c0_i32_0 = arith.constant 0 : i32
    %c0_i32_1 = arith.constant 0 : i32
    return %c0_i32, %c0_i32_0, %arg0 : i32, i32, i32
  }
  func.func @transform_6(%arg0: i32) -> (i32, i32) {
    %c0_i32 = arith.constant 0 : i32
    %c0_i32_0 = arith.constant 0 : i32
    return %c0_i32, %arg0 : i32, i32
  }
  func.func @transform_7(%arg0: i32) -> (i32, i32) {
    %c0_i32 = arith.constant 0 : i32
    %c0_i32_0 = arith.constant 0 : i32
    return %c0_i32, %arg0 : i32, i32
  }
  func.func @transform_8(%arg0: i32) -> (i32, i32) {
    %c0_i32 = arith.constant 0 : i32
    %c0_i32_0 = arith.constant 0 : i32
    return %arg0, %c0_i32 : i32, i32
  }
  func.func @transform_9(%arg0: i32) -> (i32, i32, i32) {
    %c0_i32 = arith.constant 0 : i32
    %c0_i32_0 = arith.constant 0 : i32
    %c0_i32_1 = arith.constant 0 : i32
    return %arg0, %c0_i32, %c0_i32_0 : i32, i32, i32
  }
}

</mosaic_0001>

<llo_original>
// kernel: inception_aux_forward.1
$region0: #{inception_aux_forward.1}
  #allocation0 [shape = 'u32[]', space=smem, size = 0x4, offset = 0x4, fixed_abs, tag = 'smem constant byte address 0x4 - core index']
  #allocation1 [shape = 'u32[72,128]{1,0:T(1,128)}', space=vmem, size = 0x9000, scoped, tag = 'internal scratch']
  #allocation2 [shape = 'bf16[2,32,128]{2,1,0:T(8,128)(2,1)}', space=vmem, size = 0x4000, scoped, tag = 'scratch operand']
  %s0 = inlined_call_operand.vmem [shape: f32[8,289], index: 0, kind: input, shape index: {}]
  %s1 = inlined_call_operand.hbm [shape: f32[289,32], index: 1, kind: input, shape index: {}]
  %s2 = inlined_call_operand.hbm [shape: f32[4,128], index: 2, kind: input, shape index: {}]
  %s3 = inlined_call_operand.hbm [shape: f32[1,128], index: 3, kind: input, shape index: {}]
  %s4 = inlined_call_operand.hbm [shape: f32[1,128], index: 4, kind: input, shape index: {}]
  %s5 = inlined_call_operand.hbm [shape: bf16[25,128,768], index: 5, kind: input, shape index: {}]
  %s6 = inlined_call_operand.hbm [shape: f32[1,768], index: 6, kind: input, shape index: {}]
  %s7 = inlined_call_operand.hbm [shape: f32[1,768], index: 7, kind: input, shape index: {}]
  %s8 = inlined_call_operand.hbm [shape: f32[768,8], index: 8, kind: input, shape index: {}]
  %s9 = inlined_call_operand.vmem [shape: f32[2,2,8], index: 9, kind: output, shape index: {}]
  %s10 = sld [smem:[#allocation0]]
  $region101: #{inception_aux_forward.1} parent=0
    _
  %s12 = ssub.s32 1, %s10
  %s13 = scalar_select 0, %s12, %s10
  $region1: #{inception_aux_forward.1} parent=0
    #allocation3 [shape = 'u8[151552]{0}', space=vmem, size = 0x25000, scoped, tag = 'input window, operand 1, single buffered']
    #allocation4 [shape = 's32[2]{0}', space=sflag, size = 0x8, scoped, tag = 'scoped memory for inception_aux_forward.1']
    #allocation5 [shape = 'u8[2048]{0}', space=vmem, size = 0x800, scoped, tag = 'input window, operand 2, single buffered']
    #allocation6 [shape = 's32[1]{0}', space=sflag, size = 0x4, scoped, tag = 'scoped memory for inception_aux_forward.1']
    #allocation7 [shape = 'u8[512]{0}', space=vmem, size = 0x400, scoped, tag = 'input window, operand 3, single buffered']
    #allocation8 [shape = 'u8[512]{0}', space=vmem, size = 0x400, scoped, tag = 'input window, operand 4, single buffered']
    #allocation9 [shape = 's32[1]{0}', space=sflag, size = 0x4, scoped, tag = 'scoped memory for inception_aux_forward.1']
    #allocation10 [shape = 'u8[4915200]{0}', space=vmem, size = 0x4b0000, scoped, tag = 'input window, operand 5']
    #allocation11 [shape = 'u8[3072]{0}', space=vmem, size = 0xc00, scoped, tag = 'input window, operand 6']
    #allocation12 [shape = 'u8[3072]{0}', space=vmem, size = 0xc00, scoped, tag = 'input window, operand 7']
    #allocation13 [shape = 'u8[393216]{0}', space=vmem, size = 0x60000, scoped, tag = 'input window, operand 8']
    %14 = vsyncpa [#allocation4], 0
    %15 = vsyncpa [#allocation6], 0
    %16 = vsyncpa [#allocation9], 0
    loop: start=0, step=1, limit=4
    $region2: #{inception_aux_forward.1} parent=1 // loop_pre_header
      _
    $region3: #{inception_aux_forward.1} parent=1 // loop_header
      %s18 = sphi 0, %s22
      %p19 = scmp.ge.s32.totalorder %s18, 4
      %s26 = sphi 0, %s26
      %s28 = sphi 0, %s26
      %s29 = sphi 0, %s28
      %s43 = sphi 0, %s29
      %s47 = sphi 0, %s47
      %s49 = sphi 0, %s47
      %s50 = sphi 0, %s49
      %s64 = sphi 0, %s50
      %s68 = sphi 0, %s68
      %s70 = sphi 0, %s68
      %s71 = sphi 0, %s70
      %s85 = sphi 0, %s71
      %s89 = sphi 0, %s89
      %s91 = sphi 0, %s89
      %s92 = sphi 0, %s91
      %s106 = sphi 0, %s92
      %s110 = sphi 0, %s110
      %s112 = sphi 0, %s110
      %s113 = sphi 0, %s112
      %s127 = sphi 0, %s113
      %s133 = sphi 0, %s135
      %s136 = sphi 0, %s133
      %s137 = sphi 0, %s136
      %s153 = sphi 0, %s137
      %s159 = sphi 0, %s161
      %s162 = sphi 0, %s159
      %s163 = sphi 0, %s162
      %s179 = sphi 0, %s163
      %s185 = sphi 0, %s187
      %s188 = sphi 0, %s185
      %s189 = sphi 0, %s188
      %s205 = sphi 0, %s189
      %s211 = sphi 0, %s213
      %s214 = sphi 0, %s211
      %s215 = sphi 0, %s214
      %s231 = sphi 0, %s215
      %s237 = sphi 0, %s239
      %s240 = sphi 0, %s237
      %s241 = sphi 0, %s240
      %s257 = sphi 0, %s241
    $region4: #{inception_aux_forward.1} parent=1 // loop_header_branch
      %21 = sbr.rel (%p19) target = $region8
    $region5: #{inception_aux_forward.1} parent=1 // loop_body
      %s23 = ssub.s32 %s18, 1
      %s24 = ssub.s32 %s18, 2
      %s25 = sadd.s32 %s18, 1
      %s27 = sadd.s32 %s26, 1
      %p30 = scmp.eq.s32.totalorder %s18, 1
      %p31 = scmp.ne.s32.totalorder %s26, %s28
      %p32 = scmp.eq.s32.totalorder %s18, 0
      %p33 = por %p31, %p32
      %p34 = scmp.ne.s32.totalorder %s26, %s28
      %p35 = scmp.eq.s32.totalorder %s23, 1
      %p36 = por %p34, %p35
      %p37 = scmp.ne.s32.totalorder %s28, %s29
      %p38 = scmp.eq.s32.totalorder %s23, 0
      %p39 = por %p37, %p38
      %p40 = scmp.ne.s32.totalorder %s28, %s29
      %p41 = scmp.eq.s32.totalorder %s24, 1
      %p42 = por %p40, %p41
      %p44 = scmp.ne.s32.totalorder %s29, %s43
      %p45 = scmp.eq.s32.totalorder %s24, 0
      %p46 = por %p44, %p45
      %s48 = sadd.s32 %s47, 1
      %p51 = scmp.eq.s32.totalorder %s18, 1
      %p52 = scmp.ne.s32.totalorder %s47, %s49
      %p53 = scmp.eq.s32.totalorder %s18, 0
      %p54 = por %p52, %p53
      %p55 = scmp.ne.s32.totalorder %s47, %s49
      %p56 = scmp.eq.s32.totalorder %s23, 1
      %p57 = por %p55, %p56
      %p58 = scmp.ne.s32.totalorder %s49, %s50
      %p59 = scmp.eq.s32.totalorder %s23, 0
      %p60 = por %p58, %p59
      %p61 = scmp.ne.s32.totalorder %s49, %s50
      %p62 = scmp.eq.s32.totalorder %s24, 1
      %p63 = por %p61, %p62
      %p65 = scmp.ne.s32.totalorder %s50, %s64
      %p66 = scmp.eq.s32.totalorder %s24, 0
      %p67 = por %p65, %p66
      %s69 = sadd.s32 %s68, 1
      %p72 = scmp.eq.s32.totalorder %s18, 1
      %p73 = scmp.ne.s32.totalorder %s68, %s70
      %p74 = scmp.eq.s32.totalorder %s18, 0
      %p75 = por %p73, %p74
      %p76 = scmp.ne.s32.totalorder %s68, %s70
      %p77 = scmp.eq.s32.totalorder %s23, 1
      %p78 = por %p76, %p77
      %p79 = scmp.ne.s32.totalorder %s70, %s71
      %p80 = scmp.eq.s32.totalorder %s23, 0
      %p81 = por %p79, %p80
      %p82 = scmp.ne.s32.totalorder %s70, %s71
      %p83 = scmp.eq.s32.totalorder %s24, 1
      %p84 = por %p82, %p83
      %p86 = scmp.ne.s32.totalorder %s71, %s85
      %p87 = scmp.eq.s32.totalorder %s24, 0
      %p88 = por %p86, %p87
      %s90 = sadd.s32 %s89, 1
      %p93 = scmp.eq.s32.totalorder %s18, 1
      %p94 = scmp.ne.s32.totalorder %s89, %s91
      %p95 = scmp.eq.s32.totalorder %s18, 0
      %p96 = por %p94, %p95
      %p97 = scmp.ne.s32.totalorder %s89, %s91
      %p98 = scmp.eq.s32.totalorder %s23, 1
      %p99 = por %p97, %p98
      %p100 = scmp.ne.s32.totalorder %s91, %s92
      %p101 = scmp.eq.s32.totalorder %s23, 0
      %p102 = por %p100, %p101
      %p103 = scmp.ne.s32.totalorder %s91, %s92
      %p104 = scmp.eq.s32.totalorder %s24, 1
      %p105 = por %p103, %p104
      %p107 = scmp.ne.s32.totalorder %s92, %s106
      %p108 = scmp.eq.s32.totalorder %s24, 0
      %p109 = por %p107, %p108
      %s111 = sadd.s32 %s110, 1
      %p114 = scmp.eq.s32.totalorder %s18, 1
      %p115 = scmp.ne.s32.totalorder %s110, %s112
      %p116 = scmp.eq.s32.totalorder %s18, 0
      %p117 = por %p115, %p116
      %p118 = scmp.ne.s32.totalorder %s110, %s112
      %p119 = scmp.eq.s32.totalorder %s23, 1
      %p120 = por %p118, %p119
      %p121 = scmp.ne.s32.totalorder %s112, %s113
      %p122 = scmp.eq.s32.totalorder %s23, 0
      %p123 = por %p121, %p122
      %p124 = scmp.ne.s32.totalorder %s112, %s113
      %p125 = scmp.eq.s32.totalorder %s24, 1
      %p126 = por %p124, %p125
      %p128 = scmp.ne.s32.totalorder %s113, %s127
      %p129 = scmp.eq.s32.totalorder %s24, 0
      %p130 = por %p128, %p129
      %s131 = ssub.s32 %s18, %s25
      %p132 = scmp.eq.s32.totalorder %s131, 0
      %s134 = sadd.s32 %s133, 1
      %s135 = scalar_select %p132, %s133, %s134
      %p138 = pneg %p132
      %p139 = scmp.eq.s32.totalorder %s18, 1
      %p140 = por %p138, %p139
      %p141 = scmp.ne.s32.totalorder %s133, %s136
      %p142 = scmp.eq.s32.totalorder %s18, 0
      %p143 = por %p141, %p142
      %p144 = scmp.ne.s32.totalorder %s133, %s136
      %p145 = scmp.eq.s32.totalorder %s23, 1
      %p146 = por %p144, %p145
      %p147 = scmp.ne.s32.totalorder %s136, %s137
      %p148 = scmp.eq.s32.totalorder %s23, 0
      %p149 = por %p147, %p148
      %p150 = scmp.ne.s32.totalorder %s136, %s137
      %p151 = scmp.eq.s32.totalorder %s24, 1
      %p152 = por %p150, %p151
      %p154 = scmp.ne.s32.totalorder %s137, %s153
      %p155 = scmp.eq.s32.totalorder %s24, 0
      %p156 = por %p154, %p155
      %s157 = ssub.s32 %s18, %s25
      %p158 = scmp.eq.s32.totalorder %s157, 0
      %s160 = sadd.s32 %s159, 1
      %s161 = scalar_select %p158, %s159, %s160
      %p164 = pneg %p158
      %p165 = scmp.eq.s32.totalorder %s18, 1
      %p166 = por %p164, %p165
      %p167 = scmp.ne.s32.totalorder %s159, %s162
      %p168 = scmp.eq.s32.totalorder %s18, 0
      %p169 = por %p167, %p168
      %p170 = scmp.ne.s32.totalorder %s159, %s162
      %p171 = scmp.eq.s32.totalorder %s23, 1
      %p172 = por %p170, %p171
      %p173 = scmp.ne.s32.totalorder %s162, %s163
      %p174 = scmp.eq.s32.totalorder %s23, 0
      %p175 = por %p173, %p174
      %p176 = scmp.ne.s32.totalorder %s162, %s163
      %p177 = scmp.eq.s32.totalorder %s24, 1
      %p178 = por %p176, %p177
      %p180 = scmp.ne.s32.totalorder %s163, %s179
      %p181 = scmp.eq.s32.totalorder %s24, 0
      %p182 = por %p180, %p181
      %s183 = ssub.s32 %s18, %s25
      %p184 = scmp.eq.s32.totalorder %s183, 0
      %s186 = sadd.s32 %s185, 1
      %s187 = scalar_select %p184, %s185, %s186
      %p190 = pneg %p184
      %p191 = scmp.eq.s32.totalorder %s18, 1
      %p192 = por %p190, %p191
      %p193 = scmp.ne.s32.totalorder %s185, %s188
      %p194 = scmp.eq.s32.totalorder %s18, 0
      %p195 = por %p193, %p194
      %p196 = scmp.ne.s32.totalorder %s185, %s188
      %p197 = scmp.eq.s32.totalorder %s23, 1
      %p198 = por %p196, %p197
      %p199 = scmp.ne.s32.totalorder %s188, %s189
      %p200 = scmp.eq.s32.totalorder %s23, 0
      %p201 = por %p199, %p200
      %p202 = scmp.ne.s32.totalorder %s188, %s189
      %p203 = scmp.eq.s32.totalorder %s24, 1
      %p204 = por %p202, %p203
      %p206 = scmp.ne.s32.totalorder %s189, %s205
      %p207 = scmp.eq.s32.totalorder %s24, 0
      %p208 = por %p206, %p207
      %s209 = ssub.s32 %s18, %s25
      %p210 = scmp.eq.s32.totalorder %s209, 0
      %s212 = sadd.s32 %s211, 1
      %s213 = scalar_select %p210, %s211, %s212
      %p216 = pneg %p210
      %p217 = scmp.eq.s32.totalorder %s18, 1
      %p218 = por %p216, %p217
      %p219 = scmp.ne.s32.totalorder %s211, %s214
      %p220 = scmp.eq.s32.totalorder %s18, 0
      %p221 = por %p219, %p220
      %p222 = scmp.ne.s32.totalorder %s211, %s214
      %p223 = scmp.eq.s32.totalorder %s23, 1
      %p224 = por %p222, %p223
      %p225 = scmp.ne.s32.totalorder %s214, %s215
      %p226 = scmp.eq.s32.totalorder %s23, 0
      %p227 = por %p225, %p226
      %p228 = scmp.ne.s32.totalorder %s214, %s215
      %p229 = scmp.eq.s32.totalorder %s24, 1
      %p230 = por %p228, %p229
      %p232 = scmp.ne.s32.totalorder %s215, %s231
      %p233 = scmp.eq.s32.totalorder %s24, 0
      %p234 = por %p232, %p233
      %s235 = ssub.s32 %s18, %s25
      %p236 = scmp.eq.s32.totalorder %s235, 0
      %s238 = sadd.s32 %s237, 1
      %s239 = scalar_select %p236, %s237, %s238
      %p242 = pneg %p236
      %p243 = scmp.eq.s32.totalorder %s18, 1
      %p244 = por %p242, %p243
      %p245 = scmp.ne.s32.totalorder %s237, %s240
      %p246 = scmp.eq.s32.totalorder %s18, 0
      %p247 = por %p245, %p246
      %p248 = scmp.ne.s32.totalorder %s237, %s240
      %p249 = scmp.eq.s32.totalorder %s23, 1
      %p250 = por %p248, %p249
      %p251 = scmp.ne.s32.totalorder %s240, %s241
      %p252 = scmp.eq.s32.totalorder %s23, 0
      %p253 = por %p251, %p252
      %p254 = scmp.ne.s32.totalorder %s240, %s241
      %p255 = scmp.eq.s32.totalorder %s24, 1
      %p256 = por %p254, %p255
      %p258 = scmp.ne.s32.totalorder %s241, %s257
      %p259 = scmp.eq.s32.totalorder %s24, 0
      %p260 = por %p258, %p259
      %p261 = scmp.le.s32.totalorder 1, %s18
      %p262 = scmp.lt.s32.totalorder %s18, 3
      %p263 = pnand %p261, %p262
      %p264 = pneg %p263
      // Predicated region
      $region9: #{inception_aux_forward.1} parent=5 // pred_check
        _
      $region10: #{inception_aux_forward.1} parent=5 // pred_check_branch
        %266 = sbr.rel (%p263) target = $region12
      $region11: #{inception_aux_forward.1} parent=5 // pred_region
        %s267 = ssub.s32 %s18, 1
        // Predicated region
        $region13: #{inception_aux_forward.1} parent=11 // pred_check
          %p268 = pneg %p39
        $region14: #{inception_aux_forward.1} parent=11 // pred_check_branch
          %270 = sbr.rel (%p268) target = $region16
        $region15: #{inception_aux_forward.1} parent=11 // pred_region
          _
        $region16: #{inception_aux_forward.1} parent=11 // pred_fallthru
          _
        // Predicated region
        $region17: #{inception_aux_forward.1} parent=11 // pred_check
          %p271 = pneg %p60
        $region18: #{inception_aux_forward.1} parent=11 // pred_check_branch
          %273 = sbr.rel (%p271) target = $region20
        $region19: #{inception_aux_forward.1} parent=11 // pred_region
          %275 = vsyncadd [#allocation4], 0
          %s276 = sshll.u32 %s1, 4
          %s277 = int_to_ptr.hbm [resolvable:$true] %s276
          %s278 = sshll.u32 [#allocation3], 4
          %s279 = int_to_ptr.vmem [resolvable:$true] %s278
          %284 = dma.hbm_to_vmem [thread:$0]  %s277, 4736, %s279, [#allocation4], 128, 128, 8
        $region20: #{inception_aux_forward.1} parent=11 // pred_fallthru
          _
        // Predicated region
        $region21: #{inception_aux_forward.1} parent=11 // pred_check
          %p285 = pneg %p81
        $region22: #{inception_aux_forward.1} parent=11 // pred_check_branch
          %287 = sbr.rel (%p285) target = $region24
        $region23: #{inception_aux_forward.1} parent=11 // pred_region
          %289 = vsyncadd [#allocation6], 0
          %s291 = sshll.u32 %s2, 4
          %s292 = int_to_ptr.hbm [resolvable:$true] %s291
          %s293 = sshll.u32 [#allocation5], 4
          %s294 = int_to_ptr.vmem [resolvable:$true] %s293
          %296 = dma.hbm_to_vmem [thread:$0]  %s292, 64, %s294, [#allocation6]
        $region24: #{inception_aux_forward.1} parent=11 // pred_fallthru
          _
        // Predicated region
        $region25: #{inception_aux_forward.1} parent=11 // pred_check
          %p297 = pneg %p102
        $region26: #{inception_aux_forward.1} parent=11 // pred_check_branch
          %299 = sbr.rel (%p297) target = $region28
        $region27: #{inception_aux_forward.1} parent=11 // pred_region
          %301 = vsyncadd [#allocation6], 0
          %s303 = sshll.u32 %s3, 4
          %s304 = int_to_ptr.hbm [resolvable:$true] %s303
          %s305 = sshll.u32 [#allocation7], 4
          %s306 = int_to_ptr.vmem [resolvable:$true] %s305
          %308 = dma.hbm_to_vmem [thread:$0]  %s304, 16, %s306, [#allocation6]
        $region28: #{inception_aux_forward.1} parent=11 // pred_fallthru
          _
        // Predicated region
        $region29: #{inception_aux_forward.1} parent=11 // pred_check
          %p309 = pneg %p123
        $region30: #{inception_aux_forward.1} parent=11 // pred_check_branch
          %311 = sbr.rel (%p309) target = $region32
        $region31: #{inception_aux_forward.1} parent=11 // pred_region
          %313 = vsyncadd [#allocation9], 0
          %s315 = sshll.u32 %s4, 4
          %s316 = int_to_ptr.hbm [resolvable:$true] %s315
          %s317 = sshll.u32 [#allocation8], 4
          %s318 = int_to_ptr.vmem [resolvable:$true] %s317
          %320 = dma.hbm_to_vmem [thread:$0]  %s316, 16, %s318, [#allocation9]
        $region32: #{inception_aux_forward.1} parent=11 // pred_fallthru
          _
      $region12: #{inception_aux_forward.1} parent=5 // pred_fallthru
        _
      %p321 = scmp.lt.s32.totalorder %s18, 2
      // Predicated region
      $region33: #{inception_aux_forward.1} parent=5 // pred_check
        %p322 = pneg %p321
      $region34: #{inception_aux_forward.1} parent=5 // pred_check_branch
        %324 = sbr.rel (%p322) target = $region36
      $region35: #{inception_aux_forward.1} parent=5 // pred_region
        // Predicated region
        $region37: #{inception_aux_forward.1} parent=35 // pred_check
          %p325 = pneg %p143
        $region38: #{inception_aux_forward.1} parent=35 // pred_check_branch
          %327 = sbr.rel (%p325) target = $region40
        $region39: #{inception_aux_forward.1} parent=35 // pred_region
          %s328 = sand.u32 %s18, 1
          %s329 = scalar_lea.sflag [#allocation4], %s328
          %s330 = sand.u32 %s133, 1
          %s331 = smul.addr %s330, 4800
          %s332 = scalar_lea.vmem [#allocation10], %s331
          %s333 = smul.u32 3, %s18
          %335 = vsyncadd %s329, 0
          %s336 = smul.addr %s333, 4
          %s337 = scalar_lea.hbm %s5, %s336
          %s338 = sshll.u32 %s337, 4
          %s339 = int_to_ptr.hbm [resolvable:$true] %s338
          %s340 = sshll.u32 %s332, 4
          %s341 = int_to_ptr.vmem [resolvable:$true] %s340
          %346 = dma.hbm_to_vmem [thread:$0]  %s339, 76800, %s341, %s329, 384, 192, 12
        $region40: #{inception_aux_forward.1} parent=35 // pred_fallthru
          _
        // Predicated region
        $region41: #{inception_aux_forward.1} parent=35 // pred_check
          %p347 = pneg %p169
        $region42: #{inception_aux_forward.1} parent=35 // pred_check_branch
          %349 = sbr.rel (%p347) target = $region44
        $region43: #{inception_aux_forward.1} parent=35 // pred_region
          %s350 = sand.u32 %s18, 1
          %s351 = scalar_lea.sflag [#allocation4], %s350
          %s352 = sand.u32 %s159, 1
          %s353 = smul.addr %s352, 3
          %s354 = scalar_lea.vmem [#allocation11], %s353
          %s355 = smul.u32 3, %s18
          %357 = vsyncadd %s351, 0
          %s358 = scalar_lea.hbm %s6, %s355
          %s360 = sshll.u32 %s358, 4
          %s361 = int_to_ptr.hbm [resolvable:$true] %s360
          %s362 = sshll.u32 %s354, 4
          %s363 = int_to_ptr.vmem [resolvable:$true] %s362
          %365 = dma.hbm_to_vmem [thread:$0]  %s361, 48, %s363, %s351
        $region44: #{inception_aux_forward.1} parent=35 // pred_fallthru
          _
        // Predicated region
        $region45: #{inception_aux_forward.1} parent=35 // pred_check
          %p366 = pneg %p195
        $region46: #{inception_aux_forward.1} parent=35 // pred_check_branch
          %368 = sbr.rel (%p366) target = $region48
        $region47: #{inception_aux_forward.1} parent=35 // pred_region
          %s369 = sand.u32 %s18, 1
          %s370 = scalar_lea.sflag [#allocation4], %s369
          %s371 = sand.u32 %s185, 1
          %s372 = smul.addr %s371, 3
          %s373 = scalar_lea.vmem [#allocation12], %s372
          %s374 = smul.u32 3, %s18
          %376 = vsyncadd %s370, 0
          %s377 = scalar_lea.hbm %s7, %s374
          %s379 = sshll.u32 %s377, 4
          %s380 = int_to_ptr.hbm [resolvable:$true] %s379
          %s381 = sshll.u32 %s373, 4
          %s382 = int_to_ptr.vmem [resolvable:$true] %s381
          %384 = dma.hbm_to_vmem [thread:$0]  %s380, 48, %s382, %s370
        $region48: #{inception_aux_forward.1} parent=35 // pred_fallthru
          _
        // Predicated region
        $region49: #{inception_aux_forward.1} parent=35 // pred_check
          %p385 = pneg %p221
        $region50: #{inception_aux_forward.1} parent=35 // pred_check_branch
          %387 = sbr.rel (%p385) target = $region52
        $region51: #{inception_aux_forward.1} parent=35 // pred_region
          %s388 = sand.u32 %s18, 1
          %s389 = scalar_lea.sflag [#allocation4], %s388
          %s390 = sand.u32 %s211, 1
          %s391 = smul.addr %s390, 384
          %s392 = scalar_lea.vmem [#allocation13], %s391
          %s393 = smul.u32 48, %s18
          %395 = vsyncadd %s389, 0
          %s396 = smul.addr %s393, 8
          %s397 = scalar_lea.hbm %s8, %s396
          %s398 = sshll.u32 %s397, 4
          %s399 = int_to_ptr.hbm [resolvable:$true] %s398
          %s400 = sshll.u32 %s392, 4
          %s401 = int_to_ptr.vmem [resolvable:$true] %s400
          %406 = dma.hbm_to_vmem [thread:$0]  %s399, 6144, %s401, %s389, 128, 128, 8
        $region52: #{inception_aux_forward.1} parent=35 // pred_fallthru
          _
      $region36: #{inception_aux_forward.1} parent=5 // pred_fallthru
        _
      %p407 = scmp.le.s32.totalorder 1, %s18
      %p408 = scmp.lt.s32.totalorder %s18, 3
      %p409 = pnand %p407, %p408
      %p410 = pneg %p409
      // Predicated region
      $region53: #{inception_aux_forward.1} parent=5 // pred_check
        _
      $region54: #{inception_aux_forward.1} parent=5 // pred_check_branch
        %412 = sbr.rel (%p409) target = $region56
      $region55: #{inception_aux_forward.1} parent=5 // pred_region
        %s413 = ssub.s32 %s18, 1
        // Predicated region
        $region57: #{inception_aux_forward.1} parent=55 // pred_check
          %p414 = pneg %p60
        $region58: #{inception_aux_forward.1} parent=55 // pred_check_branch
          %416 = sbr.rel (%p414) target = $region60
        $region59: #{inception_aux_forward.1} parent=55 // pred_region
          %418 = dma.done [#allocation4], 4736
        $region60: #{inception_aux_forward.1} parent=55 // pred_fallthru
          _
        // Predicated region
        $region61: #{inception_aux_forward.1} parent=55 // pred_check
          %p419 = pneg %p81
        $region62: #{inception_aux_forward.1} parent=55 // pred_check_branch
          %421 = sbr.rel (%p419) target = $region64
        $region63: #{inception_aux_forward.1} parent=55 // pred_region
          %423 = dma.done [#allocation6], 64
        $region64: #{inception_aux_forward.1} parent=55 // pred_fallthru
          _
        // Predicated region
        $region65: #{inception_aux_forward.1} parent=55 // pred_check
          %p424 = pneg %p102
        $region66: #{inception_aux_forward.1} parent=55 // pred_check_branch
          %426 = sbr.rel (%p424) target = $region68
        $region67: #{inception_aux_forward.1} parent=55 // pred_region
          %428 = dma.done [#allocation6], 16
        $region68: #{inception_aux_forward.1} parent=55 // pred_fallthru
          _
        // Predicated region
        $region69: #{inception_aux_forward.1} parent=55 // pred_check
          %p429 = pneg %p123
        $region70: #{inception_aux_forward.1} parent=55 // pred_check_branch
          %431 = sbr.rel (%p429) target = $region72
        $region71: #{inception_aux_forward.1} parent=55 // pred_region
          %433 = dma.done [#allocation9], 16
        $region72: #{inception_aux_forward.1} parent=55 // pred_fallthru
          _
        %s434 = sand.u32 %s23, 1
        %s435 = scalar_lea.sflag [#allocation4], %s434
        %s436 = sand.u32 %s136, 1
        %s437 = smul.addr %s436, 4800
        %s438 = scalar_lea.vmem [#allocation10], %s437
        // Predicated region
        $region73: #{inception_aux_forward.1} parent=55 // pred_check
          %p439 = pneg %p149
        $region74: #{inception_aux_forward.1} parent=55 // pred_check_branch
          %441 = sbr.rel (%p439) target = $region76
        $region75: #{inception_aux_forward.1} parent=55 // pred_region
          %443 = dma.done %s435, 76800
        $region76: #{inception_aux_forward.1} parent=55 // pred_fallthru
          _
        %s444 = sand.u32 %s23, 1
        %s445 = scalar_lea.sflag [#allocation4], %s444
        %s446 = sand.u32 %s162, 1
        %s447 = smul.addr %s446, 3
        %s448 = scalar_lea.vmem [#allocation11], %s447
        // Predicated region
        $region77: #{inception_aux_forward.1} parent=55 // pred_check
          %p449 = pneg %p175
        $region78: #{inception_aux_forward.1} parent=55 // pred_check_branch
          %451 = sbr.rel (%p449) target = $region80
        $region79: #{inception_aux_forward.1} parent=55 // pred_region
          %453 = dma.done %s445, 48
        $region80: #{inception_aux_forward.1} parent=55 // pred_fallthru
          _
        %s454 = sand.u32 %s23, 1
        %s455 = scalar_lea.sflag [#allocation4], %s454
        %s456 = sand.u32 %s188, 1
        %s457 = smul.addr %s456, 3
        %s458 = scalar_lea.vmem [#allocation12], %s457
        // Predicated region
        $region81: #{inception_aux_forward.1} parent=55 // pred_check
          %p459 = pneg %p201
        $region82: #{inception_aux_forward.1} parent=55 // pred_check_branch
          %461 = sbr.rel (%p459) target = $region84
        $region83: #{inception_aux_forward.1} parent=55 // pred_region
          %463 = dma.done %s455, 48
        $region84: #{inception_aux_forward.1} parent=55 // pred_fallthru
          _
        %s464 = sand.u32 %s23, 1
        %s465 = scalar_lea.sflag [#allocation4], %s464
        %s466 = sand.u32 %s214, 1
        %s467 = smul.addr %s466, 384
        %s468 = scalar_lea.vmem [#allocation13], %s467
        // Predicated region
        $region85: #{inception_aux_forward.1} parent=55 // pred_check
          %p469 = pneg %p227
        $region86: #{inception_aux_forward.1} parent=55 // pred_check_branch
          %471 = sbr.rel (%p469) target = $region88
        $region87: #{inception_aux_forward.1} parent=55 // pred_region
          %473 = dma.done %s465, 6144
        $region88: #{inception_aux_forward.1} parent=55 // pred_fallthru
          _
        %p474 = pneg %p39
        %p475 = pneg %p36
        %p476 = pneg %p60
        %p477 = pneg %p57
        %p478 = pneg %p81
        %p479 = pneg %p78
        %p480 = pneg %p102
        %p481 = pneg %p99
        %p482 = pneg %p123
        %p483 = pneg %p120
        %s484 = sand.u32 %s23, 1
        %s485 = scalar_lea.sflag [#allocation4], %s484
        %s486 = sand.u32 %s136, 1
        %s487 = smul.addr %s486, 4800
        %s488 = scalar_lea.vmem [#allocation10], %s487
        %p489 = pneg %p149
        %p490 = pneg %p146
        %s491 = sand.u32 %s23, 1
        %s492 = scalar_lea.sflag [#allocation4], %s491
        %s493 = sand.u32 %s162, 1
        %s494 = smul.addr %s493, 3
        %s495 = scalar_lea.vmem [#allocation11], %s494
        %p496 = pneg %p175
        %p497 = pneg %p172
        %s498 = sand.u32 %s23, 1
        %s499 = scalar_lea.sflag [#allocation4], %s498
        %s500 = sand.u32 %s188, 1
        %s501 = smul.addr %s500, 3
        %s502 = scalar_lea.vmem [#allocation12], %s501
        %p503 = pneg %p201
        %p504 = pneg %p198
        %s505 = sand.u32 %s23, 1
        %s506 = scalar_lea.sflag [#allocation4], %s505
        %s507 = sand.u32 %s214, 1
        %s508 = smul.addr %s507, 384
        %s509 = scalar_lea.vmem [#allocation13], %s508
        %p510 = pneg %p227
        %p511 = pneg %p224
        %p512 = pneg %p253
        %p513 = pneg %p250
        %p514 = scmp.lt.s32.totalorder %s23, 1
        %s515 = scalar_select %p514, %s23, 1
        %s516 = smul.addr %s515, 2
        %s517 = scalar_lea.vmem %s9, %s516
        %s518 = smul.u32 3, %s23
        %s519 = smul.u32 3, %s23
        %s520 = smul.u32 3, %s23
        %s521 = smul.u32 48, %s23
        %p522 = scmp.lt.s32.totalorder %s23, 1
        %s523 = scalar_select %p522, %s23, 1
        %s524 = smul.addr %s523, 2
        %s525 = scalar_lea.vmem %s9, %s524
        %v526 = vld [vmem:[%s0] sm:$0xff]
        %v527 = vld [vmem:[%s0 + $0x8] sm:$0xff]
        %v528 = vld [vmem:[%s0 + $0x10] sm:$0xff]
        %v529 = vld [vmem:[#allocation3] sm:$0xff]
        %v530 = vld [vmem:[#allocation3 + $0x8] sm:$0xff]
        %v531 = vld [vmem:[#allocation3 + $0x10] sm:$0xff]
        %v532 = vld [vmem:[#allocation3 + $0x18] sm:$0xff]
        %v533 = vld [vmem:[#allocation3 + $0x20] sm:$0xff]
        %v534 = vld [vmem:[#allocation3 + $0x28] sm:$0xff]
        %v535 = vld [vmem:[#allocation3 + $0x30] sm:$0xff]
        %v536 = vld [vmem:[#allocation3 + $0x38] sm:$0xff]
        %v537 = vld [vmem:[#allocation3 + $0x40] sm:$0xff]
        %v538 = vld [vmem:[#allocation3 + $0x48] sm:$0xff]
        %v539 = vld [vmem:[#allocation3 + $0x50] sm:$0xff]
        %v540 = vld [vmem:[#allocation3 + $0x58] sm:$0xff]
        %v541 = vld [vmem:[#allocation3 + $0x60] sm:$0xff]
        %v542 = vld [vmem:[#allocation3 + $0x68] sm:$0xff]
        %v543 = vld [vmem:[#allocation3 + $0x70] sm:$0xff]
        %v544 = vld [vmem:[#allocation3 + $0x78] sm:$0xff]
        %v545 = vld [vmem:[#allocation3 + $0x80] sm:$0xff]
        %v546 = vld [vmem:[#allocation3 + $0x88] sm:$0xff]
        %v547 = vld [vmem:[#allocation3 + $0x90] sm:$0xff]
        %v548 = vld [vmem:[#allocation3 + $0x98] sm:$0xff]
        %v549 = vld [vmem:[#allocation3 + $0xa0] sm:$0xff]
        %v550 = vld [vmem:[#allocation3 + $0xa8] sm:$0xff]
        %v551 = vld [vmem:[#allocation3 + $0xb0] sm:$0xff]
        %v552 = vld [vmem:[#allocation3 + $0xb8] sm:$0xff]
        %v553 = vld [vmem:[#allocation3 + $0xc0] sm:$0xff]
        %v554 = vld [vmem:[#allocation3 + $0xc8] sm:$0xff]
        %v555 = vld [vmem:[#allocation3 + $0xd0] sm:$0xff]
        %v556 = vld [vmem:[#allocation3 + $0xd8] sm:$0xff]
        %v557 = vld [vmem:[#allocation3 + $0xe0] sm:$0xff]
        %v558 = vld [vmem:[#allocation3 + $0xe8] sm:$0xff]
        %v559 = vld [vmem:[#allocation3 + $0xf0] sm:$0xff]
        %v560 = vld [vmem:[#allocation3 + $0xf8] sm:$0xff]
        %v561 = vld [vmem:[#allocation3 + $0x100] sm:$0xff]
        %v562 = vld [vmem:[#allocation3 + $0x108] sm:$0xff]
        %v563 = vld [vmem:[#allocation3 + $0x110] sm:$0xff]
        %v564 = vld [vmem:[#allocation3 + $0x118] sm:$0xff]
        %v565 = vld [vmem:[#allocation3 + $0x120] sm:$0x1]
        %vm566 = vcmask 269312
        %v568 = vsel %vm566, %v528, 0
        %vm570 = vcmask 1040384
        %v572 = vsel %vm570, %v565, 0
        %574 = vmatpush.msra.mxu0 %v544
        %575 = vmatpush.msra.mxu0 %v543
        %576 = vmatpush.msra.mxu0 %v542
        %577 = vmatpush.msra.mxu0 %v541
        %578 = vmatpush.msra.mxu0 %v540
        %579 = vmatpush.msra.mxu0 %v539
        %580 = vmatpush.msra.mxu0 %v538
        %581 = vmatpush.msra.mxu0 %v537
        %582 = vmatpush.msra.mxu0 %v536
        %583 = vmatpush.msra.mxu0 %v535
        %584 = vmatpush.msra.mxu0 %v534
        %585 = vmatpush.msra.mxu0 %v533
        %586 = vmatpush.msra.mxu0 %v532
        %587 = vmatpush.msra.mxu0 %v531
        %588 = vmatpush.msra.mxu0 %v530
        %589 = vmatpush.msra.mxu0 %v529
        %590 = vmatmul.f32.gmra.mxu0 %v526
        %v591 = vpop.f32.mrf.mxu0
        %v592 = vadd.f32 0.0, %v591
        %593 = vdwg.mxu0
        %594 = vmatpush.msra.mxu0 %v560
        %595 = vmatpush.msra.mxu0 %v559
        %596 = vmatpush.msra.mxu0 %v558
        %597 = vmatpush.msra.mxu0 %v557
        %598 = vmatpush.msra.mxu0 %v556
        %599 = vmatpush.msra.mxu0 %v555
        %600 = vmatpush.msra.mxu0 %v554
        %601 = vmatpush.msra.mxu0 %v553
        %602 = vmatpush.msra.mxu0 %v552
        %603 = vmatpush.msra.mxu0 %v551
        %604 = vmatpush.msra.mxu0 %v550
        %605 = vmatpush.msra.mxu0 %v549
        %606 = vmatpush.msra.mxu0 %v548
        %607 = vmatpush.msra.mxu0 %v547
        %608 = vmatpush.msra.mxu0 %v546
        %609 = vmatpush.msra.mxu0 %v545
        %610 = vmatmul.f32.gmra.mxu0 %v527
        %v611 = vpop.f32.mrf.mxu0
        %v612 = vadd.f32 %v592, %v611
        %613 = vdwg.mxu0
        %614 = vmatpush.msra.mxu0 0.0
        %615 = vmatpush.msra.mxu0 0.0
        %616 = vmatpush.msra.mxu0 0.0
        %617 = vmatpush.msra.mxu0 0.0
        %618 = vmatpush.msra.mxu0 0.0
        %619 = vmatpush.msra.mxu0 0.0
        %620 = vmatpush.msra.mxu0 0.0
        %621 = vmatpush.msra.mxu0 0.0
        %622 = vmatpush.msra.mxu0 0.0
        %623 = vmatpush.msra.mxu0 0.0
        %624 = vmatpush.msra.mxu0 0.0
        %625 = vmatpush.msra.mxu0 %v572
        %626 = vmatpush.msra.mxu0 %v564
        %627 = vmatpush.msra.mxu0 %v563
        %628 = vmatpush.msra.mxu0 %v562
        %629 = vmatpush.msra.mxu0 %v561
        %630 = vmatmul.f32.gmra.mxu0 %v568
        %v631 = vpop.f32.mrf.mxu0
        %v632 = vadd.f32 %v612, %v631
        %633 = vdwg.mxu0
        %634 = vxpose.xlu0.b32.start [1/16] %v632, 128
        %635 = vxpose.xlu0.b32.cont [2/16] 0.0, 128
        %636 = vxpose.xlu0.b32.cont [3/16] 0.0, 128
        %637 = vxpose.xlu0.b32.cont [4/16] 0.0, 128
        %638 = vxpose.xlu0.b32.cont [5/16] 0.0, 128
        %639 = vxpose.xlu0.b32.cont [6/16] 0.0, 128
        %640 = vxpose.xlu0.b32.cont [7/16] 0.0, 128
        %641 = vxpose.xlu0.b32.cont [8/16] 0.0, 128
        %642 = vxpose.xlu0.b32.cont [9/16] 0.0, 128
        %643 = vxpose.xlu0.b32.cont [10/16] 0.0, 128
        %644 = vxpose.xlu0.b32.cont [11/16] 0.0, 128
        %645 = vxpose.xlu0.b32.cont [12/16] 0.0, 128
        %646 = vxpose.xlu0.b32.cont [13/16] 0.0, 128
        %647 = vxpose.xlu0.b32.cont [14/16] 0.0, 128
        %648 = vxpose.xlu0.b32.cont [15/16] 0.0, 128
        %649 = vxpose.xlu0.b32.end [16/16] 0.0, 128
        %v650 = vpop.trf.xlu0
        %v651 = vpop.trf.xlu0
        %v652 = vpop.trf.xlu0
        %v653 = vpop.trf.xlu0
        %v654 = vpop.trf.xlu0
        %v655 = vpop.trf.xlu0
        %v656 = vpop.trf.xlu0
        %v657 = vpop.trf.xlu0
        %v658 = vpop.trf.xlu0
        %v659 = vpop.trf.xlu0
        %v660 = vpop.trf.xlu0
        %v661 = vpop.trf.xlu0
        %v662 = vpop.trf.xlu0
        %v663 = vpop.trf.xlu0
        %v664 = vpop.trf.xlu0
        %v665 = vpop.trf.xlu0
        %v666 = vld [vmem:[#allocation5] sm:$0xf]
        %v667 = vld [vmem:[#allocation7] sm:$0x1]
        %v668 = vld [vmem:[#allocation8] sm:$0x1]
        %670 = vset.pattern.permute.xlu0 0
        %671 = vperm.xlu0 %670, %v650
        %v672 = vpop.permute.xlu0 %671
        %675 = vset.pattern.permute.xlu0 0
        %676 = vperm.xlu0 %675, %v651
        %v677 = vpop.permute.xlu0 %676
        %680 = vset.pattern.permute.xlu0 0
        %681 = vperm.xlu0 %680, %v652
        %v682 = vpop.permute.xlu0 %681
        %685 = vset.pattern.permute.xlu0 0
        %686 = vperm.xlu0 %685, %v653
        %v687 = vpop.permute.xlu0 %686
        %v689 = vperm.slane %v666, 0
        %v690 = vmul.f32 %v672, %v689
        %v691 = vmul.f32 %v677, %v689
        %v692 = vmul.f32 %v682, %v689
        %v693 = vmul.f32 %v687, %v689
        %694 = vset.pattern.permute.xlu0 1
        %695 = vperm.xlu0 %694, %v650
        %v696 = vpop.permute.xlu0 %695
        %698 = vset.pattern.permute.xlu0 1
        %699 = vperm.xlu0 %698, %v651
        %v700 = vpop.permute.xlu0 %699
        %702 = vset.pattern.permute.xlu0 1
        %703 = vperm.xlu0 %702, %v652
        %v704 = vpop.permute.xlu0 %703
        %706 = vset.pattern.permute.xlu0 1
        %707 = vperm.xlu0 %706, %v653
        %v708 = vpop.permute.xlu0 %707
        %v710 = vperm.slane %v666, 1
        %v711 = vmul.f32 %v696, %v710
        %v712 = vmul.f32 %v700, %v710
        %v713 = vmul.f32 %v704, %v710
        %v714 = vmul.f32 %v708, %v710
        %v715 = vadd.f32 %v690, %v711
        %v716 = vadd.f32 %v691, %v712
        %v717 = vadd.f32 %v692, %v713
        %v718 = vadd.f32 %v693, %v714
        %719 = vset.pattern.permute.xlu0 2
        %720 = vperm.xlu0 %719, %v650
        %v721 = vpop.permute.xlu0 %720
        %723 = vset.pattern.permute.xlu0 2
        %724 = vperm.xlu0 %723, %v651
        %v725 = vpop.permute.xlu0 %724
        %727 = vset.pattern.permute.xlu0 2
        %728 = vperm.xlu0 %727, %v652
        %v729 = vpop.permute.xlu0 %728
        %731 = vset.pattern.permute.xlu0 2
        %732 = vperm.xlu0 %731, %v653
        %v733 = vpop.permute.xlu0 %732
        %v735 = vperm.slane %v666, 2
        %v736 = vmul.f32 %v721, %v735
        %v737 = vmul.f32 %v725, %v735
        %v738 = vmul.f32 %v729, %v735
        %v739 = vmul.f32 %v733, %v735
        %v740 = vadd.f32 %v715, %v736
        %v741 = vadd.f32 %v716, %v737
        %v742 = vadd.f32 %v717, %v738
        %v743 = vadd.f32 %v718, %v739
        %744 = vset.pattern.permute.xlu0 3
        %745 = vperm.xlu0 %744, %v650
        %v746 = vpop.permute.xlu0 %745
        %748 = vset.pattern.permute.xlu0 3
        %749 = vperm.xlu0 %748, %v651
        %v750 = vpop.permute.xlu0 %749
        %752 = vset.pattern.permute.xlu0 3
        %753 = vperm.xlu0 %752, %v652
        %v754 = vpop.permute.xlu0 %753
        %756 = vset.pattern.permute.xlu0 3
        %757 = vperm.xlu0 %756, %v653
        %v758 = vpop.permute.xlu0 %757
        %v760 = vperm.slane %v666, 3
        %v761 = vmul.f32 %v746, %v760
        %v762 = vmul.f32 %v750, %v760
        %v763 = vmul.f32 %v754, %v760
        %v764 = vmul.f32 %v758, %v760
        %v765 = vadd.f32 %v740, %v761
        %v766 = vadd.f32 %v741, %v762
        %v767 = vadd.f32 %v742, %v763
        %v768 = vadd.f32 %v743, %v764
        %v770 = vperm.slane %v667, 0
        %v772 = vmul.f32 %v765, %v770
        %v773 = vmul.f32 %v766, %v770
        %v774 = vmul.f32 %v767, %v770
        %v775 = vmul.f32 %v768, %v770
        %v777 = vperm.slane %v668, 0
        %v779 = vadd.f32 %v772, %v777
        %v780 = vadd.f32 %v773, %v777
        %v781 = vadd.f32 %v774, %v777
        %v782 = vadd.f32 %v775, %v777
        %v783 = vmax.f32 %v779, 0.0
        %v784 = vmax.f32 %v780, 0.0
        %v785 = vmax.f32 %v781, 0.0
        %v786 = vmax.f32 %v782, 0.0
        %v787 = vpack.c.bf16 %v783, %v783
        %v788 = vpack.c.bf16 %v784, %v784
        %v789 = vpack.c.bf16 %v785, %v785
        %v790 = vpack.c.bf16 %v786, %v786
        %791 = vst [vmem:[#allocation2] sm:$0xf] %v787
        %792 = vst [vmem:[#allocation2 + $0x4] sm:$0xf] %v788
        %793 = vst [vmem:[#allocation2 + $0x8] sm:$0xf] %v789
        %794 = vst [vmem:[#allocation2 + $0xc] sm:$0xf] %v790
        %795 = vset.pattern.permute.xlu0 4
        %796 = vperm.xlu0 %795, %v650
        %v797 = vpop.permute.xlu0 %796
        %799 = vset.pattern.permute.xlu0 4
        %800 = vperm.xlu0 %799, %v651
        %v801 = vpop.permute.xlu0 %800
        %803 = vset.pattern.permute.xlu0 4
        %804 = vperm.xlu0 %803, %v652
        %v805 = vpop.permute.xlu0 %804
        %807 = vset.pattern.permute.xlu0 4
        %808 = vperm.xlu0 %807, %v653
        %v809 = vpop.permute.xlu0 %808
        %v811 = vmul.f32 %v797, %v689
        %v812 = vmul.f32 %v801, %v689
        %v813 = vmul.f32 %v805, %v689
        %v814 = vmul.f32 %v809, %v689
        %815 = vset.pattern.permute.xlu0 5
        %816 = vperm.xlu0 %815, %v650
        %v817 = vpop.permute.xlu0 %816
        %819 = vset.pattern.permute.xlu0 5
        %820 = vperm.xlu0 %819, %v651
        %v821 = vpop.permute.xlu0 %820
        %823 = vset.pattern.permute.xlu0 5
        %824 = vperm.xlu0 %823, %v652
        %v825 = vpop.permute.xlu0 %824
        %827 = vset.pattern.permute.xlu0 5
        %828 = vperm.xlu0 %827, %v653
        %v829 = vpop.permute.xlu0 %828
        %v831 = vmul.f32 %v817, %v710
        %v832 = vmul.f32 %v821, %v710
        %v833 = vmul.f32 %v825, %v710
        %v834 = vmul.f32 %v829, %v710
        %v835 = vadd.f32 %v811, %v831
        %v836 = vadd.f32 %v812, %v832
        %v837 = vadd.f32 %v813, %v833
        %v838 = vadd.f32 %v814, %v834
        %839 = vset.pattern.permute.xlu0 6
        %840 = vperm.xlu0 %839, %v650
        %v841 = vpop.permute.xlu0 %840
        %843 = vset.pattern.permute.xlu0 6
        %844 = vperm.xlu0 %843, %v651
        %v845 = vpop.permute.xlu0 %844
        %847 = vset.pattern.permute.xlu0 6
        %848 = vperm.xlu0 %847, %v652
        %v849 = vpop.permute.xlu0 %848
        %851 = vset.pattern.permute.xlu0 6
        %852 = vperm.xlu0 %851, %v653
        %v853 = vpop.permute.xlu0 %852
        %v855 = vmul.f32 %v841, %v735
        %v856 = vmul.f32 %v845, %v735
        %v857 = vmul.f32 %v849, %v735
        %v858 = vmul.f32 %v853, %v735
        %v859 = vadd.f32 %v835, %v855
        %v860 = vadd.f32 %v836, %v856
        %v861 = vadd.f32 %v837, %v857
        %v862 = vadd.f32 %v838, %v858
        %863 = vset.pattern.permute.xlu0 7
        %864 = vperm.xlu0 %863, %v650
        %v865 = vpop.permute.xlu0 %864
        %867 = vset.pattern.permute.xlu0 7
        %868 = vperm.xlu0 %867, %v651
        %v869 = vpop.permute.xlu0 %868
        %871 = vset.pattern.permute.xlu0 7
        %872 = vperm.xlu0 %871, %v652
        %v873 = vpop.permute.xlu0 %872
        %875 = vset.pattern.permute.xlu0 7
        %876 = vperm.xlu0 %875, %v653
        %v877 = vpop.permute.xlu0 %876
        %v879 = vmul.f32 %v865, %v760
        %v880 = vmul.f32 %v869, %v760
        %v881 = vmul.f32 %v873, %v760
        %v882 = vmul.f32 %v877, %v760
        %v883 = vadd.f32 %v859, %v879
        %v884 = vadd.f32 %v860, %v880
        %v885 = vadd.f32 %v861, %v881
        %v886 = vadd.f32 %v862, %v882
        %v887 = vmul.f32 %v883, %v770
        %v888 = vmul.f32 %v884, %v770
        %v889 = vmul.f32 %v885, %v770
        %v890 = vmul.f32 %v886, %v770
        %v891 = vadd.f32 %v887, %v777
        %v892 = vadd.f32 %v888, %v777
        %v893 = vadd.f32 %v889, %v777
        %v894 = vadd.f32 %v890, %v777
        %v895 = vmax.f32 %v891, 0.0
        %v896 = vmax.f32 %v892, 0.0
        %v897 = vmax.f32 %v893, 0.0
        %v898 = vmax.f32 %v894, 0.0
        %v899 = vpack.c.bf16 %v895, %v895
        %v900 = vpack.c.bf16 %v896, %v896
        %v901 = vpack.c.bf16 %v897, %v897
        %v902 = vpack.c.bf16 %v898, %v898
        %s903 = scalar_lea.vmem [#allocation2], 16
        %904 = vst [vmem:[%s903] sm:$0xf] %v899
        %905 = vst [vmem:[%s903 + $0x4] sm:$0xf] %v900
        %906 = vst [vmem:[%s903 + $0x8] sm:$0xf] %v901
        %907 = vst [vmem:[%s903 + $0xc] sm:$0xf] %v902
        %v908 = vld [vmem:[#allocation2] sm:$0x1]
        %v909 = vld [vmem:[#allocation2 + $0x10] sm:$0x1]
        %v910 = vld [vmem:[%s438] sm:$0xff]
        %v911 = vld [vmem:[%s438 + $0x8] sm:$0xf]
        %v912 = vld [vmem:[%s438 + $0xc] sm:$0xff]
        %v913 = vld [vmem:[%s438 + $0x14] sm:$0xf]
        %v914 = vld [vmem:[%s438 + $0x18] sm:$0xff]
        %v915 = vld [vmem:[%s438 + $0x20] sm:$0xf]
        %v916 = vld [vmem:[%s438 + $0x24] sm:$0xff]
        %v917 = vld [vmem:[%s438 + $0x2c] sm:$0xf]
        %v918 = vld [vmem:[%s438 + $0x30] sm:$0xff]
        %v919 = vld [vmem:[%s438 + $0x38] sm:$0xf]
        %v920 = vld [vmem:[%s438 + $0x3c] sm:$0xff]
        %v921 = vld [vmem:[%s438 + $0x44] sm:$0xf]
        %v922 = vld [vmem:[%s438 + $0x48] sm:$0xff]
        %v923 = vld [vmem:[%s438 + $0x50] sm:$0xf]
        %v924 = vld [vmem:[%s438 + $0x54] sm:$0xff]
        %v925 = vld [vmem:[%s438 + $0x5c] sm:$0xf]
        %v926 = vld [vmem:[%s438 + $0x60] sm:$0xff]
        %v927 = vld [vmem:[%s438 + $0x68] sm:$0xf]
        %v928 = vld [vmem:[%s438 + $0x6c] sm:$0xff]
        %v929 = vld [vmem:[%s438 + $0x74] sm:$0xf]
        %v930 = vld [vmem:[%s438 + $0x78] sm:$0xff]
        %v931 = vld [vmem:[%s438 + $0x80] sm:$0xf]
        %v932 = vld [vmem:[%s438 + $0x84] sm:$0xff]
        %v933 = vld [vmem:[%s438 + $0x8c] sm:$0xf]
        %v934 = vld [vmem:[%s438 + $0x90] sm:$0xff]
        %v935 = vld [vmem:[%s438 + $0x98] sm:$0xf]
        %v936 = vld [vmem:[%s438 + $0x9c] sm:$0xff]
        %v937 = vld [vmem:[%s438 + $0xa4] sm:$0xf]
        %v938 = vld [vmem:[%s438 + $0xa8] sm:$0xff]
        %v939 = vld [vmem:[%s438 + $0xb0] sm:$0xf]
        %v940 = vld [vmem:[%s438 + $0xb4] sm:$0xff]
        %v941 = vld [vmem:[%s438 + $0xbc] sm:$0xf]
        %s942 = scalar_lea.vmem %s438, 192 [#allocation10]
        %v943 = vld [vmem:[%s942] sm:$0xff]
        %v944 = vld [vmem:[%s942 + $0x8] sm:$0xf]
        %v945 = vld [vmem:[%s942 + $0xc] sm:$0xff]
        %v946 = vld [vmem:[%s942 + $0x14] sm:$0xf]
        %v947 = vld [vmem:[%s942 + $0x18] sm:$0xff]
        %v948 = vld [vmem:[%s942 + $0x20] sm:$0xf]
        %v949 = vld [vmem:[%s942 + $0x24] sm:$0xff]
        %v950 = vld [vmem:[%s942 + $0x2c] sm:$0xf]
        %v951 = vld [vmem:[%s942 + $0x30] sm:$0xff]
        %v952 = vld [vmem:[%s942 + $0x38] sm:$0xf]
        %v953 = vld [vmem:[%s942 + $0x3c] sm:$0xff]
        %v954 = vld [vmem:[%s942 + $0x44] sm:$0xf]
        %v955 = vld [vmem:[%s942 + $0x48] sm:$0xff]
        %v956 = vld [vmem:[%s942 + $0x50] sm:$0xf]
        %v957 = vld [vmem:[%s942 + $0x54] sm:$0xff]
        %v958 = vld [vmem:[%s942 + $0x5c] sm:$0xf]
        %v959 = vld [vmem:[%s942 + $0x60] sm:$0xff]
        %v960 = vld [vmem:[%s942 + $0x68] sm:$0xf]
        %v961 = vld [vmem:[%s942 + $0x6c] sm:$0xff]
        %v962 = vld [vmem:[%s942 + $0x74] sm:$0xf]
        %v963 = vld [vmem:[%s942 + $0x78] sm:$0xff]
        %v964 = vld [vmem:[%s942 + $0x80] sm:$0xf]
        %v965 = vld [vmem:[%s942 + $0x84] sm:$0xff]
        %v966 = vld [vmem:[%s942 + $0x8c] sm:$0xf]
        %v967 = vld [vmem:[%s942 + $0x90] sm:$0xff]
        %v968 = vld [vmem:[%s942 + $0x98] sm:$0xf]
        %v969 = vld [vmem:[%s942 + $0x9c] sm:$0xff]
        %v970 = vld [vmem:[%s942 + $0xa4] sm:$0xf]
        %v971 = vld [vmem:[%s942 + $0xa8] sm:$0xff]
        %v972 = vld [vmem:[%s942 + $0xb0] sm:$0xf]
        %v973 = vld [vmem:[%s942 + $0xb4] sm:$0xff]
        %v974 = vld [vmem:[%s942 + $0xbc] sm:$0xf]
        %v977 = vunpack.c.l.b16 %v908
        %v978 = vunpack.c.l.b16 %v909
        %v979 = vpack.c.b16 %v977, %v977
        %v980 = vpack.c.b16 %v978, %v978
        %v981 = vunpack.c.l.b16 %v979
        %v982 = vunpack.c.l.b16 %v980
        %v983 = vrot.slane %v981, 1
        %vm984 = vcmask 1041409
        %v985 = vsel %vm984, %v982, %v983
        %v986 = vpack.c.b16 %v985, %v985
        %v1020 = vunpack.c.l.b16 %v943
        %v1021 = vunpack.c.h.b16 %v943
        %v1022 = vunpack.c.l.b16 %v944
        %v1023 = vunpack.c.l.b16 %v945
        %v1024 = vunpack.c.h.b16 %v945
        %v1025 = vunpack.c.l.b16 %v946
        %v1026 = vunpack.c.l.b16 %v947
        %v1027 = vunpack.c.h.b16 %v947
        %v1028 = vunpack.c.l.b16 %v948
        %v1029 = vunpack.c.l.b16 %v949
        %v1030 = vunpack.c.h.b16 %v949
        %v1031 = vunpack.c.l.b16 %v950
        %v1032 = vunpack.c.l.b16 %v951
        %v1033 = vunpack.c.h.b16 %v951
        %v1034 = vunpack.c.l.b16 %v952
        %v1035 = vunpack.c.l.b16 %v953
        %v1036 = vunpack.c.h.b16 %v953
        %v1037 = vunpack.c.l.b16 %v954
        %v1038 = vunpack.c.l.b16 %v955
        %v1039 = vunpack.c.h.b16 %v955
        %v1040 = vunpack.c.l.b16 %v956
        %v1041 = vunpack.c.l.b16 %v957
        %v1042 = vunpack.c.h.b16 %v957
        %v1043 = vunpack.c.l.b16 %v958
        %v1044 = vunpack.c.l.b16 %v959
        %v1045 = vunpack.c.h.b16 %v959
        %v1046 = vunpack.c.l.b16 %v960
        %v1047 = vunpack.c.l.b16 %v961
        %v1048 = vunpack.c.h.b16 %v961
        %v1049 = vunpack.c.l.b16 %v962
        %v1050 = vunpack.c.l.b16 %v963
        %v1051 = vunpack.c.h.b16 %v963
        %v1052 = vunpack.c.l.b16 %v964
        %v1053 = vunpack.c.l.b16 %v965
        %v1054 = vunpack.c.h.b16 %v965
        %v1055 = vunpack.c.l.b16 %v966
        %v1056 = vunpack.c.l.b16 %v967
        %v1057 = vunpack.c.h.b16 %v967
        %v1058 = vunpack.c.l.b16 %v968
        %v1059 = vunpack.c.l.b16 %v969
        %v1060 = vunpack.c.h.b16 %v969
        %v1061 = vunpack.c.l.b16 %v970
        %v1062 = vunpack.c.l.b16 %v971
        %v1063 = vunpack.c.h.b16 %v971
        %v1064 = vunpack.c.l.b16 %v972
        %v1065 = vunpack.c.l.b16 %v973
        %v1066 = vunpack.c.h.b16 %v973
        %v1067 = vunpack.c.l.b16 %v974
        %v1068 = vpack.c.b16 %v1023, %v1020
        %v1069 = vpack.c.b16 %v1024, %v1021
        %v1070 = vpack.c.b16 %v1025, %v1022
        %v1071 = vpack.c.b16 %v1029, %v1026
        %v1072 = vpack.c.b16 %v1030, %v1027
        %v1073 = vpack.c.b16 %v1031, %v1028
        %v1074 = vpack.c.b16 %v1035, %v1032
        %v1075 = vpack.c.b16 %v1036, %v1033
        %v1076 = vpack.c.b16 %v1037, %v1034
        %v1077 = vpack.c.b16 %v1041, %v1038
        %v1078 = vpack.c.b16 %v1042, %v1039
        %v1079 = vpack.c.b16 %v1043, %v1040
        %v1080 = vpack.c.b16 %v1047, %v1044
        %v1081 = vpack.c.b16 %v1048, %v1045
        %v1082 = vpack.c.b16 %v1049, %v1046
        %v1083 = vpack.c.b16 %v1053, %v1050
        %v1084 = vpack.c.b16 %v1054, %v1051
        %v1085 = vpack.c.b16 %v1055, %v1052
        %v1086 = vpack.c.b16 %v1059, %v1056
        %v1087 = vpack.c.b16 %v1060, %v1057
        %v1088 = vpack.c.b16 %v1061, %v1058
        %v1089 = vpack.c.b16 %v1065, %v1062
        %v1090 = vpack.c.b16 %v1066, %v1063
        %v1091 = vpack.c.b16 %v1067, %v1064
        %1116 = vmatpush.bf16.msra.mxu0 %v1089
        %1117 = vmatpush.bf16.msra.mxu0 %v1086
        %1118 = vmatpush.bf16.msra.mxu0 %v1083
        %1119 = vmatpush.bf16.msra.mxu0 %v1080
        %1120 = vmatpush.bf16.msra.mxu0 %v1077
        %1121 = vmatpush.bf16.msra.mxu0 %v1074
        %1122 = vmatpush.bf16.msra.mxu0 %v1071
        %1123 = vmatpush.bf16.msra.mxu0 %v1068
        %1124 = vmatmul.bf16.gmra.mxu0 %v986
        %v1125 = vpop.f32.mrf.mxu0
        %v1126 = vadd.f32 0.0, %v1125
        %v1127 = vpop.f32.mrf.mxu0
        %1128 = vdwg.mxu0
        %1129 = vmatpush.bf16.msra.mxu0 %v1090
        %1130 = vmatpush.bf16.msra.mxu0 %v1087
        %1131 = vmatpush.bf16.msra.mxu0 %v1084
        %1132 = vmatpush.bf16.msra.mxu0 %v1081
        %1133 = vmatpush.bf16.msra.mxu0 %v1078
        %1134 = vmatpush.bf16.msra.mxu0 %v1075
        %1135 = vmatpush.bf16.msra.mxu0 %v1072
        %1136 = vmatpush.bf16.msra.mxu0 %v1069
        %1137 = vmatmul.bf16.gmra.mxu0 %v986
        %v1138 = vpop.f32.mrf.mxu0
        %v1139 = vadd.f32 0.0, %v1138
        %v1140 = vpop.f32.mrf.mxu0
        %1141 = vdwg.mxu0
        %1142 = vmatpush.bf16.msra.mxu0 %v1091
        %1143 = vmatpush.bf16.msra.mxu0 %v1088
        %1144 = vmatpush.bf16.msra.mxu0 %v1085
        %1145 = vmatpush.bf16.msra.mxu0 %v1082
        %1146 = vmatpush.bf16.msra.mxu0 %v1079
        %1147 = vmatpush.bf16.msra.mxu0 %v1076
        %1148 = vmatpush.bf16.msra.mxu0 %v1073
        %1149 = vmatpush.bf16.msra.mxu0 %v1070
        %1150 = vmatmul.bf16.gmra.mxu0 %v986
        %v1151 = vpop.f32.mrf.mxu0
        %v1152 = vadd.f32 0.0, %v1151
        %v1153 = vpop.f32.mrf.mxu0
        %1154 = vdwg.mxu0
        %v1155 = vrot.slane %v982, 7
        %v1156 = vsel %vm984, %v1155, %v981
        %v1157 = vpack.c.b16 %v1156, %v1156
        %v1191 = vunpack.c.l.b16 %v910
        %v1192 = vunpack.c.h.b16 %v910
        %v1193 = vunpack.c.l.b16 %v911
        %v1194 = vunpack.c.l.b16 %v912
        %v1195 = vunpack.c.h.b16 %v912
        %v1196 = vunpack.c.l.b16 %v913
        %v1197 = vunpack.c.l.b16 %v914
        %v1198 = vunpack.c.h.b16 %v914
        %v1199 = vunpack.c.l.b16 %v915
        %v1200 = vunpack.c.l.b16 %v916
        %v1201 = vunpack.c.h.b16 %v916
        %v1202 = vunpack.c.l.b16 %v917
        %v1203 = vunpack.c.l.b16 %v918
        %v1204 = vunpack.c.h.b16 %v918
        %v1205 = vunpack.c.l.b16 %v919
        %v1206 = vunpack.c.l.b16 %v920
        %v1207 = vunpack.c.h.b16 %v920
        %v1208 = vunpack.c.l.b16 %v921
        %v1209 = vunpack.c.l.b16 %v922
        %v1210 = vunpack.c.h.b16 %v922
        %v1211 = vunpack.c.l.b16 %v923
        %v1212 = vunpack.c.l.b16 %v924
        %v1213 = vunpack.c.h.b16 %v924
        %v1214 = vunpack.c.l.b16 %v925
        %v1215 = vunpack.c.l.b16 %v926
        %v1216 = vunpack.c.h.b16 %v926
        %v1217 = vunpack.c.l.b16 %v927
        %v1218 = vunpack.c.l.b16 %v928
        %v1219 = vunpack.c.h.b16 %v928
        %v1220 = vunpack.c.l.b16 %v929
        %v1221 = vunpack.c.l.b16 %v930
        %v1222 = vunpack.c.h.b16 %v930
        %v1223 = vunpack.c.l.b16 %v931
        %v1224 = vunpack.c.l.b16 %v932
        %v1225 = vunpack.c.h.b16 %v932
        %v1226 = vunpack.c.l.b16 %v933
        %v1227 = vunpack.c.l.b16 %v934
        %v1228 = vunpack.c.h.b16 %v934
        %v1229 = vunpack.c.l.b16 %v935
        %v1230 = vunpack.c.l.b16 %v936
        %v1231 = vunpack.c.h.b16 %v936
        %v1232 = vunpack.c.l.b16 %v937
        %v1233 = vunpack.c.l.b16 %v938
        %v1234 = vunpack.c.h.b16 %v938
        %v1235 = vunpack.c.l.b16 %v939
        %v1236 = vunpack.c.l.b16 %v940
        %v1237 = vunpack.c.h.b16 %v940
        %v1238 = vunpack.c.l.b16 %v941
        %v1239 = vpack.c.b16 %v1194, %v1191
        %v1240 = vpack.c.b16 %v1195, %v1192
        %v1241 = vpack.c.b16 %v1196, %v1193
        %v1242 = vpack.c.b16 %v1200, %v1197
        %v1243 = vpack.c.b16 %v1201, %v1198
        %v1244 = vpack.c.b16 %v1202, %v1199
        %v1245 = vpack.c.b16 %v1206, %v1203
        %v1246 = vpack.c.b16 %v1207, %v1204
        %v1247 = vpack.c.b16 %v1208, %v1205
        %v1248 = vpack.c.b16 %v1212, %v1209
        %v1249 = vpack.c.b16 %v1213, %v1210
        %v1250 = vpack.c.b16 %v1214, %v1211
        %v1251 = vpack.c.b16 %v1218, %v1215
        %v1252 = vpack.c.b16 %v1219, %v1216
        %v1253 = vpack.c.b16 %v1220, %v1217
        %v1254 = vpack.c.b16 %v1224, %v1221
        %v1255 = vpack.c.b16 %v1225, %v1222
        %v1256 = vpack.c.b16 %v1226, %v1223
        %v1257 = vpack.c.b16 %v1230, %v1227
        %v1258 = vpack.c.b16 %v1231, %v1228
        %v1259 = vpack.c.b16 %v1232, %v1229
        %v1260 = vpack.c.b16 %v1236, %v1233
        %v1261 = vpack.c.b16 %v1237, %v1234
        %v1262 = vpack.c.b16 %v1238, %v1235
        %1287 = vmatpush.bf16.msra.mxu0 %v1260
        %1288 = vmatpush.bf16.msra.mxu0 %v1257
        %1289 = vmatpush.bf16.msra.mxu0 %v1254
        %1290 = vmatpush.bf16.msra.mxu0 %v1251
        %1291 = vmatpush.bf16.msra.mxu0 %v1248
        %1292 = vmatpush.bf16.msra.mxu0 %v1245
        %1293 = vmatpush.bf16.msra.mxu0 %v1242
        %1294 = vmatpush.bf16.msra.mxu0 %v1239
        %1295 = vmatmul.bf16.gmra.mxu0 %v1157
        %v1296 = vpop.f32.mrf.mxu0
        %v1297 = vadd.f32 %v1126, %v1296
        %v1298 = vpop.f32.mrf.mxu0
        %1299 = vdwg.mxu0
        %1300 = vmatpush.bf16.msra.mxu0 %v1261
        %1301 = vmatpush.bf16.msra.mxu0 %v1258
        %1302 = vmatpush.bf16.msra.mxu0 %v1255
        %1303 = vmatpush.bf16.msra.mxu0 %v1252
        %1304 = vmatpush.bf16.msra.mxu0 %v1249
        %1305 = vmatpush.bf16.msra.mxu0 %v1246
        %1306 = vmatpush.bf16.msra.mxu0 %v1243
        %1307 = vmatpush.bf16.msra.mxu0 %v1240
        %1308 = vmatmul.bf16.gmra.mxu0 %v1157
        %v1309 = vpop.f32.mrf.mxu0
        %v1310 = vadd.f32 %v1139, %v1309
        %v1311 = vpop.f32.mrf.mxu0
        %1312 = vdwg.mxu0
        %1313 = vmatpush.bf16.msra.mxu0 %v1262
        %1314 = vmatpush.bf16.msra.mxu0 %v1259
        %1315 = vmatpush.bf16.msra.mxu0 %v1256
        %1316 = vmatpush.bf16.msra.mxu0 %v1253
        %1317 = vmatpush.bf16.msra.mxu0 %v1250
        %1318 = vmatpush.bf16.msra.mxu0 %v1247
        %1319 = vmatpush.bf16.msra.mxu0 %v1244
        %1320 = vmatpush.bf16.msra.mxu0 %v1241
        %1321 = vmatmul.bf16.gmra.mxu0 %v1157
        %v1322 = vpop.f32.mrf.mxu0
        %v1323 = vadd.f32 %v1152, %v1322
        %v1324 = vpop.f32.mrf.mxu0
        %1325 = vdwg.mxu0
        %v1326 = vld [vmem:[#allocation2] sm:$0x2]
        %v1327 = vld [vmem:[#allocation2 + $0x10] sm:$0x2]
        %s1328 = scalar_lea.vmem %s438, 384 [#allocation10]
        %v1329 = vld [vmem:[%s1328] sm:$0xff]
        %v1330 = vld [vmem:[%s1328 + $0x8] sm:$0xf]
        %v1331 = vld [vmem:[%s1328 + $0xc] sm:$0xff]
        %v1332 = vld [vmem:[%s1328 + $0x14] sm:$0xf]
        %v1333 = vld [vmem:[%s1328 + $0x18] sm:$0xff]
        %v1334 = vld [vmem:[%s1328 + $0x20] sm:$0xf]
        %v1335 = vld [vmem:[%s1328 + $0x24] sm:$0xff]
        %v1336 = vld [vmem:[%s1328 + $0x2c] sm:$0xf]
        %v1337 = vld [vmem:[%s1328 + $0x30] sm:$0xff]
        %v1338 = vld [vmem:[%s1328 + $0x38] sm:$0xf]
        %v1339 = vld [vmem:[%s1328 + $0x3c] sm:$0xff]
        %v1340 = vld [vmem:[%s1328 + $0x44] sm:$0xf]
        %v1341 = vld [vmem:[%s1328 + $0x48] sm:$0xff]
        %v1342 = vld [vmem:[%s1328 + $0x50] sm:$0xf]
        %v1343 = vld [vmem:[%s1328 + $0x54] sm:$0xff]
        %v1344 = vld [vmem:[%s1328 + $0x5c] sm:$0xf]
        %v1345 = vld [vmem:[%s1328 + $0x60] sm:$0xff]
        %v1346 = vld [vmem:[%s1328 + $0x68] sm:$0xf]
        %v1347 = vld [vmem:[%s1328 + $0x6c] sm:$0xff]
        %v1348 = vld [vmem:[%s1328 + $0x74] sm:$0xf]
        %v1349 = vld [vmem:[%s1328 + $0x78] sm:$0xff]
        %v1350 = vld [vmem:[%s1328 + $0x80] sm:$0xf]
        %v1351 = vld [vmem:[%s1328 + $0x84] sm:$0xff]
        %v1352 = vld [vmem:[%s1328 + $0x8c] sm:$0xf]
        %v1353 = vld [vmem:[%s1328 + $0x90] sm:$0xff]
        %v1354 = vld [vmem:[%s1328 + $0x98] sm:$0xf]
        %v1355 = vld [vmem:[%s1328 + $0x9c] sm:$0xff]
        %v1356 = vld [vmem:[%s1328 + $0xa4] sm:$0xf]
        %v1357 = vld [vmem:[%s1328 + $0xa8] sm:$0xff]
        %v1358 = vld [vmem:[%s1328 + $0xb0] sm:$0xf]
        %v1359 = vld [vmem:[%s1328 + $0xb4] sm:$0xff]
        %v1360 = vld [vmem:[%s1328 + $0xbc] sm:$0xf]
        %v1363 = vunpack.c.l.b16 %v1326
        %v1364 = vunpack.c.l.b16 %v1327
        %v1365 = vpack.c.b16 %v1363, %v1363
        %v1366 = vpack.c.b16 %v1364, %v1364
        %v1367 = vunpack.c.l.b16 %v1365
        %v1368 = vunpack.c.l.b16 %v1366
        %v1369 = vrot.slane %v1367, 2
        %v1370 = vrot.slane %v1368, 1
        %v1371 = vsel %vm984, %v1370, %v1369
        %v1372 = vpack.c.b16 %v1371, %v1371
        %v1406 = vunpack.c.l.b16 %v1329
        %v1407 = vunpack.c.h.b16 %v1329
        %v1408 = vunpack.c.l.b16 %v1330
        %v1409 = vunpack.c.l.b16 %v1331
        %v1410 = vunpack.c.h.b16 %v1331
        %v1411 = vunpack.c.l.b16 %v1332
        %v1412 = vunpack.c.l.b16 %v1333
        %v1413 = vunpack.c.h.b16 %v1333
        %v1414 = vunpack.c.l.b16 %v1334
        %v1415 = vunpack.c.l.b16 %v1335
        %v1416 = vunpack.c.h.b16 %v1335
        %v1417 = vunpack.c.l.b16 %v1336
        %v1418 = vunpack.c.l.b16 %v1337
        %v1419 = vunpack.c.h.b16 %v1337
        %v1420 = vunpack.c.l.b16 %v1338
        %v1421 = vunpack.c.l.b16 %v1339
        %v1422 = vunpack.c.h.b16 %v1339
        %v1423 = vunpack.c.l.b16 %v1340
        %v1424 = vunpack.c.l.b16 %v1341
        %v1425 = vunpack.c.h.b16 %v1341
        %v1426 = vunpack.c.l.b16 %v1342
        %v1427 = vunpack.c.l.b16 %v1343
        %v1428 = vunpack.c.h.b16 %v1343
        %v1429 = vunpack.c.l.b16 %v1344
        %v1430 = vunpack.c.l.b16 %v1345
        %v1431 = vunpack.c.h.b16 %v1345
        %v1432 = vunpack.c.l.b16 %v1346
        %v1433 = vunpack.c.l.b16 %v1347
        %v1434 = vunpack.c.h.b16 %v1347
        %v1435 = vunpack.c.l.b16 %v1348
        %v1436 = vunpack.c.l.b16 %v1349
        %v1437 = vunpack.c.h.b16 %v1349
        %v1438 = vunpack.c.l.b16 %v1350
        %v1439 = vunpack.c.l.b16 %v1351
        %v1440 = vunpack.c.h.b16 %v1351
        %v1441 = vunpack.c.l.b16 %v1352
        %v1442 = vunpack.c.l.b16 %v1353
        %v1443 = vunpack.c.h.b16 %v1353
        %v1444 = vunpack.c.l.b16 %v1354
        %v1445 = vunpack.c.l.b16 %v1355
        %v1446 = vunpack.c.h.b16 %v1355
        %v1447 = vunpack.c.l.b16 %v1356
        %v1448 = vunpack.c.l.b16 %v1357
        %v1449 = vunpack.c.h.b16 %v1357
        %v1450 = vunpack.c.l.b16 %v1358
        %v1451 = vunpack.c.l.b16 %v1359
        %v1452 = vunpack.c.h.b16 %v1359
        %v1453 = vunpack.c.l.b16 %v1360
        %v1454 = vpack.c.b16 %v1409, %v1406
        %v1455 = vpack.c.b16 %v1410, %v1407
        %v1456 = vpack.c.b16 %v1411, %v1408
        %v1457 = vpack.c.b16 %v1415, %v1412
        %v1458 = vpack.c.b16 %v1416, %v1413
        %v1459 = vpack.c.b16 %v1417, %v1414
        %v1460 = vpack.c.b16 %v1421, %v1418
        %v1461 = vpack.c.b16 %v1422, %v1419
        %v1462 = vpack.c.b16 %v1423, %v1420
        %v1463 = vpack.c.b16 %v1427, %v1424
        %v1464 = vpack.c.b16 %v1428, %v1425
        %v1465 = vpack.c.b16 %v1429, %v1426
        %v1466 = vpack.c.b16 %v1433, %v1430
        %v1467 = vpack.c.b16 %v1434, %v1431
        %v1468 = vpack.c.b16 %v1435, %v1432
        %v1469 = vpack.c.b16 %v1439, %v1436
        %v1470 = vpack.c.b16 %v1440, %v1437
        %v1471 = vpack.c.b16 %v1441, %v1438
        %v1472 = vpack.c.b16 %v1445, %v1442
        %v1473 = vpack.c.b16 %v1446, %v1443
        %v1474 = vpack.c.b16 %v1447, %v1444
        %v1475 = vpack.c.b16 %v1451, %v1448
        %v1476 = vpack.c.b16 %v1452, %v1449
        %v1477 = vpack.c.b16 %v1453, %v1450
        %1502 = vmatpush.bf16.msra.mxu0 %v1475
        %1503 = vmatpush.bf16.msra.mxu0 %v1472
        %1504 = vmatpush.bf16.msra.mxu0 %v1469
        %1505 = vmatpush.bf16.msra.mxu0 %v1466
        %1506 = vmatpush.bf16.msra.mxu0 %v1463
        %1507 = vmatpush.bf16.msra.mxu0 %v1460
        %1508 = vmatpush.bf16.msra.mxu0 %v1457
        %1509 = vmatpush.bf16.msra.mxu0 %v1454
        %1510 = vmatmul.bf16.gmra.mxu0 %v1372
        %v1511 = vpop.f32.mrf.mxu0
        %v1512 = vadd.f32 0.0, %v1511
        %v1513 = vpop.f32.mrf.mxu0
        %1514 = vdwg.mxu0
        %1515 = vmatpush.bf16.msra.mxu0 %v1476
        %1516 = vmatpush.bf16.msra.mxu0 %v1473
        %1517 = vmatpush.bf16.msra.mxu0 %v1470
        %1518 = vmatpush.bf16.msra.mxu0 %v1467
        %1519 = vmatpush.bf16.msra.mxu0 %v1464
        %1520 = vmatpush.bf16.msra.mxu0 %v1461
        %1521 = vmatpush.bf16.msra.mxu0 %v1458
        %1522 = vmatpush.bf16.msra.mxu0 %v1455
        %1523 = vmatmul.bf16.gmra.mxu0 %v1372
        %v1524 = vpop.f32.mrf.mxu0
        %v1525 = vadd.f32 0.0, %v1524
        %v1526 = vpop.f32.mrf.mxu0
        %1527 = vdwg.mxu0
        %1528 = vmatpush.bf16.msra.mxu0 %v1477
        %1529 = vmatpush.bf16.msra.mxu0 %v1474
        %1530 = vmatpush.bf16.msra.mxu0 %v1471
        %1531 = vmatpush.bf16.msra.mxu0 %v1468
        %1532 = vmatpush.bf16.msra.mxu0 %v1465
        %1533 = vmatpush.bf16.msra.mxu0 %v1462
        %1534 = vmatpush.bf16.msra.mxu0 %v1459
        %1535 = vmatpush.bf16.msra.mxu0 %v1456
        %1536 = vmatmul.bf16.gmra.mxu0 %v1372
        %v1537 = vpop.f32.mrf.mxu0
        %v1538 = vadd.f32 0.0, %v1537
        %v1539 = vpop.f32.mrf.mxu0
        %1540 = vdwg.mxu0
        %v1541 = vadd.f32 %v1297, %v1512
        %v1542 = vadd.f32 %v1310, %v1525
        %v1543 = vadd.f32 %v1323, %v1538
        %s1544 = scalar_lea.vmem %s438, 576 [#allocation10]
        %v1545 = vld [vmem:[%s1544] sm:$0xff]
        %v1546 = vld [vmem:[%s1544 + $0x8] sm:$0xf]
        %v1547 = vld [vmem:[%s1544 + $0xc] sm:$0xff]
        %v1548 = vld [vmem:[%s1544 + $0x14] sm:$0xf]
        %v1549 = vld [vmem:[%s1544 + $0x18] sm:$0xff]
        %v1550 = vld [vmem:[%s1544 + $0x20] sm:$0xf]
        %v1551 = vld [vmem:[%s1544 + $0x24] sm:$0xff]
        %v1552 = vld [vmem:[%s1544 + $0x2c] sm:$0xf]
        %v1553 = vld [vmem:[%s1544 + $0x30] sm:$0xff]
        %v1554 = vld [vmem:[%s1544 + $0x38] sm:$0xf]
        %v1555 = vld [vmem:[%s1544 + $0x3c] sm:$0xff]
        %v1556 = vld [vmem:[%s1544 + $0x44] sm:$0xf]
        %v1557 = vld [vmem:[%s1544 + $0x48] sm:$0xff]
        %v1558 = vld [vmem:[%s1544 + $0x50] sm:$0xf]
        %v1559 = vld [vmem:[%s1544 + $0x54] sm:$0xff]
        %v1560 = vld [vmem:[%s1544 + $0x5c] sm:$0xf]
        %v1561 = vld [vmem:[%s1544 + $0x60] sm:$0xff]
        %v1562 = vld [vmem:[%s1544 + $0x68] sm:$0xf]
        %v1563 = vld [vmem:[%s1544 + $0x6c] sm:$0xff]
        %v1564 = vld [vmem:[%s1544 + $0x74] sm:$0xf]
        %v1565 = vld [vmem:[%s1544 + $0x78] sm:$0xff]
        %v1566 = vld [vmem:[%s1544 + $0x80] sm:$0xf]
        %v1567 = vld [vmem:[%s1544 + $0x84] sm:$0xff]
        %v1568 = vld [vmem:[%s1544 + $0x8c] sm:$0xf]
        %v1569 = vld [vmem:[%s1544 + $0x90] sm:$0xff]
        %v1570 = vld [vmem:[%s1544 + $0x98] sm:$0xf]
        %v1571 = vld [vmem:[%s1544 + $0x9c] sm:$0xff]
        %v1572 = vld [vmem:[%s1544 + $0xa4] sm:$0xf]
        %v1573 = vld [vmem:[%s1544 + $0xa8] sm:$0xff]
        %v1574 = vld [vmem:[%s1544 + $0xb0] sm:$0xf]
        %v1575 = vld [vmem:[%s1544 + $0xb4] sm:$0xff]
        %v1576 = vld [vmem:[%s1544 + $0xbc] sm:$0xf]
        %v1577 = vrot.slane %v1367, 3
        %v1578 = vrot.slane %v1368, 2
        %v1579 = vsel %vm984, %v1578, %v1577
        %v1580 = vpack.c.b16 %v1579, %v1579
        %v1614 = vunpack.c.l.b16 %v1545
        %v1615 = vunpack.c.h.b16 %v1545
        %v1616 = vunpack.c.l.b16 %v1546
        %v1617 = vunpack.c.l.b16 %v1547
        %v1618 = vunpack.c.h.b16 %v1547
        %v1619 = vunpack.c.l.b16 %v1548
        %v1620 = vunpack.c.l.b16 %v1549
        %v1621 = vunpack.c.h.b16 %v1549
        %v1622 = vunpack.c.l.b16 %v1550
        %v1623 = vunpack.c.l.b16 %v1551
        %v1624 = vunpack.c.h.b16 %v1551
        %v1625 = vunpack.c.l.b16 %v1552
        %v1626 = vunpack.c.l.b16 %v1553
        %v1627 = vunpack.c.h.b16 %v1553
        %v1628 = vunpack.c.l.b16 %v1554
        %v1629 = vunpack.c.l.b16 %v1555
        %v1630 = vunpack.c.h.b16 %v1555
        %v1631 = vunpack.c.l.b16 %v1556
        %v1632 = vunpack.c.l.b16 %v1557
        %v1633 = vunpack.c.h.b16 %v1557
        %v1634 = vunpack.c.l.b16 %v1558
        %v1635 = vunpack.c.l.b16 %v1559
        %v1636 = vunpack.c.h.b16 %v1559
        %v1637 = vunpack.c.l.b16 %v1560
        %v1638 = vunpack.c.l.b16 %v1561
        %v1639 = vunpack.c.h.b16 %v1561
        %v1640 = vunpack.c.l.b16 %v1562
        %v1641 = vunpack.c.l.b16 %v1563
        %v1642 = vunpack.c.h.b16 %v1563
        %v1643 = vunpack.c.l.b16 %v1564
        %v1644 = vunpack.c.l.b16 %v1565
        %v1645 = vunpack.c.h.b16 %v1565
        %v1646 = vunpack.c.l.b16 %v1566
        %v1647 = vunpack.c.l.b16 %v1567
        %v1648 = vunpack.c.h.b16 %v1567
        %v1649 = vunpack.c.l.b16 %v1568
        %v1650 = vunpack.c.l.b16 %v1569
        %v1651 = vunpack.c.h.b16 %v1569
        %v1652 = vunpack.c.l.b16 %v1570
        %v1653 = vunpack.c.l.b16 %v1571
        %v1654 = vunpack.c.h.b16 %v1571
        %v1655 = vunpack.c.l.b16 %v1572
        %v1656 = vunpack.c.l.b16 %v1573
        %v1657 = vunpack.c.h.b16 %v1573
        %v1658 = vunpack.c.l.b16 %v1574
        %v1659 = vunpack.c.l.b16 %v1575
        %v1660 = vunpack.c.h.b16 %v1575
        %v1661 = vunpack.c.l.b16 %v1576
        %v1662 = vpack.c.b16 %v1617, %v1614
        %v1663 = vpack.c.b16 %v1618, %v1615
        %v1664 = vpack.c.b16 %v1619, %v1616
        %v1665 = vpack.c.b16 %v1623, %v1620
        %v1666 = vpack.c.b16 %v1624, %v1621
        %v1667 = vpack.c.b16 %v1625, %v1622
        %v1668 = vpack.c.b16 %v1629, %v1626
        %v1669 = vpack.c.b16 %v1630, %v1627
        %v1670 = vpack.c.b16 %v1631, %v1628
        %v1671 = vpack.c.b16 %v1635, %v1632
        %v1672 = vpack.c.b16 %v1636, %v1633
        %v1673 = vpack.c.b16 %v1637, %v1634
        %v1674 = vpack.c.b16 %v1641, %v1638
        %v1675 = vpack.c.b16 %v1642, %v1639
        %v1676 = vpack.c.b16 %v1643, %v1640
        %v1677 = vpack.c.b16 %v1647, %v1644
        %v1678 = vpack.c.b16 %v1648, %v1645
        %v1679 = vpack.c.b16 %v1649, %v1646
        %v1680 = vpack.c.b16 %v1653, %v1650
        %v1681 = vpack.c.b16 %v1654, %v1651
        %v1682 = vpack.c.b16 %v1655, %v1652
        %v1683 = vpack.c.b16 %v1659, %v1656
        %v1684 = vpack.c.b16 %v1660, %v1657
        %v1685 = vpack.c.b16 %v1661, %v1658
        %1710 = vmatpush.bf16.msra.mxu0 %v1683
        %1711 = vmatpush.bf16.msra.mxu0 %v1680
        %1712 = vmatpush.bf16.msra.mxu0 %v1677
        %1713 = vmatpush.bf16.msra.mxu0 %v1674
        %1714 = vmatpush.bf16.msra.mxu0 %v1671
        %1715 = vmatpush.bf16.msra.mxu0 %v1668
        %1716 = vmatpush.bf16.msra.mxu0 %v1665
        %1717 = vmatpush.bf16.msra.mxu0 %v1662
        %1718 = vmatmul.bf16.gmra.mxu0 %v1580
        %v1719 = vpop.f32.mrf.mxu0
        %v1720 = vadd.f32 0.0, %v1719
        %v1721 = vpop.f32.mrf.mxu0
        %1722 = vdwg.mxu0
        %1723 = vmatpush.bf16.msra.mxu0 %v1684
        %1724 = vmatpush.bf16.msra.mxu0 %v1681
        %1725 = vmatpush.bf16.msra.mxu0 %v1678
        %1726 = vmatpush.bf16.msra.mxu0 %v1675
        %1727 = vmatpush.bf16.msra.mxu0 %v1672
        %1728 = vmatpush.bf16.msra.mxu0 %v1669
        %1729 = vmatpush.bf16.msra.mxu0 %v1666
        %1730 = vmatpush.bf16.msra.mxu0 %v1663
        %1731 = vmatmul.bf16.gmra.mxu0 %v1580
        %v1732 = vpop.f32.mrf.mxu0
        %v1733 = vadd.f32 0.0, %v1732
        %v1734 = vpop.f32.mrf.mxu0
        %1735 = vdwg.mxu0
        %1736 = vmatpush.bf16.msra.mxu0 %v1685
        %1737 = vmatpush.bf16.msra.mxu0 %v1682
        %1738 = vmatpush.bf16.msra.mxu0 %v1679
        %1739 = vmatpush.bf16.msra.mxu0 %v1676
        %1740 = vmatpush.bf16.msra.mxu0 %v1673
        %1741 = vmatpush.bf16.msra.mxu0 %v1670
        %1742 = vmatpush.bf16.msra.mxu0 %v1667
        %1743 = vmatpush.bf16.msra.mxu0 %v1664
        %1744 = vmatmul.bf16.gmra.mxu0 %v1580
        %v1745 = vpop.f32.mrf.mxu0
        %v1746 = vadd.f32 0.0, %v1745
        %v1747 = vpop.f32.mrf.mxu0
        %1748 = vdwg.mxu0
        %v1749 = vadd.f32 %v1541, %v1720
        %v1750 = vadd.f32 %v1542, %v1733
        %v1751 = vadd.f32 %v1543, %v1746
        %v1752 = vld [vmem:[#allocation2] sm:$0x4]
        %v1753 = vld [vmem:[#allocation2 + $0x10] sm:$0x4]
        %s1754 = scalar_lea.vmem %s438, 768 [#allocation10]
        %v1755 = vld [vmem:[%s1754] sm:$0xff]
        %v1756 = vld [vmem:[%s1754 + $0x8] sm:$0xf]
        %v1757 = vld [vmem:[%s1754 + $0xc] sm:$0xff]
        %v1758 = vld [vmem:[%s1754 + $0x14] sm:$0xf]
        %v1759 = vld [vmem:[%s1754 + $0x18] sm:$0xff]
        %v1760 = vld [vmem:[%s1754 + $0x20] sm:$0xf]
        %v1761 = vld [vmem:[%s1754 + $0x24] sm:$0xff]
        %v1762 = vld [vmem:[%s1754 + $0x2c] sm:$0xf]
        %v1763 = vld [vmem:[%s1754 + $0x30] sm:$0xff]
        %v1764 = vld [vmem:[%s1754 + $0x38] sm:$0xf]
        %v1765 = vld [vmem:[%s1754 + $0x3c] sm:$0xff]
        %v1766 = vld [vmem:[%s1754 + $0x44] sm:$0xf]
        %v1767 = vld [vmem:[%s1754 + $0x48] sm:$0xff]
        %v1768 = vld [vmem:[%s1754 + $0x50] sm:$0xf]
        %v1769 = vld [vmem:[%s1754 + $0x54] sm:$0xff]
        %v1770 = vld [vmem:[%s1754 + $0x5c] sm:$0xf]
        %v1771 = vld [vmem:[%s1754 + $0x60] sm:$0xff]
        %v1772 = vld [vmem:[%s1754 + $0x68] sm:$0xf]
        %v1773 = vld [vmem:[%s1754 + $0x6c] sm:$0xff]
        %v1774 = vld [vmem:[%s1754 + $0x74] sm:$0xf]
        %v1775 = vld [vmem:[%s1754 + $0x78] sm:$0xff]
        %v1776 = vld [vmem:[%s1754 + $0x80] sm:$0xf]
        %v1777 = vld [vmem:[%s1754 + $0x84] sm:$0xff]
        %v1778 = vld [vmem:[%s1754 + $0x8c] sm:$0xf]
        %v1779 = vld [vmem:[%s1754 + $0x90] sm:$0xff]
        %v1780 = vld [vmem:[%s1754 + $0x98] sm:$0xf]
        %v1781 = vld [vmem:[%s1754 + $0x9c] sm:$0xff]
        %v1782 = vld [vmem:[%s1754 + $0xa4] sm:$0xf]
        %v1783 = vld [vmem:[%s1754 + $0xa8] sm:$0xff]
        %v1784 = vld [vmem:[%s1754 + $0xb0] sm:$0xf]
        %v1785 = vld [vmem:[%s1754 + $0xb4] sm:$0xff]
        %v1786 = vld [vmem:[%s1754 + $0xbc] sm:$0xf]
        %v1789 = vunpack.c.l.b16 %v1752
        %v1790 = vunpack.c.l.b16 %v1753
        %v1791 = vpack.c.b16 %v1789, %v1789
        %v1792 = vpack.c.b16 %v1790, %v1790
        %v1793 = vunpack.c.l.b16 %v1791
        %v1794 = vunpack.c.l.b16 %v1792
        %v1795 = vrot.slane %v1793, 4
        %v1796 = vrot.slane %v1794, 3
        %v1797 = vsel %vm984, %v1796, %v1795
        %v1798 = vpack.c.b16 %v1797, %v1797
        %v1832 = vunpack.c.l.b16 %v1755
        %v1833 = vunpack.c.h.b16 %v1755
        %v1834 = vunpack.c.l.b16 %v1756
        %v1835 = vunpack.c.l.b16 %v1757
        %v1836 = vunpack.c.h.b16 %v1757
        %v1837 = vunpack.c.l.b16 %v1758
        %v1838 = vunpack.c.l.b16 %v1759
        %v1839 = vunpack.c.h.b16 %v1759
        %v1840 = vunpack.c.l.b16 %v1760
        %v1841 = vunpack.c.l.b16 %v1761
        %v1842 = vunpack.c.h.b16 %v1761
        %v1843 = vunpack.c.l.b16 %v1762
        %v1844 = vunpack.c.l.b16 %v1763
        %v1845 = vunpack.c.h.b16 %v1763
        %v1846 = vunpack.c.l.b16 %v1764
        %v1847 = vunpack.c.l.b16 %v1765
        %v1848 = vunpack.c.h.b16 %v1765
        %v1849 = vunpack.c.l.b16 %v1766
        %v1850 = vunpack.c.l.b16 %v1767
        %v1851 = vunpack.c.h.b16 %v1767
        %v1852 = vunpack.c.l.b16 %v1768
        %v1853 = vunpack.c.l.b16 %v1769
        %v1854 = vunpack.c.h.b16 %v1769
        %v1855 = vunpack.c.l.b16 %v1770
        %v1856 = vunpack.c.l.b16 %v1771
        %v1857 = vunpack.c.h.b16 %v1771
        %v1858 = vunpack.c.l.b16 %v1772
        %v1859 = vunpack.c.l.b16 %v1773
        %v1860 = vunpack.c.h.b16 %v1773
        %v1861 = vunpack.c.l.b16 %v1774
        %v1862 = vunpack.c.l.b16 %v1775
        %v1863 = vunpack.c.h.b16 %v1775
        %v1864 = vunpack.c.l.b16 %v1776
        %v1865 = vunpack.c.l.b16 %v1777
        %v1866 = vunpack.c.h.b16 %v1777
        %v1867 = vunpack.c.l.b16 %v1778
        %v1868 = vunpack.c.l.b16 %v1779
        %v1869 = vunpack.c.h.b16 %v1779
        %v1870 = vunpack.c.l.b16 %v1780
        %v1871 = vunpack.c.l.b16 %v1781
        %v1872 = vunpack.c.h.b16 %v1781
        %v1873 = vunpack.c.l.b16 %v1782
        %v1874 = vunpack.c.l.b16 %v1783
        %v1875 = vunpack.c.h.b16 %v1783
        %v1876 = vunpack.c.l.b16 %v1784
        %v1877 = vunpack.c.l.b16 %v1785
        %v1878 = vunpack.c.h.b16 %v1785
        %v1879 = vunpack.c.l.b16 %v1786
        %v1880 = vpack.c.b16 %v1835, %v1832
        %v1881 = vpack.c.b16 %v1836, %v1833
        %v1882 = vpack.c.b16 %v1837, %v1834
        %v1883 = vpack.c.b16 %v1841, %v1838
        %v1884 = vpack.c.b16 %v1842, %v1839
        %v1885 = vpack.c.b16 %v1843, %v1840
        %v1886 = vpack.c.b16 %v1847, %v1844
        %v1887 = vpack.c.b16 %v1848, %v1845
        %v1888 = vpack.c.b16 %v1849, %v1846
        %v1889 = vpack.c.b16 %v1853, %v1850
        %v1890 = vpack.c.b16 %v1854, %v1851
        %v1891 = vpack.c.b16 %v1855, %v1852
        %v1892 = vpack.c.b16 %v1859, %v1856
        %v1893 = vpack.c.b16 %v1860, %v1857
        %v1894 = vpack.c.b16 %v1861, %v1858
        %v1895 = vpack.c.b16 %v1865, %v1862
        %v1896 = vpack.c.b16 %v1866, %v1863
        %v1897 = vpack.c.b16 %v1867, %v1864
        %v1898 = vpack.c.b16 %v1871, %v1868
        %v1899 = vpack.c.b16 %v1872, %v1869
        %v1900 = vpack.c.b16 %v1873, %v1870
        %v1901 = vpack.c.b16 %v1877, %v1874
        %v1902 = vpack.c.b16 %v1878, %v1875
        %v1903 = vpack.c.b16 %v1879, %v1876
        %1928 = vmatpush.bf16.msra.mxu0 %v1901
        %1929 = vmatpush.bf16.msra.mxu0 %v1898
        %1930 = vmatpush.bf16.msra.mxu0 %v1895
        %1931 = vmatpush.bf16.msra.mxu0 %v1892
        %1932 = vmatpush.bf16.msra.mxu0 %v1889
        %1933 = vmatpush.bf16.msra.mxu0 %v1886
        %1934 = vmatpush.bf16.msra.mxu0 %v1883
        %1935 = vmatpush.bf16.msra.mxu0 %v1880
        %1936 = vmatmul.bf16.gmra.mxu0 %v1798
        %v1937 = vpop.f32.mrf.mxu0
        %v1938 = vadd.f32 0.0, %v1937
        %v1939 = vpop.f32.mrf.mxu0
        %1940 = vdwg.mxu0
        %1941 = vmatpush.bf16.msra.mxu0 %v1902
        %1942 = vmatpush.bf16.msra.mxu0 %v1899
        %1943 = vmatpush.bf16.msra.mxu0 %v1896
        %1944 = vmatpush.bf16.msra.mxu0 %v1893
        %1945 = vmatpush.bf16.msra.mxu0 %v1890
        %1946 = vmatpush.bf16.msra.mxu0 %v1887
        %1947 = vmatpush.bf16.msra.mxu0 %v1884
        %1948 = vmatpush.bf16.msra.mxu0 %v1881
        %1949 = vmatmul.bf16.gmra.mxu0 %v1798
        %v1950 = vpop.f32.mrf.mxu0
        %v1951 = vadd.f32 0.0, %v1950
        %v1952 = vpop.f32.mrf.mxu0
        %1953 = vdwg.mxu0
        %1954 = vmatpush.bf16.msra.mxu0 %v1903
        %1955 = vmatpush.bf16.msra.mxu0 %v1900
        %1956 = vmatpush.bf16.msra.mxu0 %v1897
        %1957 = vmatpush.bf16.msra.mxu0 %v1894
        %1958 = vmatpush.bf16.msra.mxu0 %v1891
        %1959 = vmatpush.bf16.msra.mxu0 %v1888
        %1960 = vmatpush.bf16.msra.mxu0 %v1885
        %1961 = vmatpush.bf16.msra.mxu0 %v1882
        %1962 = vmatmul.bf16.gmra.mxu0 %v1798
        %v1963 = vpop.f32.mrf.mxu0
        %v1964 = vadd.f32 0.0, %v1963
        %v1965 = vpop.f32.mrf.mxu0
        %1966 = vdwg.mxu0
        %v1967 = vadd.f32 %v1749, %v1938
        %v1968 = vadd.f32 %v1750, %v1951
        %v1969 = vadd.f32 %v1751, %v1964
        %s1970 = scalar_lea.vmem %s438, 960 [#allocation10]
        %v1971 = vld [vmem:[%s1970] sm:$0xff]
        %v1972 = vld [vmem:[%s1970 + $0x8] sm:$0xf]
        %v1973 = vld [vmem:[%s1970 + $0xc] sm:$0xff]
        %v1974 = vld [vmem:[%s1970 + $0x14] sm:$0xf]
        %v1975 = vld [vmem:[%s1970 + $0x18] sm:$0xff]
        %v1976 = vld [vmem:[%s1970 + $0x20] sm:$0xf]
        %v1977 = vld [vmem:[%s1970 + $0x24] sm:$0xff]
        %v1978 = vld [vmem:[%s1970 + $0x2c] sm:$0xf]
        %v1979 = vld [vmem:[%s1970 + $0x30] sm:$0xff]
        %v1980 = vld [vmem:[%s1970 + $0x38] sm:$0xf]
        %v1981 = vld [vmem:[%s1970 + $0x3c] sm:$0xff]
        %v1982 = vld [vmem:[%s1970 + $0x44] sm:$0xf]
        %v1983 = vld [vmem:[%s1970 + $0x48] sm:$0xff]
        %v1984 = vld [vmem:[%s1970 + $0x50] sm:$0xf]
        %v1985 = vld [vmem:[%s1970 + $0x54] sm:$0xff]
        %v1986 = vld [vmem:[%s1970 + $0x5c] sm:$0xf]
        %v1987 = vld [vmem:[%s1970 + $0x60] sm:$0xff]
        %v1988 = vld [vmem:[%s1970 + $0x68] sm:$0xf]
        %v1989 = vld [vmem:[%s1970 + $0x6c] sm:$0xff]
        %v1990 = vld [vmem:[%s1970 + $0x74] sm:$0xf]
        %v1991 = vld [vmem:[%s1970 + $0x78] sm:$0xff]
        %v1992 = vld [vmem:[%s1970 + $0x80] sm:$0xf]
        %v1993 = vld [vmem:[%s1970 + $0x84] sm:$0xff]
        %v1994 = vld [vmem:[%s1970 + $0x8c] sm:$0xf]
        %v1995 = vld [vmem:[%s1970 + $0x90] sm:$0xff]
        %v1996 = vld [vmem:[%s1970 + $0x98] sm:$0xf]
        %v1997 = vld [vmem:[%s1970 + $0x9c] sm:$0xff]
        %v1998 = vld [vmem:[%s1970 + $0xa4] sm:$0xf]
        %v1999 = vld [vmem:[%s1970 + $0xa8] sm:$0xff]
        %v2000 = vld [vmem:[%s1970 + $0xb0] sm:$0xf]
        %v2001 = vld [vmem:[%s1970 + $0xb4] sm:$0xff]
        %v2002 = vld [vmem:[%s1970 + $0xbc] sm:$0xf]
        %v2003 = vrot.slane %v1793, 5
        %v2004 = vrot.slane %v1794, 4
        %v2005 = vsel %vm984, %v2004, %v2003
        %v2006 = vpack.c.b16 %v2005, %v2005
        %v2040 = vunpack.c.l.b16 %v1971
        %v2041 = vunpack.c.h.b16 %v1971
        %v2042 = vunpack.c.l.b16 %v1972
        %v2043 = vunpack.c.l.b16 %v1973
        %v2044 = vunpack.c.h.b16 %v1973
        %v2045 = vunpack.c.l.b16 %v1974
        %v2046 = vunpack.c.l.b16 %v1975
        %v2047 = vunpack.c.h.b16 %v1975
        %v2048 = vunpack.c.l.b16 %v1976
        %v2049 = vunpack.c.l.b16 %v1977
        %v2050 = vunpack.c.h.b16 %v1977
        %v2051 = vunpack.c.l.b16 %v1978
        %v2052 = vunpack.c.l.b16 %v1979
        %v2053 = vunpack.c.h.b16 %v1979
        %v2054 = vunpack.c.l.b16 %v1980
        %v2055 = vunpack.c.l.b16 %v1981
        %v2056 = vunpack.c.h.b16 %v1981
        %v2057 = vunpack.c.l.b16 %v1982
        %v2058 = vunpack.c.l.b16 %v1983
        %v2059 = vunpack.c.h.b16 %v1983
        %v2060 = vunpack.c.l.b16 %v1984
        %v2061 = vunpack.c.l.b16 %v1985
        %v2062 = vunpack.c.h.b16 %v1985
        %v2063 = vunpack.c.l.b16 %v1986
        %v2064 = vunpack.c.l.b16 %v1987
        %v2065 = vunpack.c.h.b16 %v1987
        %v2066 = vunpack.c.l.b16 %v1988
        %v2067 = vunpack.c.l.b16 %v1989
        %v2068 = vunpack.c.h.b16 %v1989
        %v2069 = vunpack.c.l.b16 %v1990
        %v2070 = vunpack.c.l.b16 %v1991
        %v2071 = vunpack.c.h.b16 %v1991
        %v2072 = vunpack.c.l.b16 %v1992
        %v2073 = vunpack.c.l.b16 %v1993
        %v2074 = vunpack.c.h.b16 %v1993
        %v2075 = vunpack.c.l.b16 %v1994
        %v2076 = vunpack.c.l.b16 %v1995
        %v2077 = vunpack.c.h.b16 %v1995
        %v2078 = vunpack.c.l.b16 %v1996
        %v2079 = vunpack.c.l.b16 %v1997
        %v2080 = vunpack.c.h.b16 %v1997
        %v2081 = vunpack.c.l.b16 %v1998
        %v2082 = vunpack.c.l.b16 %v1999
        %v2083 = vunpack.c.h.b16 %v1999
        %v2084 = vunpack.c.l.b16 %v2000
        %v2085 = vunpack.c.l.b16 %v2001
        %v2086 = vunpack.c.h.b16 %v2001
        %v2087 = vunpack.c.l.b16 %v2002
        %v2088 = vpack.c.b16 %v2043, %v2040
        %v2089 = vpack.c.b16 %v2044, %v2041
        %v2090 = vpack.c.b16 %v2045, %v2042
        %v2091 = vpack.c.b16 %v2049, %v2046
        %v2092 = vpack.c.b16 %v2050, %v2047
        %v2093 = vpack.c.b16 %v2051, %v2048
        %v2094 = vpack.c.b16 %v2055, %v2052
        %v2095 = vpack.c.b16 %v2056, %v2053
        %v2096 = vpack.c.b16 %v2057, %v2054
        %v2097 = vpack.c.b16 %v2061, %v2058
        %v2098 = vpack.c.b16 %v2062, %v2059
        %v2099 = vpack.c.b16 %v2063, %v2060
        %v2100 = vpack.c.b16 %v2067, %v2064
        %v2101 = vpack.c.b16 %v2068, %v2065
        %v2102 = vpack.c.b16 %v2069, %v2066
        %v2103 = vpack.c.b16 %v2073, %v2070
        %v2104 = vpack.c.b16 %v2074, %v2071
        %v2105 = vpack.c.b16 %v2075, %v2072
        %v2106 = vpack.c.b16 %v2079, %v2076
        %v2107 = vpack.c.b16 %v2080, %v2077
        %v2108 = vpack.c.b16 %v2081, %v2078
        %v2109 = vpack.c.b16 %v2085, %v2082
        %v2110 = vpack.c.b16 %v2086, %v2083
        %v2111 = vpack.c.b16 %v2087, %v2084
        %2136 = vmatpush.bf16.msra.mxu0 %v2109
        %2137 = vmatpush.bf16.msra.mxu0 %v2106
        %2138 = vmatpush.bf16.msra.mxu0 %v2103
        %2139 = vmatpush.bf16.msra.mxu0 %v2100
        %2140 = vmatpush.bf16.msra.mxu0 %v2097
        %2141 = vmatpush.bf16.msra.mxu0 %v2094
        %2142 = vmatpush.bf16.msra.mxu0 %v2091
        %2143 = vmatpush.bf16.msra.mxu0 %v2088
        %2144 = vmatmul.bf16.gmra.mxu0 %v2006
        %v2145 = vpop.f32.mrf.mxu0
        %v2146 = vadd.f32 0.0, %v2145
        %v2147 = vpop.f32.mrf.mxu0
        %2148 = vdwg.mxu0
        %2149 = vmatpush.bf16.msra.mxu0 %v2110
        %2150 = vmatpush.bf16.msra.mxu0 %v2107
        %2151 = vmatpush.bf16.msra.mxu0 %v2104
        %2152 = vmatpush.bf16.msra.mxu0 %v2101
        %2153 = vmatpush.bf16.msra.mxu0 %v2098
        %2154 = vmatpush.bf16.msra.mxu0 %v2095
        %2155 = vmatpush.bf16.msra.mxu0 %v2092
        %2156 = vmatpush.bf16.msra.mxu0 %v2089
        %2157 = vmatmul.bf16.gmra.mxu0 %v2006
        %v2158 = vpop.f32.mrf.mxu0
        %v2159 = vadd.f32 0.0, %v2158
        %v2160 = vpop.f32.mrf.mxu0
        %2161 = vdwg.mxu0
        %2162 = vmatpush.bf16.msra.mxu0 %v2111
        %2163 = vmatpush.bf16.msra.mxu0 %v2108
        %2164 = vmatpush.bf16.msra.mxu0 %v2105
        %2165 = vmatpush.bf16.msra.mxu0 %v2102
        %2166 = vmatpush.bf16.msra.mxu0 %v2099
        %2167 = vmatpush.bf16.msra.mxu0 %v2096
        %2168 = vmatpush.bf16.msra.mxu0 %v2093
        %2169 = vmatpush.bf16.msra.mxu0 %v2090
        %2170 = vmatmul.bf16.gmra.mxu0 %v2006
        %v2171 = vpop.f32.mrf.mxu0
        %v2172 = vadd.f32 0.0, %v2171
        %v2173 = vpop.f32.mrf.mxu0
        %2174 = vdwg.mxu0
        %v2175 = vadd.f32 %v1967, %v2146
        %v2176 = vadd.f32 %v1968, %v2159
        %v2177 = vadd.f32 %v1969, %v2172
        %v2178 = vld [vmem:[#allocation2] sm:$0x8]
        %v2179 = vld [vmem:[#allocation2 + $0x10] sm:$0x8]
        %s2180 = scalar_lea.vmem %s438, 1152 [#allocation10]
        %v2181 = vld [vmem:[%s2180] sm:$0xff]
        %v2182 = vld [vmem:[%s2180 + $0x8] sm:$0xf]
        %v2183 = vld [vmem:[%s2180 + $0xc] sm:$0xff]
        %v2184 = vld [vmem:[%s2180 + $0x14] sm:$0xf]
        %v2185 = vld [vmem:[%s2180 + $0x18] sm:$0xff]
        %v2186 = vld [vmem:[%s2180 + $0x20] sm:$0xf]
        %v2187 = vld [vmem:[%s2180 + $0x24] sm:$0xff]
        %v2188 = vld [vmem:[%s2180 + $0x2c] sm:$0xf]
        %v2189 = vld [vmem:[%s2180 + $0x30] sm:$0xff]
        %v2190 = vld [vmem:[%s2180 + $0x38] sm:$0xf]
        %v2191 = vld [vmem:[%s2180 + $0x3c] sm:$0xff]
        %v2192 = vld [vmem:[%s2180 + $0x44] sm:$0xf]
        %v2193 = vld [vmem:[%s2180 + $0x48] sm:$0xff]
        %v2194 = vld [vmem:[%s2180 + $0x50] sm:$0xf]
        %v2195 = vld [vmem:[%s2180 + $0x54] sm:$0xff]
        %v2196 = vld [vmem:[%s2180 + $0x5c] sm:$0xf]
        %v2197 = vld [vmem:[%s2180 + $0x60] sm:$0xff]
        %v2198 = vld [vmem:[%s2180 + $0x68] sm:$0xf]
        %v2199 = vld [vmem:[%s2180 + $0x6c] sm:$0xff]
        %v2200 = vld [vmem:[%s2180 + $0x74] sm:$0xf]
        %v2201 = vld [vmem:[%s2180 + $0x78] sm:$0xff]
        %v2202 = vld [vmem:[%s2180 + $0x80] sm:$0xf]
        %v2203 = vld [vmem:[%s2180 + $0x84] sm:$0xff]
        %v2204 = vld [vmem:[%s2180 + $0x8c] sm:$0xf]
        %v2205 = vld [vmem:[%s2180 + $0x90] sm:$0xff]
        %v2206 = vld [vmem:[%s2180 + $0x98] sm:$0xf]
        %v2207 = vld [vmem:[%s2180 + $0x9c] sm:$0xff]
        %v2208 = vld [vmem:[%s2180 + $0xa4] sm:$0xf]
        %v2209 = vld [vmem:[%s2180 + $0xa8] sm:$0xff]
        %v2210 = vld [vmem:[%s2180 + $0xb0] sm:$0xf]
        %v2211 = vld [vmem:[%s2180 + $0xb4] sm:$0xff]
        %v2212 = vld [vmem:[%s2180 + $0xbc] sm:$0xf]
        %v2215 = vunpack.c.l.b16 %v2178
        %v2216 = vunpack.c.l.b16 %v2179
        %v2217 = vpack.c.b16 %v2215, %v2215
        %v2218 = vpack.c.b16 %v2216, %v2216
        %v2219 = vunpack.c.l.b16 %v2217
        %v2220 = vunpack.c.l.b16 %v2218
        %v2221 = vrot.slane %v2219, 6
        %v2222 = vrot.slane %v2220, 5
        %v2223 = vsel %vm984, %v2222, %v2221
        %v2224 = vpack.c.b16 %v2223, %v2223
        %v2258 = vunpack.c.l.b16 %v2181
        %v2259 = vunpack.c.h.b16 %v2181
        %v2260 = vunpack.c.l.b16 %v2182
        %v2261 = vunpack.c.l.b16 %v2183
        %v2262 = vunpack.c.h.b16 %v2183
        %v2263 = vunpack.c.l.b16 %v2184
        %v2264 = vunpack.c.l.b16 %v2185
        %v2265 = vunpack.c.h.b16 %v2185
        %v2266 = vunpack.c.l.b16 %v2186
        %v2267 = vunpack.c.l.b16 %v2187
        %v2268 = vunpack.c.h.b16 %v2187
        %v2269 = vunpack.c.l.b16 %v2188
        %v2270 = vunpack.c.l.b16 %v2189
        %v2271 = vunpack.c.h.b16 %v2189
        %v2272 = vunpack.c.l.b16 %v2190
        %v2273 = vunpack.c.l.b16 %v2191
        %v2274 = vunpack.c.h.b16 %v2191
        %v2275 = vunpack.c.l.b16 %v2192
        %v2276 = vunpack.c.l.b16 %v2193
        %v2277 = vunpack.c.h.b16 %v2193
        %v2278 = vunpack.c.l.b16 %v2194
        %v2279 = vunpack.c.l.b16 %v2195
        %v2280 = vunpack.c.h.b16 %v2195
        %v2281 = vunpack.c.l.b16 %v2196
        %v2282 = vunpack.c.l.b16 %v2197
        %v2283 = vunpack.c.h.b16 %v2197
        %v2284 = vunpack.c.l.b16 %v2198
        %v2285 = vunpack.c.l.b16 %v2199
        %v2286 = vunpack.c.h.b16 %v2199
        %v2287 = vunpack.c.l.b16 %v2200
        %v2288 = vunpack.c.l.b16 %v2201
        %v2289 = vunpack.c.h.b16 %v2201
        %v2290 = vunpack.c.l.b16 %v2202
        %v2291 = vunpack.c.l.b16 %v2203
        %v2292 = vunpack.c.h.b16 %v2203
        %v2293 = vunpack.c.l.b16 %v2204
        %v2294 = vunpack.c.l.b16 %v2205
        %v2295 = vunpack.c.h.b16 %v2205
        %v2296 = vunpack.c.l.b16 %v2206
        %v2297 = vunpack.c.l.b16 %v2207
        %v2298 = vunpack.c.h.b16 %v2207
        %v2299 = vunpack.c.l.b16 %v2208
        %v2300 = vunpack.c.l.b16 %v2209
        %v2301 = vunpack.c.h.b16 %v2209
        %v2302 = vunpack.c.l.b16 %v2210
        %v2303 = vunpack.c.l.b16 %v2211
        %v2304 = vunpack.c.h.b16 %v2211
        %v2305 = vunpack.c.l.b16 %v2212
        %v2306 = vpack.c.b16 %v2261, %v2258
        %v2307 = vpack.c.b16 %v2262, %v2259
        %v2308 = vpack.c.b16 %v2263, %v2260
        %v2309 = vpack.c.b16 %v2267, %v2264
        %v2310 = vpack.c.b16 %v2268, %v2265
        %v2311 = vpack.c.b16 %v2269, %v2266
        %v2312 = vpack.c.b16 %v2273, %v2270
        %v2313 = vpack.c.b16 %v2274, %v2271
        %v2314 = vpack.c.b16 %v2275, %v2272
        %v2315 = vpack.c.b16 %v2279, %v2276
        %v2316 = vpack.c.b16 %v2280, %v2277
        %v2317 = vpack.c.b16 %v2281, %v2278
        %v2318 = vpack.c.b16 %v2285, %v2282
        %v2319 = vpack.c.b16 %v2286, %v2283
        %v2320 = vpack.c.b16 %v2287, %v2284
        %v2321 = vpack.c.b16 %v2291, %v2288
        %v2322 = vpack.c.b16 %v2292, %v2289
        %v2323 = vpack.c.b16 %v2293, %v2290
        %v2324 = vpack.c.b16 %v2297, %v2294
        %v2325 = vpack.c.b16 %v2298, %v2295
        %v2326 = vpack.c.b16 %v2299, %v2296
        %v2327 = vpack.c.b16 %v2303, %v2300
        %v2328 = vpack.c.b16 %v2304, %v2301
        %v2329 = vpack.c.b16 %v2305, %v2302
        %2354 = vmatpush.bf16.msra.mxu0 %v2327
        %2355 = vmatpush.bf16.msra.mxu0 %v2324
        %2356 = vmatpush.bf16.msra.mxu0 %v2321
        %2357 = vmatpush.bf16.msra.mxu0 %v2318
        %2358 = vmatpush.bf16.msra.mxu0 %v2315
        %2359 = vmatpush.bf16.msra.mxu0 %v2312
        %2360 = vmatpush.bf16.msra.mxu0 %v2309
        %2361 = vmatpush.bf16.msra.mxu0 %v2306
        %2362 = vmatmul.bf16.gmra.mxu0 %v2224
        %v2363 = vpop.f32.mrf.mxu0
        %v2364 = vadd.f32 0.0, %v2363
        %v2365 = vpop.f32.mrf.mxu0
        %2366 = vdwg.mxu0
        %2367 = vmatpush.bf16.msra.mxu0 %v2328
        %2368 = vmatpush.bf16.msra.mxu0 %v2325
        %2369 = vmatpush.bf16.msra.mxu0 %v2322
        %2370 = vmatpush.bf16.msra.mxu0 %v2319
        %2371 = vmatpush.bf16.msra.mxu0 %v2316
        %2372 = vmatpush.bf16.msra.mxu0 %v2313
        %2373 = vmatpush.bf16.msra.mxu0 %v2310
        %2374 = vmatpush.bf16.msra.mxu0 %v2307
        %2375 = vmatmul.bf16.gmra.mxu0 %v2224
        %v2376 = vpop.f32.mrf.mxu0
        %v2377 = vadd.f32 0.0, %v2376
        %v2378 = vpop.f32.mrf.mxu0
        %2379 = vdwg.mxu0
        %2380 = vmatpush.bf16.msra.mxu0 %v2329
        %2381 = vmatpush.bf16.msra.mxu0 %v2326
        %2382 = vmatpush.bf16.msra.mxu0 %v2323
        %2383 = vmatpush.bf16.msra.mxu0 %v2320
        %2384 = vmatpush.bf16.msra.mxu0 %v2317
        %2385 = vmatpush.bf16.msra.mxu0 %v2314
        %2386 = vmatpush.bf16.msra.mxu0 %v2311
        %2387 = vmatpush.bf16.msra.mxu0 %v2308
        %2388 = vmatmul.bf16.gmra.mxu0 %v2224
        %v2389 = vpop.f32.mrf.mxu0
        %v2390 = vadd.f32 0.0, %v2389
        %v2391 = vpop.f32.mrf.mxu0
        %2392 = vdwg.mxu0
        %v2393 = vadd.f32 %v2175, %v2364
        %v2394 = vadd.f32 %v2176, %v2377
        %v2395 = vadd.f32 %v2177, %v2390
        %s2396 = scalar_lea.vmem %s438, 1344 [#allocation10]
        %v2397 = vld [vmem:[%s2396] sm:$0xff]
        %v2398 = vld [vmem:[%s2396 + $0x8] sm:$0xf]
        %v2399 = vld [vmem:[%s2396 + $0xc] sm:$0xff]
        %v2400 = vld [vmem:[%s2396 + $0x14] sm:$0xf]
        %v2401 = vld [vmem:[%s2396 + $0x18] sm:$0xff]
        %v2402 = vld [vmem:[%s2396 + $0x20] sm:$0xf]
        %v2403 = vld [vmem:[%s2396 + $0x24] sm:$0xff]
        %v2404 = vld [vmem:[%s2396 + $0x2c] sm:$0xf]
        %v2405 = vld [vmem:[%s2396 + $0x30] sm:$0xff]
        %v2406 = vld [vmem:[%s2396 + $0x38] sm:$0xf]
        %v2407 = vld [vmem:[%s2396 + $0x3c] sm:$0xff]
        %v2408 = vld [vmem:[%s2396 + $0x44] sm:$0xf]
        %v2409 = vld [vmem:[%s2396 + $0x48] sm:$0xff]
        %v2410 = vld [vmem:[%s2396 + $0x50] sm:$0xf]
        %v2411 = vld [vmem:[%s2396 + $0x54] sm:$0xff]
        %v2412 = vld [vmem:[%s2396 + $0x5c] sm:$0xf]
        %v2413 = vld [vmem:[%s2396 + $0x60] sm:$0xff]
        %v2414 = vld [vmem:[%s2396 + $0x68] sm:$0xf]
        %v2415 = vld [vmem:[%s2396 + $0x6c] sm:$0xff]
        %v2416 = vld [vmem:[%s2396 + $0x74] sm:$0xf]
        %v2417 = vld [vmem:[%s2396 + $0x78] sm:$0xff]
        %v2418 = vld [vmem:[%s2396 + $0x80] sm:$0xf]
        %v2419 = vld [vmem:[%s2396 + $0x84] sm:$0xff]
        %v2420 = vld [vmem:[%s2396 + $0x8c] sm:$0xf]
        %v2421 = vld [vmem:[%s2396 + $0x90] sm:$0xff]
        %v2422 = vld [vmem:[%s2396 + $0x98] sm:$0xf]
        %v2423 = vld [vmem:[%s2396 + $0x9c] sm:$0xff]
        %v2424 = vld [vmem:[%s2396 + $0xa4] sm:$0xf]
        %v2425 = vld [vmem:[%s2396 + $0xa8] sm:$0xff]
        %v2426 = vld [vmem:[%s2396 + $0xb0] sm:$0xf]
        %v2427 = vld [vmem:[%s2396 + $0xb4] sm:$0xff]
        %v2428 = vld [vmem:[%s2396 + $0xbc] sm:$0xf]
        %v2429 = vrot.slane %v2219, 7
        %v2430 = vrot.slane %v2220, 6
        %v2431 = vsel %vm984, %v2430, %v2429
        %v2432 = vpack.c.b16 %v2431, %v2431
        %v2466 = vunpack.c.l.b16 %v2397
        %v2467 = vunpack.c.h.b16 %v2397
        %v2468 = vunpack.c.l.b16 %v2398
        %v2469 = vunpack.c.l.b16 %v2399
        %v2470 = vunpack.c.h.b16 %v2399
        %v2471 = vunpack.c.l.b16 %v2400
        %v2472 = vunpack.c.l.b16 %v2401
        %v2473 = vunpack.c.h.b16 %v2401
        %v2474 = vunpack.c.l.b16 %v2402
        %v2475 = vunpack.c.l.b16 %v2403
        %v2476 = vunpack.c.h.b16 %v2403
        %v2477 = vunpack.c.l.b16 %v2404
        %v2478 = vunpack.c.l.b16 %v2405
        %v2479 = vunpack.c.h.b16 %v2405
        %v2480 = vunpack.c.l.b16 %v2406
        %v2481 = vunpack.c.l.b16 %v2407
        %v2482 = vunpack.c.h.b16 %v2407
        %v2483 = vunpack.c.l.b16 %v2408
        %v2484 = vunpack.c.l.b16 %v2409
        %v2485 = vunpack.c.h.b16 %v2409
        %v2486 = vunpack.c.l.b16 %v2410
        %v2487 = vunpack.c.l.b16 %v2411
        %v2488 = vunpack.c.h.b16 %v2411
        %v2489 = vunpack.c.l.b16 %v2412
        %v2490 = vunpack.c.l.b16 %v2413
        %v2491 = vunpack.c.h.b16 %v2413
        %v2492 = vunpack.c.l.b16 %v2414
        %v2493 = vunpack.c.l.b16 %v2415
        %v2494 = vunpack.c.h.b16 %v2415
        %v2495 = vunpack.c.l.b16 %v2416
        %v2496 = vunpack.c.l.b16 %v2417
        %v2497 = vunpack.c.h.b16 %v2417
        %v2498 = vunpack.c.l.b16 %v2418
        %v2499 = vunpack.c.l.b16 %v2419
        %v2500 = vunpack.c.h.b16 %v2419
        %v2501 = vunpack.c.l.b16 %v2420
        %v2502 = vunpack.c.l.b16 %v2421
        %v2503 = vunpack.c.h.b16 %v2421
        %v2504 = vunpack.c.l.b16 %v2422
        %v2505 = vunpack.c.l.b16 %v2423
        %v2506 = vunpack.c.h.b16 %v2423
        %v2507 = vunpack.c.l.b16 %v2424
        %v2508 = vunpack.c.l.b16 %v2425
        %v2509 = vunpack.c.h.b16 %v2425
        %v2510 = vunpack.c.l.b16 %v2426
        %v2511 = vunpack.c.l.b16 %v2427
        %v2512 = vunpack.c.h.b16 %v2427
        %v2513 = vunpack.c.l.b16 %v2428
        %v2514 = vpack.c.b16 %v2469, %v2466
        %v2515 = vpack.c.b16 %v2470, %v2467
        %v2516 = vpack.c.b16 %v2471, %v2468
        %v2517 = vpack.c.b16 %v2475, %v2472
        %v2518 = vpack.c.b16 %v2476, %v2473
        %v2519 = vpack.c.b16 %v2477, %v2474
        %v2520 = vpack.c.b16 %v2481, %v2478
        %v2521 = vpack.c.b16 %v2482, %v2479
        %v2522 = vpack.c.b16 %v2483, %v2480
        %v2523 = vpack.c.b16 %v2487, %v2484
        %v2524 = vpack.c.b16 %v2488, %v2485
        %v2525 = vpack.c.b16 %v2489, %v2486
        %v2526 = vpack.c.b16 %v2493, %v2490
        %v2527 = vpack.c.b16 %v2494, %v2491
        %v2528 = vpack.c.b16 %v2495, %v2492
        %v2529 = vpack.c.b16 %v2499, %v2496
        %v2530 = vpack.c.b16 %v2500, %v2497
        %v2531 = vpack.c.b16 %v2501, %v2498
        %v2532 = vpack.c.b16 %v2505, %v2502
        %v2533 = vpack.c.b16 %v2506, %v2503
        %v2534 = vpack.c.b16 %v2507, %v2504
        %v2535 = vpack.c.b16 %v2511, %v2508
        %v2536 = vpack.c.b16 %v2512, %v2509
        %v2537 = vpack.c.b16 %v2513, %v2510
        %2562 = vmatpush.bf16.msra.mxu0 %v2535
        %2563 = vmatpush.bf16.msra.mxu0 %v2532
        %2564 = vmatpush.bf16.msra.mxu0 %v2529
        %2565 = vmatpush.bf16.msra.mxu0 %v2526
        %2566 = vmatpush.bf16.msra.mxu0 %v2523
        %2567 = vmatpush.bf16.msra.mxu0 %v2520
        %2568 = vmatpush.bf16.msra.mxu0 %v2517
        %2569 = vmatpush.bf16.msra.mxu0 %v2514
        %2570 = vmatmul.bf16.gmra.mxu0 %v2432
        %v2571 = vpop.f32.mrf.mxu0
        %v2572 = vadd.f32 0.0, %v2571
        %v2573 = vpop.f32.mrf.mxu0
        %2574 = vdwg.mxu0
        %2575 = vmatpush.bf16.msra.mxu0 %v2536
        %2576 = vmatpush.bf16.msra.mxu0 %v2533
        %2577 = vmatpush.bf16.msra.mxu0 %v2530
        %2578 = vmatpush.bf16.msra.mxu0 %v2527
        %2579 = vmatpush.bf16.msra.mxu0 %v2524
        %2580 = vmatpush.bf16.msra.mxu0 %v2521
        %2581 = vmatpush.bf16.msra.mxu0 %v2518
        %2582 = vmatpush.bf16.msra.mxu0 %v2515
        %2583 = vmatmul.bf16.gmra.mxu0 %v2432
        %v2584 = vpop.f32.mrf.mxu0
        %v2585 = vadd.f32 0.0, %v2584
        %v2586 = vpop.f32.mrf.mxu0
        %2587 = vdwg.mxu0
        %2588 = vmatpush.bf16.msra.mxu0 %v2537
        %2589 = vmatpush.bf16.msra.mxu0 %v2534
        %2590 = vmatpush.bf16.msra.mxu0 %v2531
        %2591 = vmatpush.bf16.msra.mxu0 %v2528
        %2592 = vmatpush.bf16.msra.mxu0 %v2525
        %2593 = vmatpush.bf16.msra.mxu0 %v2522
        %2594 = vmatpush.bf16.msra.mxu0 %v2519
        %2595 = vmatpush.bf16.msra.mxu0 %v2516
        %2596 = vmatmul.bf16.gmra.mxu0 %v2432
        %v2597 = vpop.f32.mrf.mxu0
        %v2598 = vadd.f32 0.0, %v2597
        %v2599 = vpop.f32.mrf.mxu0
        %2600 = vdwg.mxu0
        %v2601 = vadd.f32 %v2393, %v2572
        %v2602 = vadd.f32 %v2394, %v2585
        %v2603 = vadd.f32 %v2395, %v2598
        %v2604 = vld [vmem:[#allocation2 + $0x4] sm:$0x1]
        %v2605 = vld [vmem:[#allocation2 + $0x14] sm:$0x1]
        %s2606 = scalar_lea.vmem %s438, 1536 [#allocation10]
        %v2607 = vld [vmem:[%s2606] sm:$0xff]
        %v2608 = vld [vmem:[%s2606 + $0x8] sm:$0xf]
        %v2609 = vld [vmem:[%s2606 + $0xc] sm:$0xff]
        %v2610 = vld [vmem:[%s2606 + $0x14] sm:$0xf]
        %v2611 = vld [vmem:[%s2606 + $0x18] sm:$0xff]
        %v2612 = vld [vmem:[%s2606 + $0x20] sm:$0xf]
        %v2613 = vld [vmem:[%s2606 + $0x24] sm:$0xff]
        %v2614 = vld [vmem:[%s2606 + $0x2c] sm:$0xf]
        %v2615 = vld [vmem:[%s2606 + $0x30] sm:$0xff]
        %v2616 = vld [vmem:[%s2606 + $0x38] sm:$0xf]
        %v2617 = vld [vmem:[%s2606 + $0x3c] sm:$0xff]
        %v2618 = vld [vmem:[%s2606 + $0x44] sm:$0xf]
        %v2619 = vld [vmem:[%s2606 + $0x48] sm:$0xff]
        %v2620 = vld [vmem:[%s2606 + $0x50] sm:$0xf]
        %v2621 = vld [vmem:[%s2606 + $0x54] sm:$0xff]
        %v2622 = vld [vmem:[%s2606 + $0x5c] sm:$0xf]
        %v2623 = vld [vmem:[%s2606 + $0x60] sm:$0xff]
        %v2624 = vld [vmem:[%s2606 + $0x68] sm:$0xf]
        %v2625 = vld [vmem:[%s2606 + $0x6c] sm:$0xff]
        %v2626 = vld [vmem:[%s2606 + $0x74] sm:$0xf]
        %v2627 = vld [vmem:[%s2606 + $0x78] sm:$0xff]
        %v2628 = vld [vmem:[%s2606 + $0x80] sm:$0xf]
        %v2629 = vld [vmem:[%s2606 + $0x84] sm:$0xff]
        %v2630 = vld [vmem:[%s2606 + $0x8c] sm:$0xf]
        %v2631 = vld [vmem:[%s2606 + $0x90] sm:$0xff]
        %v2632 = vld [vmem:[%s2606 + $0x98] sm:$0xf]
        %v2633 = vld [vmem:[%s2606 + $0x9c] sm:$0xff]
        %v2634 = vld [vmem:[%s2606 + $0xa4] sm:$0xf]
        %v2635 = vld [vmem:[%s2606 + $0xa8] sm:$0xff]
        %v2636 = vld [vmem:[%s2606 + $0xb0] sm:$0xf]
        %v2637 = vld [vmem:[%s2606 + $0xb4] sm:$0xff]
        %v2638 = vld [vmem:[%s2606 + $0xbc] sm:$0xf]
        %v2641 = vunpack.c.l.b16 %v2604
        %v2642 = vunpack.c.l.b16 %v2605
        %v2643 = vpack.c.b16 %v2641, %v2641
        %v2644 = vpack.c.b16 %v2642, %v2642
        %v2645 = vunpack.c.l.b16 %v2643
        %v2646 = vunpack.c.l.b16 %v2644
        %v2647 = vrot.slane %v2646, 7
        %v2648 = vsel %vm984, %v2647, %v2645
        %v2649 = vpack.c.b16 %v2648, %v2648
        %v2683 = vunpack.c.l.b16 %v2607
        %v2684 = vunpack.c.h.b16 %v2607
        %v2685 = vunpack.c.l.b16 %v2608
        %v2686 = vunpack.c.l.b16 %v2609
        %v2687 = vunpack.c.h.b16 %v2609
        %v2688 = vunpack.c.l.b16 %v2610
        %v2689 = vunpack.c.l.b16 %v2611
        %v2690 = vunpack.c.h.b16 %v2611
        %v2691 = vunpack.c.l.b16 %v2612
        %v2692 = vunpack.c.l.b16 %v2613
        %v2693 = vunpack.c.h.b16 %v2613
        %v2694 = vunpack.c.l.b16 %v2614
        %v2695 = vunpack.c.l.b16 %v2615
        %v2696 = vunpack.c.h.b16 %v2615
        %v2697 = vunpack.c.l.b16 %v2616
        %v2698 = vunpack.c.l.b16 %v2617
        %v2699 = vunpack.c.h.b16 %v2617
        %v2700 = vunpack.c.l.b16 %v2618
        %v2701 = vunpack.c.l.b16 %v2619
        %v2702 = vunpack.c.h.b16 %v2619
        %v2703 = vunpack.c.l.b16 %v2620
        %v2704 = vunpack.c.l.b16 %v2621
        %v2705 = vunpack.c.h.b16 %v2621
        %v2706 = vunpack.c.l.b16 %v2622
        %v2707 = vunpack.c.l.b16 %v2623
        %v2708 = vunpack.c.h.b16 %v2623
        %v2709 = vunpack.c.l.b16 %v2624
        %v2710 = vunpack.c.l.b16 %v2625
        %v2711 = vunpack.c.h.b16 %v2625
        %v2712 = vunpack.c.l.b16 %v2626
        %v2713 = vunpack.c.l.b16 %v2627
        %v2714 = vunpack.c.h.b16 %v2627
        %v2715 = vunpack.c.l.b16 %v2628
        %v2716 = vunpack.c.l.b16 %v2629
        %v2717 = vunpack.c.h.b16 %v2629
        %v2718 = vunpack.c.l.b16 %v2630
        %v2719 = vunpack.c.l.b16 %v2631
        %v2720 = vunpack.c.h.b16 %v2631
        %v2721 = vunpack.c.l.b16 %v2632
        %v2722 = vunpack.c.l.b16 %v2633
        %v2723 = vunpack.c.h.b16 %v2633
        %v2724 = vunpack.c.l.b16 %v2634
        %v2725 = vunpack.c.l.b16 %v2635
        %v2726 = vunpack.c.h.b16 %v2635
        %v2727 = vunpack.c.l.b16 %v2636
        %v2728 = vunpack.c.l.b16 %v2637
        %v2729 = vunpack.c.h.b16 %v2637
        %v2730 = vunpack.c.l.b16 %v2638
        %v2731 = vpack.c.b16 %v2686, %v2683
        %v2732 = vpack.c.b16 %v2687, %v2684
        %v2733 = vpack.c.b16 %v2688, %v2685
        %v2734 = vpack.c.b16 %v2692, %v2689
        %v2735 = vpack.c.b16 %v2693, %v2690
        %v2736 = vpack.c.b16 %v2694, %v2691
        %v2737 = vpack.c.b16 %v2698, %v2695
        %v2738 = vpack.c.b16 %v2699, %v2696
        %v2739 = vpack.c.b16 %v2700, %v2697
        %v2740 = vpack.c.b16 %v2704, %v2701
        %v2741 = vpack.c.b16 %v2705, %v2702
        %v2742 = vpack.c.b16 %v2706, %v2703
        %v2743 = vpack.c.b16 %v2710, %v2707
        %v2744 = vpack.c.b16 %v2711, %v2708
        %v2745 = vpack.c.b16 %v2712, %v2709
        %v2746 = vpack.c.b16 %v2716, %v2713
        %v2747 = vpack.c.b16 %v2717, %v2714
        %v2748 = vpack.c.b16 %v2718, %v2715
        %v2749 = vpack.c.b16 %v2722, %v2719
        %v2750 = vpack.c.b16 %v2723, %v2720
        %v2751 = vpack.c.b16 %v2724, %v2721
        %v2752 = vpack.c.b16 %v2728, %v2725
        %v2753 = vpack.c.b16 %v2729, %v2726
        %v2754 = vpack.c.b16 %v2730, %v2727
        %2779 = vmatpush.bf16.msra.mxu0 %v2752
        %2780 = vmatpush.bf16.msra.mxu0 %v2749
        %2781 = vmatpush.bf16.msra.mxu0 %v2746
        %2782 = vmatpush.bf16.msra.mxu0 %v2743
        %2783 = vmatpush.bf16.msra.mxu0 %v2740
        %2784 = vmatpush.bf16.msra.mxu0 %v2737
        %2785 = vmatpush.bf16.msra.mxu0 %v2734
        %2786 = vmatpush.bf16.msra.mxu0 %v2731
        %2787 = vmatmul.bf16.gmra.mxu0 %v2649
        %v2788 = vpop.f32.mrf.mxu0
        %v2789 = vadd.f32 0.0, %v2788
        %v2790 = vpop.f32.mrf.mxu0
        %2791 = vdwg.mxu0
        %2792 = vmatpush.bf16.msra.mxu0 %v2753
        %2793 = vmatpush.bf16.msra.mxu0 %v2750
        %2794 = vmatpush.bf16.msra.mxu0 %v2747
        %2795 = vmatpush.bf16.msra.mxu0 %v2744
        %2796 = vmatpush.bf16.msra.mxu0 %v2741
        %2797 = vmatpush.bf16.msra.mxu0 %v2738
        %2798 = vmatpush.bf16.msra.mxu0 %v2735
        %2799 = vmatpush.bf16.msra.mxu0 %v2732
        %2800 = vmatmul.bf16.gmra.mxu0 %v2649
        %v2801 = vpop.f32.mrf.mxu0
        %v2802 = vadd.f32 0.0, %v2801
        %v2803 = vpop.f32.mrf.mxu0
        %2804 = vdwg.mxu0
        %2805 = vmatpush.bf16.msra.mxu0 %v2754
        %2806 = vmatpush.bf16.msra.mxu0 %v2751
        %2807 = vmatpush.bf16.msra.mxu0 %v2748
        %2808 = vmatpush.bf16.msra.mxu0 %v2745
        %2809 = vmatpush.bf16.msra.mxu0 %v2742
        %2810 = vmatpush.bf16.msra.mxu0 %v2739
        %2811 = vmatpush.bf16.msra.mxu0 %v2736
        %2812 = vmatpush.bf16.msra.mxu0 %v2733
        %2813 = vmatmul.bf16.gmra.mxu0 %v2649
        %v2814 = vpop.f32.mrf.mxu0
        %v2815 = vadd.f32 0.0, %v2814
        %v2816 = vpop.f32.mrf.mxu0
        %2817 = vdwg.mxu0
        %v2818 = vadd.f32 %v2601, %v2789
        %v2819 = vadd.f32 %v2602, %v2802
        %v2820 = vadd.f32 %v2603, %v2815
        %s2821 = scalar_lea.vmem %s438, 1728 [#allocation10]
        %v2822 = vld [vmem:[%s2821] sm:$0xff]
        %v2823 = vld [vmem:[%s2821 + $0x8] sm:$0xf]
        %v2824 = vld [vmem:[%s2821 + $0xc] sm:$0xff]
        %v2825 = vld [vmem:[%s2821 + $0x14] sm:$0xf]
        %v2826 = vld [vmem:[%s2821 + $0x18] sm:$0xff]
        %v2827 = vld [vmem:[%s2821 + $0x20] sm:$0xf]
        %v2828 = vld [vmem:[%s2821 + $0x24] sm:$0xff]
        %v2829 = vld [vmem:[%s2821 + $0x2c] sm:$0xf]
        %v2830 = vld [vmem:[%s2821 + $0x30] sm:$0xff]
        %v2831 = vld [vmem:[%s2821 + $0x38] sm:$0xf]
        %v2832 = vld [vmem:[%s2821 + $0x3c] sm:$0xff]
        %v2833 = vld [vmem:[%s2821 + $0x44] sm:$0xf]
        %v2834 = vld [vmem:[%s2821 + $0x48] sm:$0xff]
        %v2835 = vld [vmem:[%s2821 + $0x50] sm:$0xf]
        %v2836 = vld [vmem:[%s2821 + $0x54] sm:$0xff]
        %v2837 = vld [vmem:[%s2821 + $0x5c] sm:$0xf]
        %v2838 = vld [vmem:[%s2821 + $0x60] sm:$0xff]
        %v2839 = vld [vmem:[%s2821 + $0x68] sm:$0xf]
        %v2840 = vld [vmem:[%s2821 + $0x6c] sm:$0xff]
        %v2841 = vld [vmem:[%s2821 + $0x74] sm:$0xf]
        %v2842 = vld [vmem:[%s2821 + $0x78] sm:$0xff]
        %v2843 = vld [vmem:[%s2821 + $0x80] sm:$0xf]
        %v2844 = vld [vmem:[%s2821 + $0x84] sm:$0xff]
        %v2845 = vld [vmem:[%s2821 + $0x8c] sm:$0xf]
        %v2846 = vld [vmem:[%s2821 + $0x90] sm:$0xff]
        %v2847 = vld [vmem:[%s2821 + $0x98] sm:$0xf]
        %v2848 = vld [vmem:[%s2821 + $0x9c] sm:$0xff]
        %v2849 = vld [vmem:[%s2821 + $0xa4] sm:$0xf]
        %v2850 = vld [vmem:[%s2821 + $0xa8] sm:$0xff]
        %v2851 = vld [vmem:[%s2821 + $0xb0] sm:$0xf]
        %v2852 = vld [vmem:[%s2821 + $0xb4] sm:$0xff]
        %v2853 = vld [vmem:[%s2821 + $0xbc] sm:$0xf]
        %v2854 = vrot.slane %v2645, 1
        %v2855 = vsel %vm984, %v2646, %v2854
        %v2856 = vpack.c.b16 %v2855, %v2855
        %v2890 = vunpack.c.l.b16 %v2822
        %v2891 = vunpack.c.h.b16 %v2822
        %v2892 = vunpack.c.l.b16 %v2823
        %v2893 = vunpack.c.l.b16 %v2824
        %v2894 = vunpack.c.h.b16 %v2824
        %v2895 = vunpack.c.l.b16 %v2825
        %v2896 = vunpack.c.l.b16 %v2826
        %v2897 = vunpack.c.h.b16 %v2826
        %v2898 = vunpack.c.l.b16 %v2827
        %v2899 = vunpack.c.l.b16 %v2828
        %v2900 = vunpack.c.h.b16 %v2828
        %v2901 = vunpack.c.l.b16 %v2829
        %v2902 = vunpack.c.l.b16 %v2830
        %v2903 = vunpack.c.h.b16 %v2830
        %v2904 = vunpack.c.l.b16 %v2831
        %v2905 = vunpack.c.l.b16 %v2832
        %v2906 = vunpack.c.h.b16 %v2832
        %v2907 = vunpack.c.l.b16 %v2833
        %v2908 = vunpack.c.l.b16 %v2834
        %v2909 = vunpack.c.h.b16 %v2834
        %v2910 = vunpack.c.l.b16 %v2835
        %v2911 = vunpack.c.l.b16 %v2836
        %v2912 = vunpack.c.h.b16 %v2836
        %v2913 = vunpack.c.l.b16 %v2837
        %v2914 = vunpack.c.l.b16 %v2838
        %v2915 = vunpack.c.h.b16 %v2838
        %v2916 = vunpack.c.l.b16 %v2839
        %v2917 = vunpack.c.l.b16 %v2840
        %v2918 = vunpack.c.h.b16 %v2840
        %v2919 = vunpack.c.l.b16 %v2841
        %v2920 = vunpack.c.l.b16 %v2842
        %v2921 = vunpack.c.h.b16 %v2842
        %v2922 = vunpack.c.l.b16 %v2843
        %v2923 = vunpack.c.l.b16 %v2844
        %v2924 = vunpack.c.h.b16 %v2844
        %v2925 = vunpack.c.l.b16 %v2845
        %v2926 = vunpack.c.l.b16 %v2846
        %v2927 = vunpack.c.h.b16 %v2846
        %v2928 = vunpack.c.l.b16 %v2847
        %v2929 = vunpack.c.l.b16 %v2848
        %v2930 = vunpack.c.h.b16 %v2848
        %v2931 = vunpack.c.l.b16 %v2849
        %v2932 = vunpack.c.l.b16 %v2850
        %v2933 = vunpack.c.h.b16 %v2850
        %v2934 = vunpack.c.l.b16 %v2851
        %v2935 = vunpack.c.l.b16 %v2852
        %v2936 = vunpack.c.h.b16 %v2852
        %v2937 = vunpack.c.l.b16 %v2853
        %v2938 = vpack.c.b16 %v2893, %v2890
        %v2939 = vpack.c.b16 %v2894, %v2891
        %v2940 = vpack.c.b16 %v2895, %v2892
        %v2941 = vpack.c.b16 %v2899, %v2896
        %v2942 = vpack.c.b16 %v2900, %v2897
        %v2943 = vpack.c.b16 %v2901, %v2898
        %v2944 = vpack.c.b16 %v2905, %v2902
        %v2945 = vpack.c.b16 %v2906, %v2903
        %v2946 = vpack.c.b16 %v2907, %v2904
        %v2947 = vpack.c.b16 %v2911, %v2908
        %v2948 = vpack.c.b16 %v2912, %v2909
        %v2949 = vpack.c.b16 %v2913, %v2910
        %v2950 = vpack.c.b16 %v2917, %v2914
        %v2951 = vpack.c.b16 %v2918, %v2915
        %v2952 = vpack.c.b16 %v2919, %v2916
        %v2953 = vpack.c.b16 %v2923, %v2920
        %v2954 = vpack.c.b16 %v2924, %v2921
        %v2955 = vpack.c.b16 %v2925, %v2922
        %v2956 = vpack.c.b16 %v2929, %v2926
        %v2957 = vpack.c.b16 %v2930, %v2927
        %v2958 = vpack.c.b16 %v2931, %v2928
        %v2959 = vpack.c.b16 %v2935, %v2932
        %v2960 = vpack.c.b16 %v2936, %v2933
        %v2961 = vpack.c.b16 %v2937, %v2934
        %2986 = vmatpush.bf16.msra.mxu0 %v2959
        %2987 = vmatpush.bf16.msra.mxu0 %v2956
        %2988 = vmatpush.bf16.msra.mxu0 %v2953
        %2989 = vmatpush.bf16.msra.mxu0 %v2950
        %2990 = vmatpush.bf16.msra.mxu0 %v2947
        %2991 = vmatpush.bf16.msra.mxu0 %v2944
        %2992 = vmatpush.bf16.msra.mxu0 %v2941
        %2993 = vmatpush.bf16.msra.mxu0 %v2938
        %2994 = vmatmul.bf16.gmra.mxu0 %v2856
        %v2995 = vpop.f32.mrf.mxu0
        %v2996 = vadd.f32 0.0, %v2995
        %v2997 = vpop.f32.mrf.mxu0
        %2998 = vdwg.mxu0
        %2999 = vmatpush.bf16.msra.mxu0 %v2960
        %3000 = vmatpush.bf16.msra.mxu0 %v2957
        %3001 = vmatpush.bf16.msra.mxu0 %v2954
        %3002 = vmatpush.bf16.msra.mxu0 %v2951
        %3003 = vmatpush.bf16.msra.mxu0 %v2948
        %3004 = vmatpush.bf16.msra.mxu0 %v2945
        %3005 = vmatpush.bf16.msra.mxu0 %v2942
        %3006 = vmatpush.bf16.msra.mxu0 %v2939
        %3007 = vmatmul.bf16.gmra.mxu0 %v2856
        %v3008 = vpop.f32.mrf.mxu0
        %v3009 = vadd.f32 0.0, %v3008
        %v3010 = vpop.f32.mrf.mxu0
        %3011 = vdwg.mxu0
        %3012 = vmatpush.bf16.msra.mxu0 %v2961
        %3013 = vmatpush.bf16.msra.mxu0 %v2958
        %3014 = vmatpush.bf16.msra.mxu0 %v2955
        %3015 = vmatpush.bf16.msra.mxu0 %v2952
        %3016 = vmatpush.bf16.msra.mxu0 %v2949
        %3017 = vmatpush.bf16.msra.mxu0 %v2946
        %3018 = vmatpush.bf16.msra.mxu0 %v2943
        %3019 = vmatpush.bf16.msra.mxu0 %v2940
        %3020 = vmatmul.bf16.gmra.mxu0 %v2856
        %v3021 = vpop.f32.mrf.mxu0
        %v3022 = vadd.f32 0.0, %v3021
        %v3023 = vpop.f32.mrf.mxu0
        %3024 = vdwg.mxu0
        %v3025 = vadd.f32 %v2818, %v2996
        %v3026 = vadd.f32 %v2819, %v3009
        %v3027 = vadd.f32 %v2820, %v3022
        %v3028 = vld [vmem:[#allocation2 + $0x4] sm:$0x2]
        %v3029 = vld [vmem:[#allocation2 + $0x14] sm:$0x2]
        %s3030 = scalar_lea.vmem %s438, 1920 [#allocation10]
        %v3031 = vld [vmem:[%s3030] sm:$0xff]
        %v3032 = vld [vmem:[%s3030 + $0x8] sm:$0xf]
        %v3033 = vld [vmem:[%s3030 + $0xc] sm:$0xff]
        %v3034 = vld [vmem:[%s3030 + $0x14] sm:$0xf]
        %v3035 = vld [vmem:[%s3030 + $0x18] sm:$0xff]
        %v3036 = vld [vmem:[%s3030 + $0x20] sm:$0xf]
        %v3037 = vld [vmem:[%s3030 + $0x24] sm:$0xff]
        %v3038 = vld [vmem:[%s3030 + $0x2c] sm:$0xf]
        %v3039 = vld [vmem:[%s3030 + $0x30] sm:$0xff]
        %v3040 = vld [vmem:[%s3030 + $0x38] sm:$0xf]
        %v3041 = vld [vmem:[%s3030 + $0x3c] sm:$0xff]
        %v3042 = vld [vmem:[%s3030 + $0x44] sm:$0xf]
        %v3043 = vld [vmem:[%s3030 + $0x48] sm:$0xff]
        %v3044 = vld [vmem:[%s3030 + $0x50] sm:$0xf]
        %v3045 = vld [vmem:[%s3030 + $0x54] sm:$0xff]
        %v3046 = vld [vmem:[%s3030 + $0x5c] sm:$0xf]
        %v3047 = vld [vmem:[%s3030 + $0x60] sm:$0xff]
        %v3048 = vld [vmem:[%s3030 + $0x68] sm:$0xf]
        %v3049 = vld [vmem:[%s3030 + $0x6c] sm:$0xff]
        %v3050 = vld [vmem:[%s3030 + $0x74] sm:$0xf]
        %v3051 = vld [vmem:[%s3030 + $0x78] sm:$0xff]
        %v3052 = vld [vmem:[%s3030 + $0x80] sm:$0xf]
        %v3053 = vld [vmem:[%s3030 + $0x84] sm:$0xff]
        %v3054 = vld [vmem:[%s3030 + $0x8c] sm:$0xf]
        %v3055 = vld [vmem:[%s3030 + $0x90] sm:$0xff]
        %v3056 = vld [vmem:[%s3030 + $0x98] sm:$0xf]
        %v3057 = vld [vmem:[%s3030 + $0x9c] sm:$0xff]
        %v3058 = vld [vmem:[%s3030 + $0xa4] sm:$0xf]
        %v3059 = vld [vmem:[%s3030 + $0xa8] sm:$0xff]
        %v3060 = vld [vmem:[%s3030 + $0xb0] sm:$0xf]
        %v3061 = vld [vmem:[%s3030 + $0xb4] sm:$0xff]
        %v3062 = vld [vmem:[%s3030 + $0xbc] sm:$0xf]
        %v3065 = vunpack.c.l.b16 %v3028
        %v3066 = vunpack.c.l.b16 %v3029
        %v3067 = vpack.c.b16 %v3065, %v3065
        %v3068 = vpack.c.b16 %v3066, %v3066
        %v3069 = vunpack.c.l.b16 %v3067
        %v3070 = vunpack.c.l.b16 %v3068
        %v3071 = vrot.slane %v3069, 2
        %v3072 = vrot.slane %v3070, 1
        %v3073 = vsel %vm984, %v3072, %v3071
        %v3074 = vpack.c.b16 %v3073, %v3073
        %v3108 = vunpack.c.l.b16 %v3031
        %v3109 = vunpack.c.h.b16 %v3031
        %v3110 = vunpack.c.l.b16 %v3032
        %v3111 = vunpack.c.l.b16 %v3033
        %v3112 = vunpack.c.h.b16 %v3033
        %v3113 = vunpack.c.l.b16 %v3034
        %v3114 = vunpack.c.l.b16 %v3035
        %v3115 = vunpack.c.h.b16 %v3035
        %v3116 = vunpack.c.l.b16 %v3036
        %v3117 = vunpack.c.l.b16 %v3037
        %v3118 = vunpack.c.h.b16 %v3037
        %v3119 = vunpack.c.l.b16 %v3038
        %v3120 = vunpack.c.l.b16 %v3039
        %v3121 = vunpack.c.h.b16 %v3039
        %v3122 = vunpack.c.l.b16 %v3040
        %v3123 = vunpack.c.l.b16 %v3041
        %v3124 = vunpack.c.h.b16 %v3041
        %v3125 = vunpack.c.l.b16 %v3042
        %v3126 = vunpack.c.l.b16 %v3043
        %v3127 = vunpack.c.h.b16 %v3043
        %v3128 = vunpack.c.l.b16 %v3044
        %v3129 = vunpack.c.l.b16 %v3045
        %v3130 = vunpack.c.h.b16 %v3045
        %v3131 = vunpack.c.l.b16 %v3046
        %v3132 = vunpack.c.l.b16 %v3047
        %v3133 = vunpack.c.h.b16 %v3047
        %v3134 = vunpack.c.l.b16 %v3048
        %v3135 = vunpack.c.l.b16 %v3049
        %v3136 = vunpack.c.h.b16 %v3049
        %v3137 = vunpack.c.l.b16 %v3050
        %v3138 = vunpack.c.l.b16 %v3051
        %v3139 = vunpack.c.h.b16 %v3051
        %v3140 = vunpack.c.l.b16 %v3052
        %v3141 = vunpack.c.l.b16 %v3053
        %v3142 = vunpack.c.h.b16 %v3053
        %v3143 = vunpack.c.l.b16 %v3054
        %v3144 = vunpack.c.l.b16 %v3055
        %v3145 = vunpack.c.h.b16 %v3055
        %v3146 = vunpack.c.l.b16 %v3056
        %v3147 = vunpack.c.l.b16 %v3057
        %v3148 = vunpack.c.h.b16 %v3057
        %v3149 = vunpack.c.l.b16 %v3058
        %v3150 = vunpack.c.l.b16 %v3059
        %v3151 = vunpack.c.h.b16 %v3059
        %v3152 = vunpack.c.l.b16 %v3060
        %v3153 = vunpack.c.l.b16 %v3061
        %v3154 = vunpack.c.h.b16 %v3061
        %v3155 = vunpack.c.l.b16 %v3062
        %v3156 = vpack.c.b16 %v3111, %v3108
        %v3157 = vpack.c.b16 %v3112, %v3109
        %v3158 = vpack.c.b16 %v3113, %v3110
        %v3159 = vpack.c.b16 %v3117, %v3114
        %v3160 = vpack.c.b16 %v3118, %v3115
        %v3161 = vpack.c.b16 %v3119, %v3116
        %v3162 = vpack.c.b16 %v3123, %v3120
        %v3163 = vpack.c.b16 %v3124, %v3121
        %v3164 = vpack.c.b16 %v3125, %v3122
        %v3165 = vpack.c.b16 %v3129, %v3126
        %v3166 = vpack.c.b16 %v3130, %v3127
        %v3167 = vpack.c.b16 %v3131, %v3128
        %v3168 = vpack.c.b16 %v3135, %v3132
        %v3169 = vpack.c.b16 %v3136, %v3133
        %v3170 = vpack.c.b16 %v3137, %v3134
        %v3171 = vpack.c.b16 %v3141, %v3138
        %v3172 = vpack.c.b16 %v3142, %v3139
        %v3173 = vpack.c.b16 %v3143, %v3140
        %v3174 = vpack.c.b16 %v3147, %v3144
        %v3175 = vpack.c.b16 %v3148, %v3145
        %v3176 = vpack.c.b16 %v3149, %v3146
        %v3177 = vpack.c.b16 %v3153, %v3150
        %v3178 = vpack.c.b16 %v3154, %v3151
        %v3179 = vpack.c.b16 %v3155, %v3152
        %3204 = vmatpush.bf16.msra.mxu0 %v3177
        %3205 = vmatpush.bf16.msra.mxu0 %v3174
        %3206 = vmatpush.bf16.msra.mxu0 %v3171
        %3207 = vmatpush.bf16.msra.mxu0 %v3168
        %3208 = vmatpush.bf16.msra.mxu0 %v3165
        %3209 = vmatpush.bf16.msra.mxu0 %v3162
        %3210 = vmatpush.bf16.msra.mxu0 %v3159
        %3211 = vmatpush.bf16.msra.mxu0 %v3156
        %3212 = vmatmul.bf16.gmra.mxu0 %v3074
        %v3213 = vpop.f32.mrf.mxu0
        %v3214 = vadd.f32 0.0, %v3213
        %v3215 = vpop.f32.mrf.mxu0
        %3216 = vdwg.mxu0
        %3217 = vmatpush.bf16.msra.mxu0 %v3178
        %3218 = vmatpush.bf16.msra.mxu0 %v3175
        %3219 = vmatpush.bf16.msra.mxu0 %v3172
        %3220 = vmatpush.bf16.msra.mxu0 %v3169
        %3221 = vmatpush.bf16.msra.mxu0 %v3166
        %3222 = vmatpush.bf16.msra.mxu0 %v3163
        %3223 = vmatpush.bf16.msra.mxu0 %v3160
        %3224 = vmatpush.bf16.msra.mxu0 %v3157
        %3225 = vmatmul.bf16.gmra.mxu0 %v3074
        %v3226 = vpop.f32.mrf.mxu0
        %v3227 = vadd.f32 0.0, %v3226
        %v3228 = vpop.f32.mrf.mxu0
        %3229 = vdwg.mxu0
        %3230 = vmatpush.bf16.msra.mxu0 %v3179
        %3231 = vmatpush.bf16.msra.mxu0 %v3176
        %3232 = vmatpush.bf16.msra.mxu0 %v3173
        %3233 = vmatpush.bf16.msra.mxu0 %v3170
        %3234 = vmatpush.bf16.msra.mxu0 %v3167
        %3235 = vmatpush.bf16.msra.mxu0 %v3164
        %3236 = vmatpush.bf16.msra.mxu0 %v3161
        %3237 = vmatpush.bf16.msra.mxu0 %v3158
        %3238 = vmatmul.bf16.gmra.mxu0 %v3074
        %v3239 = vpop.f32.mrf.mxu0
        %v3240 = vadd.f32 0.0, %v3239
        %v3241 = vpop.f32.mrf.mxu0
        %3242 = vdwg.mxu0
        %v3243 = vadd.f32 %v3025, %v3214
        %v3244 = vadd.f32 %v3026, %v3227
        %v3245 = vadd.f32 %v3027, %v3240
        %s3246 = scalar_lea.vmem %s438, 2112 [#allocation10]
        %v3247 = vld [vmem:[%s3246] sm:$0xff]
        %v3248 = vld [vmem:[%s3246 + $0x8] sm:$0xf]
        %v3249 = vld [vmem:[%s3246 + $0xc] sm:$0xff]
        %v3250 = vld [vmem:[%s3246 + $0x14] sm:$0xf]
        %v3251 = vld [vmem:[%s3246 + $0x18] sm:$0xff]
        %v3252 = vld [vmem:[%s3246 + $0x20] sm:$0xf]
        %v3253 = vld [vmem:[%s3246 + $0x24] sm:$0xff]
        %v3254 = vld [vmem:[%s3246 + $0x2c] sm:$0xf]
        %v3255 = vld [vmem:[%s3246 + $0x30] sm:$0xff]
        %v3256 = vld [vmem:[%s3246 + $0x38] sm:$0xf]
        %v3257 = vld [vmem:[%s3246 + $0x3c] sm:$0xff]
        %v3258 = vld [vmem:[%s3246 + $0x44] sm:$0xf]
        %v3259 = vld [vmem:[%s3246 + $0x48] sm:$0xff]
        %v3260 = vld [vmem:[%s3246 + $0x50] sm:$0xf]
        %v3261 = vld [vmem:[%s3246 + $0x54] sm:$0xff]
        %v3262 = vld [vmem:[%s3246 + $0x5c] sm:$0xf]
        %v3263 = vld [vmem:[%s3246 + $0x60] sm:$0xff]
        %v3264 = vld [vmem:[%s3246 + $0x68] sm:$0xf]
        %v3265 = vld [vmem:[%s3246 + $0x6c] sm:$0xff]
        %v3266 = vld [vmem:[%s3246 + $0x74] sm:$0xf]
        %v3267 = vld [vmem:[%s3246 + $0x78] sm:$0xff]
        %v3268 = vld [vmem:[%s3246 + $0x80] sm:$0xf]
        %v3269 = vld [vmem:[%s3246 + $0x84] sm:$0xff]
        %v3270 = vld [vmem:[%s3246 + $0x8c] sm:$0xf]
        %v3271 = vld [vmem:[%s3246 + $0x90] sm:$0xff]
        %v3272 = vld [vmem:[%s3246 + $0x98] sm:$0xf]
        %v3273 = vld [vmem:[%s3246 + $0x9c] sm:$0xff]
        %v3274 = vld [vmem:[%s3246 + $0xa4] sm:$0xf]
        %v3275 = vld [vmem:[%s3246 + $0xa8] sm:$0xff]
        %v3276 = vld [vmem:[%s3246 + $0xb0] sm:$0xf]
        %v3277 = vld [vmem:[%s3246 + $0xb4] sm:$0xff]
        %v3278 = vld [vmem:[%s3246 + $0xbc] sm:$0xf]
        %v3279 = vrot.slane %v3069, 3
        %v3280 = vrot.slane %v3070, 2
        %v3281 = vsel %vm984, %v3280, %v3279
        %v3282 = vpack.c.b16 %v3281, %v3281
        %v3316 = vunpack.c.l.b16 %v3247
        %v3317 = vunpack.c.h.b16 %v3247
        %v3318 = vunpack.c.l.b16 %v3248
        %v3319 = vunpack.c.l.b16 %v3249
        %v3320 = vunpack.c.h.b16 %v3249
        %v3321 = vunpack.c.l.b16 %v3250
        %v3322 = vunpack.c.l.b16 %v3251
        %v3323 = vunpack.c.h.b16 %v3251
        %v3324 = vunpack.c.l.b16 %v3252
        %v3325 = vunpack.c.l.b16 %v3253
        %v3326 = vunpack.c.h.b16 %v3253
        %v3327 = vunpack.c.l.b16 %v3254
        %v3328 = vunpack.c.l.b16 %v3255
        %v3329 = vunpack.c.h.b16 %v3255
        %v3330 = vunpack.c.l.b16 %v3256
        %v3331 = vunpack.c.l.b16 %v3257
        %v3332 = vunpack.c.h.b16 %v3257
        %v3333 = vunpack.c.l.b16 %v3258
        %v3334 = vunpack.c.l.b16 %v3259
        %v3335 = vunpack.c.h.b16 %v3259
        %v3336 = vunpack.c.l.b16 %v3260
        %v3337 = vunpack.c.l.b16 %v3261
        %v3338 = vunpack.c.h.b16 %v3261
        %v3339 = vunpack.c.l.b16 %v3262
        %v3340 = vunpack.c.l.b16 %v3263
        %v3341 = vunpack.c.h.b16 %v3263
        %v3342 = vunpack.c.l.b16 %v3264
        %v3343 = vunpack.c.l.b16 %v3265
        %v3344 = vunpack.c.h.b16 %v3265
        %v3345 = vunpack.c.l.b16 %v3266
        %v3346 = vunpack.c.l.b16 %v3267
        %v3347 = vunpack.c.h.b16 %v3267
        %v3348 = vunpack.c.l.b16 %v3268
        %v3349 = vunpack.c.l.b16 %v3269
        %v3350 = vunpack.c.h.b16 %v3269
        %v3351 = vunpack.c.l.b16 %v3270
        %v3352 = vunpack.c.l.b16 %v3271
        %v3353 = vunpack.c.h.b16 %v3271
        %v3354 = vunpack.c.l.b16 %v3272
        %v3355 = vunpack.c.l.b16 %v3273
        %v3356 = vunpack.c.h.b16 %v3273
        %v3357 = vunpack.c.l.b16 %v3274
        %v3358 = vunpack.c.l.b16 %v3275
        %v3359 = vunpack.c.h.b16 %v3275
        %v3360 = vunpack.c.l.b16 %v3276
        %v3361 = vunpack.c.l.b16 %v3277
        %v3362 = vunpack.c.h.b16 %v3277
        %v3363 = vunpack.c.l.b16 %v3278
        %v3364 = vpack.c.b16 %v3319, %v3316
        %v3365 = vpack.c.b16 %v3320, %v3317
        %v3366 = vpack.c.b16 %v3321, %v3318
        %v3367 = vpack.c.b16 %v3325, %v3322
        %v3368 = vpack.c.b16 %v3326, %v3323
        %v3369 = vpack.c.b16 %v3327, %v3324
        %v3370 = vpack.c.b16 %v3331, %v3328
        %v3371 = vpack.c.b16 %v3332, %v3329
        %v3372 = vpack.c.b16 %v3333, %v3330
        %v3373 = vpack.c.b16 %v3337, %v3334
        %v3374 = vpack.c.b16 %v3338, %v3335
        %v3375 = vpack.c.b16 %v3339, %v3336
        %v3376 = vpack.c.b16 %v3343, %v3340
        %v3377 = vpack.c.b16 %v3344, %v3341
        %v3378 = vpack.c.b16 %v3345, %v3342
        %v3379 = vpack.c.b16 %v3349, %v3346
        %v3380 = vpack.c.b16 %v3350, %v3347
        %v3381 = vpack.c.b16 %v3351, %v3348
        %v3382 = vpack.c.b16 %v3355, %v3352
        %v3383 = vpack.c.b16 %v3356, %v3353
        %v3384 = vpack.c.b16 %v3357, %v3354
        %v3385 = vpack.c.b16 %v3361, %v3358
        %v3386 = vpack.c.b16 %v3362, %v3359
        %v3387 = vpack.c.b16 %v3363, %v3360
        %3412 = vmatpush.bf16.msra.mxu0 %v3385
        %3413 = vmatpush.bf16.msra.mxu0 %v3382
        %3414 = vmatpush.bf16.msra.mxu0 %v3379
        %3415 = vmatpush.bf16.msra.mxu0 %v3376
        %3416 = vmatpush.bf16.msra.mxu0 %v3373
        %3417 = vmatpush.bf16.msra.mxu0 %v3370
        %3418 = vmatpush.bf16.msra.mxu0 %v3367
        %3419 = vmatpush.bf16.msra.mxu0 %v3364
        %3420 = vmatmul.bf16.gmra.mxu0 %v3282
        %v3421 = vpop.f32.mrf.mxu0
        %v3422 = vadd.f32 0.0, %v3421
        %v3423 = vpop.f32.mrf.mxu0
        %3424 = vdwg.mxu0
        %3425 = vmatpush.bf16.msra.mxu0 %v3386
        %3426 = vmatpush.bf16.msra.mxu0 %v3383
        %3427 = vmatpush.bf16.msra.mxu0 %v3380
        %3428 = vmatpush.bf16.msra.mxu0 %v3377
        %3429 = vmatpush.bf16.msra.mxu0 %v3374
        %3430 = vmatpush.bf16.msra.mxu0 %v3371
        %3431 = vmatpush.bf16.msra.mxu0 %v3368
        %3432 = vmatpush.bf16.msra.mxu0 %v3365
        %3433 = vmatmul.bf16.gmra.mxu0 %v3282
        %v3434 = vpop.f32.mrf.mxu0
        %v3435 = vadd.f32 0.0, %v3434
        %v3436 = vpop.f32.mrf.mxu0
        %3437 = vdwg.mxu0
        %3438 = vmatpush.bf16.msra.mxu0 %v3387
        %3439 = vmatpush.bf16.msra.mxu0 %v3384
        %3440 = vmatpush.bf16.msra.mxu0 %v3381
        %3441 = vmatpush.bf16.msra.mxu0 %v3378
        %3442 = vmatpush.bf16.msra.mxu0 %v3375
        %3443 = vmatpush.bf16.msra.mxu0 %v3372
        %3444 = vmatpush.bf16.msra.mxu0 %v3369
        %3445 = vmatpush.bf16.msra.mxu0 %v3366
        %3446 = vmatmul.bf16.gmra.mxu0 %v3282
        %v3447 = vpop.f32.mrf.mxu0
        %v3448 = vadd.f32 0.0, %v3447
        %v3449 = vpop.f32.mrf.mxu0
        %3450 = vdwg.mxu0
        %v3451 = vadd.f32 %v3243, %v3422
        %v3452 = vadd.f32 %v3244, %v3435
        %v3453 = vadd.f32 %v3245, %v3448
        %v3454 = vld [vmem:[#allocation2 + $0x4] sm:$0x4]
        %v3455 = vld [vmem:[#allocation2 + $0x14] sm:$0x4]
        %s3456 = scalar_lea.vmem %s438, 2304 [#allocation10]
        %v3457 = vld [vmem:[%s3456] sm:$0xff]
        %v3458 = vld [vmem:[%s3456 + $0x8] sm:$0xf]
        %v3459 = vld [vmem:[%s3456 + $0xc] sm:$0xff]
        %v3460 = vld [vmem:[%s3456 + $0x14] sm:$0xf]
        %v3461 = vld [vmem:[%s3456 + $0x18] sm:$0xff]
        %v3462 = vld [vmem:[%s3456 + $0x20] sm:$0xf]
        %v3463 = vld [vmem:[%s3456 + $0x24] sm:$0xff]
        %v3464 = vld [vmem:[%s3456 + $0x2c] sm:$0xf]
        %v3465 = vld [vmem:[%s3456 + $0x30] sm:$0xff]
        %v3466 = vld [vmem:[%s3456 + $0x38] sm:$0xf]
        %v3467 = vld [vmem:[%s3456 + $0x3c] sm:$0xff]
        %v3468 = vld [vmem:[%s3456 + $0x44] sm:$0xf]
        %v3469 = vld [vmem:[%s3456 + $0x48] sm:$0xff]
        %v3470 = vld [vmem:[%s3456 + $0x50] sm:$0xf]
        %v3471 = vld [vmem:[%s3456 + $0x54] sm:$0xff]
        %v3472 = vld [vmem:[%s3456 + $0x5c] sm:$0xf]
        %v3473 = vld [vmem:[%s3456 + $0x60] sm:$0xff]
        %v3474 = vld [vmem:[%s3456 + $0x68] sm:$0xf]
        %v3475 = vld [vmem:[%s3456 + $0x6c] sm:$0xff]
        %v3476 = vld [vmem:[%s3456 + $0x74] sm:$0xf]
        %v3477 = vld [vmem:[%s3456 + $0x78] sm:$0xff]
        %v3478 = vld [vmem:[%s3456 + $0x80] sm:$0xf]
        %v3479 = vld [vmem:[%s3456 + $0x84] sm:$0xff]
        %v3480 = vld [vmem:[%s3456 + $0x8c] sm:$0xf]
        %v3481 = vld [vmem:[%s3456 + $0x90] sm:$0xff]
        %v3482 = vld [vmem:[%s3456 + $0x98] sm:$0xf]
        %v3483 = vld [vmem:[%s3456 + $0x9c] sm:$0xff]
        %v3484 = vld [vmem:[%s3456 + $0xa4] sm:$0xf]
        %v3485 = vld [vmem:[%s3456 + $0xa8] sm:$0xff]
        %v3486 = vld [vmem:[%s3456 + $0xb0] sm:$0xf]
        %v3487 = vld [vmem:[%s3456 + $0xb4] sm:$0xff]
        %v3488 = vld [vmem:[%s3456 + $0xbc] sm:$0xf]
        %v3491 = vunpack.c.l.b16 %v3454
        %v3492 = vunpack.c.l.b16 %v3455
        %v3493 = vpack.c.b16 %v3491, %v3491
        %v3494 = vpack.c.b16 %v3492, %v3492
        %v3495 = vunpack.c.l.b16 %v3493
        %v3496 = vunpack.c.l.b16 %v3494
        %v3497 = vrot.slane %v3495, 4
        %v3498 = vrot.slane %v3496, 3
        %v3499 = vsel %vm984, %v3498, %v3497
        %v3500 = vpack.c.b16 %v3499, %v3499
        %v3534 = vunpack.c.l.b16 %v3457
        %v3535 = vunpack.c.h.b16 %v3457
        %v3536 = vunpack.c.l.b16 %v3458
        %v3537 = vunpack.c.l.b16 %v3459
        %v3538 = vunpack.c.h.b16 %v3459
        %v3539 = vunpack.c.l.b16 %v3460
        %v3540 = vunpack.c.l.b16 %v3461
        %v3541 = vunpack.c.h.b16 %v3461
        %v3542 = vunpack.c.l.b16 %v3462
        %v3543 = vunpack.c.l.b16 %v3463
        %v3544 = vunpack.c.h.b16 %v3463
        %v3545 = vunpack.c.l.b16 %v3464
        %v3546 = vunpack.c.l.b16 %v3465
        %v3547 = vunpack.c.h.b16 %v3465
        %v3548 = vunpack.c.l.b16 %v3466
        %v3549 = vunpack.c.l.b16 %v3467
        %v3550 = vunpack.c.h.b16 %v3467
        %v3551 = vunpack.c.l.b16 %v3468
        %v3552 = vunpack.c.l.b16 %v3469
        %v3553 = vunpack.c.h.b16 %v3469
        %v3554 = vunpack.c.l.b16 %v3470
        %v3555 = vunpack.c.l.b16 %v3471
        %v3556 = vunpack.c.h.b16 %v3471
        %v3557 = vunpack.c.l.b16 %v3472
        %v3558 = vunpack.c.l.b16 %v3473
        %v3559 = vunpack.c.h.b16 %v3473
        %v3560 = vunpack.c.l.b16 %v3474
        %v3561 = vunpack.c.l.b16 %v3475
        %v3562 = vunpack.c.h.b16 %v3475
        %v3563 = vunpack.c.l.b16 %v3476
        %v3564 = vunpack.c.l.b16 %v3477
        %v3565 = vunpack.c.h.b16 %v3477
        %v3566 = vunpack.c.l.b16 %v3478
        %v3567 = vunpack.c.l.b16 %v3479
        %v3568 = vunpack.c.h.b16 %v3479
        %v3569 = vunpack.c.l.b16 %v3480
        %v3570 = vunpack.c.l.b16 %v3481
        %v3571 = vunpack.c.h.b16 %v3481
        %v3572 = vunpack.c.l.b16 %v3482
        %v3573 = vunpack.c.l.b16 %v3483
        %v3574 = vunpack.c.h.b16 %v3483
        %v3575 = vunpack.c.l.b16 %v3484
        %v3576 = vunpack.c.l.b16 %v3485
        %v3577 = vunpack.c.h.b16 %v3485
        %v3578 = vunpack.c.l.b16 %v3486
        %v3579 = vunpack.c.l.b16 %v3487
        %v3580 = vunpack.c.h.b16 %v3487
        %v3581 = vunpack.c.l.b16 %v3488
        %v3582 = vpack.c.b16 %v3537, %v3534
        %v3583 = vpack.c.b16 %v3538, %v3535
        %v3584 = vpack.c.b16 %v3539, %v3536
        %v3585 = vpack.c.b16 %v3543, %v3540
        %v3586 = vpack.c.b16 %v3544, %v3541
        %v3587 = vpack.c.b16 %v3545, %v3542
        %v3588 = vpack.c.b16 %v3549, %v3546
        %v3589 = vpack.c.b16 %v3550, %v3547
        %v3590 = vpack.c.b16 %v3551, %v3548
        %v3591 = vpack.c.b16 %v3555, %v3552
        %v3592 = vpack.c.b16 %v3556, %v3553
        %v3593 = vpack.c.b16 %v3557, %v3554
        %v3594 = vpack.c.b16 %v3561, %v3558
        %v3595 = vpack.c.b16 %v3562, %v3559
        %v3596 = vpack.c.b16 %v3563, %v3560
        %v3597 = vpack.c.b16 %v3567, %v3564
        %v3598 = vpack.c.b16 %v3568, %v3565
        %v3599 = vpack.c.b16 %v3569, %v3566
        %v3600 = vpack.c.b16 %v3573, %v3570
        %v3601 = vpack.c.b16 %v3574, %v3571
        %v3602 = vpack.c.b16 %v3575, %v3572
        %v3603 = vpack.c.b16 %v3579, %v3576
        %v3604 = vpack.c.b16 %v3580, %v3577
        %v3605 = vpack.c.b16 %v3581, %v3578
        %3630 = vmatpush.bf16.msra.mxu0 %v3603
        %3631 = vmatpush.bf16.msra.mxu0 %v3600
        %3632 = vmatpush.bf16.msra.mxu0 %v3597
        %3633 = vmatpush.bf16.msra.mxu0 %v3594
        %3634 = vmatpush.bf16.msra.mxu0 %v3591
        %3635 = vmatpush.bf16.msra.mxu0 %v3588
        %3636 = vmatpush.bf16.msra.mxu0 %v3585
        %3637 = vmatpush.bf16.msra.mxu0 %v3582
        %3638 = vmatmul.bf16.gmra.mxu0 %v3500
        %v3639 = vpop.f32.mrf.mxu0
        %v3640 = vadd.f32 0.0, %v3639
        %v3641 = vpop.f32.mrf.mxu0
        %3642 = vdwg.mxu0
        %3643 = vmatpush.bf16.msra.mxu0 %v3604
        %3644 = vmatpush.bf16.msra.mxu0 %v3601
        %3645 = vmatpush.bf16.msra.mxu0 %v3598
        %3646 = vmatpush.bf16.msra.mxu0 %v3595
        %3647 = vmatpush.bf16.msra.mxu0 %v3592
        %3648 = vmatpush.bf16.msra.mxu0 %v3589
        %3649 = vmatpush.bf16.msra.mxu0 %v3586
        %3650 = vmatpush.bf16.msra.mxu0 %v3583
        %3651 = vmatmul.bf16.gmra.mxu0 %v3500
        %v3652 = vpop.f32.mrf.mxu0
        %v3653 = vadd.f32 0.0, %v3652
        %v3654 = vpop.f32.mrf.mxu0
        %3655 = vdwg.mxu0
        %3656 = vmatpush.bf16.msra.mxu0 %v3605
        %3657 = vmatpush.bf16.msra.mxu0 %v3602
        %3658 = vmatpush.bf16.msra.mxu0 %v3599
        %3659 = vmatpush.bf16.msra.mxu0 %v3596
        %3660 = vmatpush.bf16.msra.mxu0 %v3593
        %3661 = vmatpush.bf16.msra.mxu0 %v3590
        %3662 = vmatpush.bf16.msra.mxu0 %v3587
        %3663 = vmatpush.bf16.msra.mxu0 %v3584
        %3664 = vmatmul.bf16.gmra.mxu0 %v3500
        %v3665 = vpop.f32.mrf.mxu0
        %v3666 = vadd.f32 0.0, %v3665
        %v3667 = vpop.f32.mrf.mxu0
        %3668 = vdwg.mxu0
        %v3669 = vadd.f32 %v3451, %v3640
        %v3670 = vadd.f32 %v3452, %v3653
        %v3671 = vadd.f32 %v3453, %v3666
        %s3672 = scalar_lea.vmem %s438, 2496 [#allocation10]
        %v3673 = vld [vmem:[%s3672] sm:$0xff]
        %v3674 = vld [vmem:[%s3672 + $0x8] sm:$0xf]
        %v3675 = vld [vmem:[%s3672 + $0xc] sm:$0xff]
        %v3676 = vld [vmem:[%s3672 + $0x14] sm:$0xf]
        %v3677 = vld [vmem:[%s3672 + $0x18] sm:$0xff]
        %v3678 = vld [vmem:[%s3672 + $0x20] sm:$0xf]
        %v3679 = vld [vmem:[%s3672 + $0x24] sm:$0xff]
        %v3680 = vld [vmem:[%s3672 + $0x2c] sm:$0xf]
        %v3681 = vld [vmem:[%s3672 + $0x30] sm:$0xff]
        %v3682 = vld [vmem:[%s3672 + $0x38] sm:$0xf]
        %v3683 = vld [vmem:[%s3672 + $0x3c] sm:$0xff]
        %v3684 = vld [vmem:[%s3672 + $0x44] sm:$0xf]
        %v3685 = vld [vmem:[%s3672 + $0x48] sm:$0xff]
        %v3686 = vld [vmem:[%s3672 + $0x50] sm:$0xf]
        %v3687 = vld [vmem:[%s3672 + $0x54] sm:$0xff]
        %v3688 = vld [vmem:[%s3672 + $0x5c] sm:$0xf]
        %v3689 = vld [vmem:[%s3672 + $0x60] sm:$0xff]
        %v3690 = vld [vmem:[%s3672 + $0x68] sm:$0xf]
        %v3691 = vld [vmem:[%s3672 + $0x6c] sm:$0xff]
        %v3692 = vld [vmem:[%s3672 + $0x74] sm:$0xf]
        %v3693 = vld [vmem:[%s3672 + $0x78] sm:$0xff]
        %v3694 = vld [vmem:[%s3672 + $0x80] sm:$0xf]
        %v3695 = vld [vmem:[%s3672 + $0x84] sm:$0xff]
        %v3696 = vld [vmem:[%s3672 + $0x8c] sm:$0xf]
        %v3697 = vld [vmem:[%s3672 + $0x90] sm:$0xff]
        %v3698 = vld [vmem:[%s3672 + $0x98] sm:$0xf]
        %v3699 = vld [vmem:[%s3672 + $0x9c] sm:$0xff]
        %v3700 = vld [vmem:[%s3672 + $0xa4] sm:$0xf]
        %v3701 = vld [vmem:[%s3672 + $0xa8] sm:$0xff]
        %v3702 = vld [vmem:[%s3672 + $0xb0] sm:$0xf]
        %v3703 = vld [vmem:[%s3672 + $0xb4] sm:$0xff]
        %v3704 = vld [vmem:[%s3672 + $0xbc] sm:$0xf]
        %v3705 = vrot.slane %v3495, 5
        %v3706 = vrot.slane %v3496, 4
        %v3707 = vsel %vm984, %v3706, %v3705
        %v3708 = vpack.c.b16 %v3707, %v3707
        %v3742 = vunpack.c.l.b16 %v3673
        %v3743 = vunpack.c.h.b16 %v3673
        %v3744 = vunpack.c.l.b16 %v3674
        %v3745 = vunpack.c.l.b16 %v3675
        %v3746 = vunpack.c.h.b16 %v3675
        %v3747 = vunpack.c.l.b16 %v3676
        %v3748 = vunpack.c.l.b16 %v3677
        %v3749 = vunpack.c.h.b16 %v3677
        %v3750 = vunpack.c.l.b16 %v3678
        %v3751 = vunpack.c.l.b16 %v3679
        %v3752 = vunpack.c.h.b16 %v3679
        %v3753 = vunpack.c.l.b16 %v3680
        %v3754 = vunpack.c.l.b16 %v3681
        %v3755 = vunpack.c.h.b16 %v3681
        %v3756 = vunpack.c.l.b16 %v3682
        %v3757 = vunpack.c.l.b16 %v3683
        %v3758 = vunpack.c.h.b16 %v3683
        %v3759 = vunpack.c.l.b16 %v3684
        %v3760 = vunpack.c.l.b16 %v3685
        %v3761 = vunpack.c.h.b16 %v3685
        %v3762 = vunpack.c.l.b16 %v3686
        %v3763 = vunpack.c.l.b16 %v3687
        %v3764 = vunpack.c.h.b16 %v3687
        %v3765 = vunpack.c.l.b16 %v3688
        %v3766 = vunpack.c.l.b16 %v3689
        %v3767 = vunpack.c.h.b16 %v3689
        %v3768 = vunpack.c.l.b16 %v3690
        %v3769 = vunpack.c.l.b16 %v3691
        %v3770 = vunpack.c.h.b16 %v3691
        %v3771 = vunpack.c.l.b16 %v3692
        %v3772 = vunpack.c.l.b16 %v3693
        %v3773 = vunpack.c.h.b16 %v3693
        %v3774 = vunpack.c.l.b16 %v3694
        %v3775 = vunpack.c.l.b16 %v3695
        %v3776 = vunpack.c.h.b16 %v3695
        %v3777 = vunpack.c.l.b16 %v3696
        %v3778 = vunpack.c.l.b16 %v3697
        %v3779 = vunpack.c.h.b16 %v3697
        %v3780 = vunpack.c.l.b16 %v3698
        %v3781 = vunpack.c.l.b16 %v3699
        %v3782 = vunpack.c.h.b16 %v3699
        %v3783 = vunpack.c.l.b16 %v3700
        %v3784 = vunpack.c.l.b16 %v3701
        %v3785 = vunpack.c.h.b16 %v3701
        %v3786 = vunpack.c.l.b16 %v3702
        %v3787 = vunpack.c.l.b16 %v3703
        %v3788 = vunpack.c.h.b16 %v3703
        %v3789 = vunpack.c.l.b16 %v3704
        %v3790 = vpack.c.b16 %v3745, %v3742
        %v3791 = vpack.c.b16 %v3746, %v3743
        %v3792 = vpack.c.b16 %v3747, %v3744
        %v3793 = vpack.c.b16 %v3751, %v3748
        %v3794 = vpack.c.b16 %v3752, %v3749
        %v3795 = vpack.c.b16 %v3753, %v3750
        %v3796 = vpack.c.b16 %v3757, %v3754
        %v3797 = vpack.c.b16 %v3758, %v3755
        %v3798 = vpack.c.b16 %v3759, %v3756
        %v3799 = vpack.c.b16 %v3763, %v3760
        %v3800 = vpack.c.b16 %v3764, %v3761
        %v3801 = vpack.c.b16 %v3765, %v3762
        %v3802 = vpack.c.b16 %v3769, %v3766
        %v3803 = vpack.c.b16 %v3770, %v3767
        %v3804 = vpack.c.b16 %v3771, %v3768
        %v3805 = vpack.c.b16 %v3775, %v3772
        %v3806 = vpack.c.b16 %v3776, %v3773
        %v3807 = vpack.c.b16 %v3777, %v3774
        %v3808 = vpack.c.b16 %v3781, %v3778
        %v3809 = vpack.c.b16 %v3782, %v3779
        %v3810 = vpack.c.b16 %v3783, %v3780
        %v3811 = vpack.c.b16 %v3787, %v3784
        %v3812 = vpack.c.b16 %v3788, %v3785
        %v3813 = vpack.c.b16 %v3789, %v3786
        %3838 = vmatpush.bf16.msra.mxu0 %v3811
        %3839 = vmatpush.bf16.msra.mxu0 %v3808
        %3840 = vmatpush.bf16.msra.mxu0 %v3805
        %3841 = vmatpush.bf16.msra.mxu0 %v3802
        %3842 = vmatpush.bf16.msra.mxu0 %v3799
        %3843 = vmatpush.bf16.msra.mxu0 %v3796
        %3844 = vmatpush.bf16.msra.mxu0 %v3793
        %3845 = vmatpush.bf16.msra.mxu0 %v3790
        %3846 = vmatmul.bf16.gmra.mxu0 %v3708
        %v3847 = vpop.f32.mrf.mxu0
        %v3848 = vadd.f32 0.0, %v3847
        %v3849 = vpop.f32.mrf.mxu0
        %3850 = vdwg.mxu0
        %3851 = vmatpush.bf16.msra.mxu0 %v3812
        %3852 = vmatpush.bf16.msra.mxu0 %v3809
        %3853 = vmatpush.bf16.msra.mxu0 %v3806
        %3854 = vmatpush.bf16.msra.mxu0 %v3803
        %3855 = vmatpush.bf16.msra.mxu0 %v3800
        %3856 = vmatpush.bf16.msra.mxu0 %v3797
        %3857 = vmatpush.bf16.msra.mxu0 %v3794
        %3858 = vmatpush.bf16.msra.mxu0 %v3791
        %3859 = vmatmul.bf16.gmra.mxu0 %v3708
        %v3860 = vpop.f32.mrf.mxu0
        %v3861 = vadd.f32 0.0, %v3860
        %v3862 = vpop.f32.mrf.mxu0
        %3863 = vdwg.mxu0
        %3864 = vmatpush.bf16.msra.mxu0 %v3813
        %3865 = vmatpush.bf16.msra.mxu0 %v3810
        %3866 = vmatpush.bf16.msra.mxu0 %v3807
        %3867 = vmatpush.bf16.msra.mxu0 %v3804
        %3868 = vmatpush.bf16.msra.mxu0 %v3801
        %3869 = vmatpush.bf16.msra.mxu0 %v3798
        %3870 = vmatpush.bf16.msra.mxu0 %v3795
        %3871 = vmatpush.bf16.msra.mxu0 %v3792
        %3872 = vmatmul.bf16.gmra.mxu0 %v3708
        %v3873 = vpop.f32.mrf.mxu0
        %v3874 = vadd.f32 0.0, %v3873
        %v3875 = vpop.f32.mrf.mxu0
        %3876 = vdwg.mxu0
        %v3877 = vadd.f32 %v3669, %v3848
        %v3878 = vadd.f32 %v3670, %v3861
        %v3879 = vadd.f32 %v3671, %v3874
        %v3880 = vld [vmem:[#allocation2 + $0x4] sm:$0x8]
        %v3881 = vld [vmem:[#allocation2 + $0x14] sm:$0x8]
        %s3882 = scalar_lea.vmem %s438, 2688 [#allocation10]
        %v3883 = vld [vmem:[%s3882] sm:$0xff]
        %v3884 = vld [vmem:[%s3882 + $0x8] sm:$0xf]
        %v3885 = vld [vmem:[%s3882 + $0xc] sm:$0xff]
        %v3886 = vld [vmem:[%s3882 + $0x14] sm:$0xf]
        %v3887 = vld [vmem:[%s3882 + $0x18] sm:$0xff]
        %v3888 = vld [vmem:[%s3882 + $0x20] sm:$0xf]
        %v3889 = vld [vmem:[%s3882 + $0x24] sm:$0xff]
        %v3890 = vld [vmem:[%s3882 + $0x2c] sm:$0xf]
        %v3891 = vld [vmem:[%s3882 + $0x30] sm:$0xff]
        %v3892 = vld [vmem:[%s3882 + $0x38] sm:$0xf]
        %v3893 = vld [vmem:[%s3882 + $0x3c] sm:$0xff]
        %v3894 = vld [vmem:[%s3882 + $0x44] sm:$0xf]
        %v3895 = vld [vmem:[%s3882 + $0x48] sm:$0xff]
        %v3896 = vld [vmem:[%s3882 + $0x50] sm:$0xf]
        %v3897 = vld [vmem:[%s3882 + $0x54] sm:$0xff]
        %v3898 = vld [vmem:[%s3882 + $0x5c] sm:$0xf]
        %v3899 = vld [vmem:[%s3882 + $0x60] sm:$0xff]
        %v3900 = vld [vmem:[%s3882 + $0x68] sm:$0xf]
        %v3901 = vld [vmem:[%s3882 + $0x6c] sm:$0xff]
        %v3902 = vld [vmem:[%s3882 + $0x74] sm:$0xf]
        %v3903 = vld [vmem:[%s3882 + $0x78] sm:$0xff]
        %v3904 = vld [vmem:[%s3882 + $0x80] sm:$0xf]
        %v3905 = vld [vmem:[%s3882 + $0x84] sm:$0xff]
        %v3906 = vld [vmem:[%s3882 + $0x8c] sm:$0xf]
        %v3907 = vld [vmem:[%s3882 + $0x90] sm:$0xff]
        %v3908 = vld [vmem:[%s3882 + $0x98] sm:$0xf]
        %v3909 = vld [vmem:[%s3882 + $0x9c] sm:$0xff]
        %v3910 = vld [vmem:[%s3882 + $0xa4] sm:$0xf]
        %v3911 = vld [vmem:[%s3882 + $0xa8] sm:$0xff]
        %v3912 = vld [vmem:[%s3882 + $0xb0] sm:$0xf]
        %v3913 = vld [vmem:[%s3882 + $0xb4] sm:$0xff]
        %v3914 = vld [vmem:[%s3882 + $0xbc] sm:$0xf]
        %v3917 = vunpack.c.l.b16 %v3880
        %v3918 = vunpack.c.l.b16 %v3881
        %v3919 = vpack.c.b16 %v3917, %v3917
        %v3920 = vpack.c.b16 %v3918, %v3918
        %v3921 = vunpack.c.l.b16 %v3919
        %v3922 = vunpack.c.l.b16 %v3920
        %v3923 = vrot.slane %v3921, 6
        %v3924 = vrot.slane %v3922, 5
        %v3925 = vsel %vm984, %v3924, %v3923
        %v3926 = vpack.c.b16 %v3925, %v3925
        %v3960 = vunpack.c.l.b16 %v3883
        %v3961 = vunpack.c.h.b16 %v3883
        %v3962 = vunpack.c.l.b16 %v3884
        %v3963 = vunpack.c.l.b16 %v3885
        %v3964 = vunpack.c.h.b16 %v3885
        %v3965 = vunpack.c.l.b16 %v3886
        %v3966 = vunpack.c.l.b16 %v3887
        %v3967 = vunpack.c.h.b16 %v3887
        %v3968 = vunpack.c.l.b16 %v3888
        %v3969 = vunpack.c.l.b16 %v3889
        %v3970 = vunpack.c.h.b16 %v3889
        %v3971 = vunpack.c.l.b16 %v3890
        %v3972 = vunpack.c.l.b16 %v3891
        %v3973 = vunpack.c.h.b16 %v3891
        %v3974 = vunpack.c.l.b16 %v3892
        %v3975 = vunpack.c.l.b16 %v3893
        %v3976 = vunpack.c.h.b16 %v3893
        %v3977 = vunpack.c.l.b16 %v3894
        %v3978 = vunpack.c.l.b16 %v3895
        %v3979 = vunpack.c.h.b16 %v3895
        %v3980 = vunpack.c.l.b16 %v3896
        %v3981 = vunpack.c.l.b16 %v3897
        %v3982 = vunpack.c.h.b16 %v3897
        %v3983 = vunpack.c.l.b16 %v3898
        %v3984 = vunpack.c.l.b16 %v3899
        %v3985 = vunpack.c.h.b16 %v3899
        %v3986 = vunpack.c.l.b16 %v3900
        %v3987 = vunpack.c.l.b16 %v3901
        %v3988 = vunpack.c.h.b16 %v3901
        %v3989 = vunpack.c.l.b16 %v3902
        %v3990 = vunpack.c.l.b16 %v3903
        %v3991 = vunpack.c.h.b16 %v3903
        %v3992 = vunpack.c.l.b16 %v3904
        %v3993 = vunpack.c.l.b16 %v3905
        %v3994 = vunpack.c.h.b16 %v3905
        %v3995 = vunpack.c.l.b16 %v3906
        %v3996 = vunpack.c.l.b16 %v3907
        %v3997 = vunpack.c.h.b16 %v3907
        %v3998 = vunpack.c.l.b16 %v3908
        %v3999 = vunpack.c.l.b16 %v3909
        %v4000 = vunpack.c.h.b16 %v3909
        %v4001 = vunpack.c.l.b16 %v3910
        %v4002 = vunpack.c.l.b16 %v3911
        %v4003 = vunpack.c.h.b16 %v3911
        %v4004 = vunpack.c.l.b16 %v3912
        %v4005 = vunpack.c.l.b16 %v3913
        %v4006 = vunpack.c.h.b16 %v3913
        %v4007 = vunpack.c.l.b16 %v3914
        %v4008 = vpack.c.b16 %v3963, %v3960
        %v4009 = vpack.c.b16 %v3964, %v3961
        %v4010 = vpack.c.b16 %v3965, %v3962
        %v4011 = vpack.c.b16 %v3969, %v3966
        %v4012 = vpack.c.b16 %v3970, %v3967
        %v4013 = vpack.c.b16 %v3971, %v3968
        %v4014 = vpack.c.b16 %v3975, %v3972
        %v4015 = vpack.c.b16 %v3976, %v3973
        %v4016 = vpack.c.b16 %v3977, %v3974
        %v4017 = vpack.c.b16 %v3981, %v3978
        %v4018 = vpack.c.b16 %v3982, %v3979
        %v4019 = vpack.c.b16 %v3983, %v3980
        %v4020 = vpack.c.b16 %v3987, %v3984
        %v4021 = vpack.c.b16 %v3988, %v3985
        %v4022 = vpack.c.b16 %v3989, %v3986
        %v4023 = vpack.c.b16 %v3993, %v3990
        %v4024 = vpack.c.b16 %v3994, %v3991
        %v4025 = vpack.c.b16 %v3995, %v3992
        %v4026 = vpack.c.b16 %v3999, %v3996
        %v4027 = vpack.c.b16 %v4000, %v3997
        %v4028 = vpack.c.b16 %v4001, %v3998
        %v4029 = vpack.c.b16 %v4005, %v4002
        %v4030 = vpack.c.b16 %v4006, %v4003
        %v4031 = vpack.c.b16 %v4007, %v4004
        %4056 = vmatpush.bf16.msra.mxu0 %v4029
        %4057 = vmatpush.bf16.msra.mxu0 %v4026
        %4058 = vmatpush.bf16.msra.mxu0 %v4023
        %4059 = vmatpush.bf16.msra.mxu0 %v4020
        %4060 = vmatpush.bf16.msra.mxu0 %v4017
        %4061 = vmatpush.bf16.msra.mxu0 %v4014
        %4062 = vmatpush.bf16.msra.mxu0 %v4011
        %4063 = vmatpush.bf16.msra.mxu0 %v4008
        %4064 = vmatmul.bf16.gmra.mxu0 %v3926
        %v4065 = vpop.f32.mrf.mxu0
        %v4066 = vadd.f32 0.0, %v4065
        %v4067 = vpop.f32.mrf.mxu0
        %4068 = vdwg.mxu0
        %4069 = vmatpush.bf16.msra.mxu0 %v4030
        %4070 = vmatpush.bf16.msra.mxu0 %v4027
        %4071 = vmatpush.bf16.msra.mxu0 %v4024
        %4072 = vmatpush.bf16.msra.mxu0 %v4021
        %4073 = vmatpush.bf16.msra.mxu0 %v4018
        %4074 = vmatpush.bf16.msra.mxu0 %v4015
        %4075 = vmatpush.bf16.msra.mxu0 %v4012
        %4076 = vmatpush.bf16.msra.mxu0 %v4009
        %4077 = vmatmul.bf16.gmra.mxu0 %v3926
        %v4078 = vpop.f32.mrf.mxu0
        %v4079 = vadd.f32 0.0, %v4078
        %v4080 = vpop.f32.mrf.mxu0
        %4081 = vdwg.mxu0
        %4082 = vmatpush.bf16.msra.mxu0 %v4031
        %4083 = vmatpush.bf16.msra.mxu0 %v4028
        %4084 = vmatpush.bf16.msra.mxu0 %v4025
        %4085 = vmatpush.bf16.msra.mxu0 %v4022
        %4086 = vmatpush.bf16.msra.mxu0 %v4019
        %4087 = vmatpush.bf16.msra.mxu0 %v4016
        %4088 = vmatpush.bf16.msra.mxu0 %v4013
        %4089 = vmatpush.bf16.msra.mxu0 %v4010
        %4090 = vmatmul.bf16.gmra.mxu0 %v3926
        %v4091 = vpop.f32.mrf.mxu0
        %v4092 = vadd.f32 0.0, %v4091
        %v4093 = vpop.f32.mrf.mxu0
        %4094 = vdwg.mxu0
        %v4095 = vadd.f32 %v3877, %v4066
        %v4096 = vadd.f32 %v3878, %v4079
        %v4097 = vadd.f32 %v3879, %v4092
        %s4098 = scalar_lea.vmem %s438, 2880 [#allocation10]
        %v4099 = vld [vmem:[%s4098] sm:$0xff]
        %v4100 = vld [vmem:[%s4098 + $0x8] sm:$0xf]
        %v4101 = vld [vmem:[%s4098 + $0xc] sm:$0xff]
        %v4102 = vld [vmem:[%s4098 + $0x14] sm:$0xf]
        %v4103 = vld [vmem:[%s4098 + $0x18] sm:$0xff]
        %v4104 = vld [vmem:[%s4098 + $0x20] sm:$0xf]
        %v4105 = vld [vmem:[%s4098 + $0x24] sm:$0xff]
        %v4106 = vld [vmem:[%s4098 + $0x2c] sm:$0xf]
        %v4107 = vld [vmem:[%s4098 + $0x30] sm:$0xff]
        %v4108 = vld [vmem:[%s4098 + $0x38] sm:$0xf]
        %v4109 = vld [vmem:[%s4098 + $0x3c] sm:$0xff]
        %v4110 = vld [vmem:[%s4098 + $0x44] sm:$0xf]
        %v4111 = vld [vmem:[%s4098 + $0x48] sm:$0xff]
        %v4112 = vld [vmem:[%s4098 + $0x50] sm:$0xf]
        %v4113 = vld [vmem:[%s4098 + $0x54] sm:$0xff]
        %v4114 = vld [vmem:[%s4098 + $0x5c] sm:$0xf]
        %v4115 = vld [vmem:[%s4098 + $0x60] sm:$0xff]
        %v4116 = vld [vmem:[%s4098 + $0x68] sm:$0xf]
        %v4117 = vld [vmem:[%s4098 + $0x6c] sm:$0xff]
        %v4118 = vld [vmem:[%s4098 + $0x74] sm:$0xf]
        %v4119 = vld [vmem:[%s4098 + $0x78] sm:$0xff]
        %v4120 = vld [vmem:[%s4098 + $0x80] sm:$0xf]
        %v4121 = vld [vmem:[%s4098 + $0x84] sm:$0xff]
        %v4122 = vld [vmem:[%s4098 + $0x8c] sm:$0xf]
        %v4123 = vld [vmem:[%s4098 + $0x90] sm:$0xff]
        %v4124 = vld [vmem:[%s4098 + $0x98] sm:$0xf]
        %v4125 = vld [vmem:[%s4098 + $0x9c] sm:$0xff]
        %v4126 = vld [vmem:[%s4098 + $0xa4] sm:$0xf]
        %v4127 = vld [vmem:[%s4098 + $0xa8] sm:$0xff]
        %v4128 = vld [vmem:[%s4098 + $0xb0] sm:$0xf]
        %v4129 = vld [vmem:[%s4098 + $0xb4] sm:$0xff]
        %v4130 = vld [vmem:[%s4098 + $0xbc] sm:$0xf]
        %v4131 = vrot.slane %v3921, 7
        %v4132 = vrot.slane %v3922, 6
        %v4133 = vsel %vm984, %v4132, %v4131
        %v4134 = vpack.c.b16 %v4133, %v4133
        %v4168 = vunpack.c.l.b16 %v4099
        %v4169 = vunpack.c.h.b16 %v4099
        %v4170 = vunpack.c.l.b16 %v4100
        %v4171 = vunpack.c.l.b16 %v4101
        %v4172 = vunpack.c.h.b16 %v4101
        %v4173 = vunpack.c.l.b16 %v4102
        %v4174 = vunpack.c.l.b16 %v4103
        %v4175 = vunpack.c.h.b16 %v4103
        %v4176 = vunpack.c.l.b16 %v4104
        %v4177 = vunpack.c.l.b16 %v4105
        %v4178 = vunpack.c.h.b16 %v4105
        %v4179 = vunpack.c.l.b16 %v4106
        %v4180 = vunpack.c.l.b16 %v4107
        %v4181 = vunpack.c.h.b16 %v4107
        %v4182 = vunpack.c.l.b16 %v4108
        %v4183 = vunpack.c.l.b16 %v4109
        %v4184 = vunpack.c.h.b16 %v4109
        %v4185 = vunpack.c.l.b16 %v4110
        %v4186 = vunpack.c.l.b16 %v4111
        %v4187 = vunpack.c.h.b16 %v4111
        %v4188 = vunpack.c.l.b16 %v4112
        %v4189 = vunpack.c.l.b16 %v4113
        %v4190 = vunpack.c.h.b16 %v4113
        %v4191 = vunpack.c.l.b16 %v4114
        %v4192 = vunpack.c.l.b16 %v4115
        %v4193 = vunpack.c.h.b16 %v4115
        %v4194 = vunpack.c.l.b16 %v4116
        %v4195 = vunpack.c.l.b16 %v4117
        %v4196 = vunpack.c.h.b16 %v4117
        %v4197 = vunpack.c.l.b16 %v4118
        %v4198 = vunpack.c.l.b16 %v4119
        %v4199 = vunpack.c.h.b16 %v4119
        %v4200 = vunpack.c.l.b16 %v4120
        %v4201 = vunpack.c.l.b16 %v4121
        %v4202 = vunpack.c.h.b16 %v4121
        %v4203 = vunpack.c.l.b16 %v4122
        %v4204 = vunpack.c.l.b16 %v4123
        %v4205 = vunpack.c.h.b16 %v4123
        %v4206 = vunpack.c.l.b16 %v4124
        %v4207 = vunpack.c.l.b16 %v4125
        %v4208 = vunpack.c.h.b16 %v4125
        %v4209 = vunpack.c.l.b16 %v4126
        %v4210 = vunpack.c.l.b16 %v4127
        %v4211 = vunpack.c.h.b16 %v4127
        %v4212 = vunpack.c.l.b16 %v4128
        %v4213 = vunpack.c.l.b16 %v4129
        %v4214 = vunpack.c.h.b16 %v4129
        %v4215 = vunpack.c.l.b16 %v4130
        %v4216 = vpack.c.b16 %v4171, %v4168
        %v4217 = vpack.c.b16 %v4172, %v4169
        %v4218 = vpack.c.b16 %v4173, %v4170
        %v4219 = vpack.c.b16 %v4177, %v4174
        %v4220 = vpack.c.b16 %v4178, %v4175
        %v4221 = vpack.c.b16 %v4179, %v4176
        %v4222 = vpack.c.b16 %v4183, %v4180
        %v4223 = vpack.c.b16 %v4184, %v4181
        %v4224 = vpack.c.b16 %v4185, %v4182
        %v4225 = vpack.c.b16 %v4189, %v4186
        %v4226 = vpack.c.b16 %v4190, %v4187
        %v4227 = vpack.c.b16 %v4191, %v4188
        %v4228 = vpack.c.b16 %v4195, %v4192
        %v4229 = vpack.c.b16 %v4196, %v4193
        %v4230 = vpack.c.b16 %v4197, %v4194
        %v4231 = vpack.c.b16 %v4201, %v4198
        %v4232 = vpack.c.b16 %v4202, %v4199
        %v4233 = vpack.c.b16 %v4203, %v4200
        %v4234 = vpack.c.b16 %v4207, %v4204
        %v4235 = vpack.c.b16 %v4208, %v4205
        %v4236 = vpack.c.b16 %v4209, %v4206
        %v4237 = vpack.c.b16 %v4213, %v4210
        %v4238 = vpack.c.b16 %v4214, %v4211
        %v4239 = vpack.c.b16 %v4215, %v4212
        %4264 = vmatpush.bf16.msra.mxu0 %v4237
        %4265 = vmatpush.bf16.msra.mxu0 %v4234
        %4266 = vmatpush.bf16.msra.mxu0 %v4231
        %4267 = vmatpush.bf16.msra.mxu0 %v4228
        %4268 = vmatpush.bf16.msra.mxu0 %v4225
        %4269 = vmatpush.bf16.msra.mxu0 %v4222
        %4270 = vmatpush.bf16.msra.mxu0 %v4219
        %4271 = vmatpush.bf16.msra.mxu0 %v4216
        %4272 = vmatmul.bf16.gmra.mxu0 %v4134
        %v4273 = vpop.f32.mrf.mxu0
        %v4274 = vadd.f32 0.0, %v4273
        %v4275 = vpop.f32.mrf.mxu0
        %4276 = vdwg.mxu0
        %4277 = vmatpush.bf16.msra.mxu0 %v4238
        %4278 = vmatpush.bf16.msra.mxu0 %v4235
        %4279 = vmatpush.bf16.msra.mxu0 %v4232
        %4280 = vmatpush.bf16.msra.mxu0 %v4229
        %4281 = vmatpush.bf16.msra.mxu0 %v4226
        %4282 = vmatpush.bf16.msra.mxu0 %v4223
        %4283 = vmatpush.bf16.msra.mxu0 %v4220
        %4284 = vmatpush.bf16.msra.mxu0 %v4217
        %4285 = vmatmul.bf16.gmra.mxu0 %v4134
        %v4286 = vpop.f32.mrf.mxu0
        %v4287 = vadd.f32 0.0, %v4286
        %v4288 = vpop.f32.mrf.mxu0
        %4289 = vdwg.mxu0
        %4290 = vmatpush.bf16.msra.mxu0 %v4239
        %4291 = vmatpush.bf16.msra.mxu0 %v4236
        %4292 = vmatpush.bf16.msra.mxu0 %v4233
        %4293 = vmatpush.bf16.msra.mxu0 %v4230
        %4294 = vmatpush.bf16.msra.mxu0 %v4227
        %4295 = vmatpush.bf16.msra.mxu0 %v4224
        %4296 = vmatpush.bf16.msra.mxu0 %v4221
        %4297 = vmatpush.bf16.msra.mxu0 %v4218
        %4298 = vmatmul.bf16.gmra.mxu0 %v4134
        %v4299 = vpop.f32.mrf.mxu0
        %v4300 = vadd.f32 0.0, %v4299
        %v4301 = vpop.f32.mrf.mxu0
        %4302 = vdwg.mxu0
        %v4303 = vadd.f32 %v4095, %v4274
        %v4304 = vadd.f32 %v4096, %v4287
        %v4305 = vadd.f32 %v4097, %v4300
        %v4306 = vld [vmem:[#allocation2 + $0x8] sm:$0x1]
        %v4307 = vld [vmem:[#allocation2 + $0x18] sm:$0x1]
        %s4308 = scalar_lea.vmem %s438, 3072 [#allocation10]
        %v4309 = vld [vmem:[%s4308] sm:$0xff]
        %v4310 = vld [vmem:[%s4308 + $0x8] sm:$0xf]
        %v4311 = vld [vmem:[%s4308 + $0xc] sm:$0xff]
        %v4312 = vld [vmem:[%s4308 + $0x14] sm:$0xf]
        %v4313 = vld [vmem:[%s4308 + $0x18] sm:$0xff]
        %v4314 = vld [vmem:[%s4308 + $0x20] sm:$0xf]
        %v4315 = vld [vmem:[%s4308 + $0x24] sm:$0xff]
        %v4316 = vld [vmem:[%s4308 + $0x2c] sm:$0xf]
        %v4317 = vld [vmem:[%s4308 + $0x30] sm:$0xff]
        %v4318 = vld [vmem:[%s4308 + $0x38] sm:$0xf]
        %v4319 = vld [vmem:[%s4308 + $0x3c] sm:$0xff]
        %v4320 = vld [vmem:[%s4308 + $0x44] sm:$0xf]
        %v4321 = vld [vmem:[%s4308 + $0x48] sm:$0xff]
        %v4322 = vld [vmem:[%s4308 + $0x50] sm:$0xf]
        %v4323 = vld [vmem:[%s4308 + $0x54] sm:$0xff]
        %v4324 = vld [vmem:[%s4308 + $0x5c] sm:$0xf]
        %v4325 = vld [vmem:[%s4308 + $0x60] sm:$0xff]
        %v4326 = vld [vmem:[%s4308 + $0x68] sm:$0xf]
        %v4327 = vld [vmem:[%s4308 + $0x6c] sm:$0xff]
        %v4328 = vld [vmem:[%s4308 + $0x74] sm:$0xf]
        %v4329 = vld [vmem:[%s4308 + $0x78] sm:$0xff]
        %v4330 = vld [vmem:[%s4308 + $0x80] sm:$0xf]
        %v4331 = vld [vmem:[%s4308 + $0x84] sm:$0xff]
        %v4332 = vld [vmem:[%s4308 + $0x8c] sm:$0xf]
        %v4333 = vld [vmem:[%s4308 + $0x90] sm:$0xff]
        %v4334 = vld [vmem:[%s4308 + $0x98] sm:$0xf]
        %v4335 = vld [vmem:[%s4308 + $0x9c] sm:$0xff]
        %v4336 = vld [vmem:[%s4308 + $0xa4] sm:$0xf]
        %v4337 = vld [vmem:[%s4308 + $0xa8] sm:$0xff]
        %v4338 = vld [vmem:[%s4308 + $0xb0] sm:$0xf]
        %v4339 = vld [vmem:[%s4308 + $0xb4] sm:$0xff]
        %v4340 = vld [vmem:[%s4308 + $0xbc] sm:$0xf]
        %v4343 = vunpack.c.l.b16 %v4306
        %v4344 = vunpack.c.l.b16 %v4307
        %v4345 = vpack.c.b16 %v4343, %v4343
        %v4346 = vpack.c.b16 %v4344, %v4344
        %v4347 = vunpack.c.l.b16 %v4345
        %v4348 = vunpack.c.l.b16 %v4346
        %v4349 = vrot.slane %v4348, 7
        %v4350 = vsel %vm984, %v4349, %v4347
        %v4351 = vpack.c.b16 %v4350, %v4350
        %v4385 = vunpack.c.l.b16 %v4309
        %v4386 = vunpack.c.h.b16 %v4309
        %v4387 = vunpack.c.l.b16 %v4310
        %v4388 = vunpack.c.l.b16 %v4311
        %v4389 = vunpack.c.h.b16 %v4311
        %v4390 = vunpack.c.l.b16 %v4312
        %v4391 = vunpack.c.l.b16 %v4313
        %v4392 = vunpack.c.h.b16 %v4313
        %v4393 = vunpack.c.l.b16 %v4314
        %v4394 = vunpack.c.l.b16 %v4315
        %v4395 = vunpack.c.h.b16 %v4315
        %v4396 = vunpack.c.l.b16 %v4316
        %v4397 = vunpack.c.l.b16 %v4317
        %v4398 = vunpack.c.h.b16 %v4317
        %v4399 = vunpack.c.l.b16 %v4318
        %v4400 = vunpack.c.l.b16 %v4319
        %v4401 = vunpack.c.h.b16 %v4319
        %v4402 = vunpack.c.l.b16 %v4320
        %v4403 = vunpack.c.l.b16 %v4321
        %v4404 = vunpack.c.h.b16 %v4321
        %v4405 = vunpack.c.l.b16 %v4322
        %v4406 = vunpack.c.l.b16 %v4323
        %v4407 = vunpack.c.h.b16 %v4323
        %v4408 = vunpack.c.l.b16 %v4324
        %v4409 = vunpack.c.l.b16 %v4325
        %v4410 = vunpack.c.h.b16 %v4325
        %v4411 = vunpack.c.l.b16 %v4326
        %v4412 = vunpack.c.l.b16 %v4327
        %v4413 = vunpack.c.h.b16 %v4327
        %v4414 = vunpack.c.l.b16 %v4328
        %v4415 = vunpack.c.l.b16 %v4329
        %v4416 = vunpack.c.h.b16 %v4329
        %v4417 = vunpack.c.l.b16 %v4330
        %v4418 = vunpack.c.l.b16 %v4331
        %v4419 = vunpack.c.h.b16 %v4331
        %v4420 = vunpack.c.l.b16 %v4332
        %v4421 = vunpack.c.l.b16 %v4333
        %v4422 = vunpack.c.h.b16 %v4333
        %v4423 = vunpack.c.l.b16 %v4334
        %v4424 = vunpack.c.l.b16 %v4335
        %v4425 = vunpack.c.h.b16 %v4335
        %v4426 = vunpack.c.l.b16 %v4336
        %v4427 = vunpack.c.l.b16 %v4337
        %v4428 = vunpack.c.h.b16 %v4337
        %v4429 = vunpack.c.l.b16 %v4338
        %v4430 = vunpack.c.l.b16 %v4339
        %v4431 = vunpack.c.h.b16 %v4339
        %v4432 = vunpack.c.l.b16 %v4340
        %v4433 = vpack.c.b16 %v4388, %v4385
        %v4434 = vpack.c.b16 %v4389, %v4386
        %v4435 = vpack.c.b16 %v4390, %v4387
        %v4436 = vpack.c.b16 %v4394, %v4391
        %v4437 = vpack.c.b16 %v4395, %v4392
        %v4438 = vpack.c.b16 %v4396, %v4393
        %v4439 = vpack.c.b16 %v4400, %v4397
        %v4440 = vpack.c.b16 %v4401, %v4398
        %v4441 = vpack.c.b16 %v4402, %v4399
        %v4442 = vpack.c.b16 %v4406, %v4403
        %v4443 = vpack.c.b16 %v4407, %v4404
        %v4444 = vpack.c.b16 %v4408, %v4405
        %v4445 = vpack.c.b16 %v4412, %v4409
        %v4446 = vpack.c.b16 %v4413, %v4410
        %v4447 = vpack.c.b16 %v4414, %v4411
        %v4448 = vpack.c.b16 %v4418, %v4415
        %v4449 = vpack.c.b16 %v4419, %v4416
        %v4450 = vpack.c.b16 %v4420, %v4417
        %v4451 = vpack.c.b16 %v4424, %v4421
        %v4452 = vpack.c.b16 %v4425, %v4422
        %v4453 = vpack.c.b16 %v4426, %v4423
        %v4454 = vpack.c.b16 %v4430, %v4427
        %v4455 = vpack.c.b16 %v4431, %v4428
        %v4456 = vpack.c.b16 %v4432, %v4429
        %4481 = vmatpush.bf16.msra.mxu0 %v4454
        %4482 = vmatpush.bf16.msra.mxu0 %v4451
        %4483 = vmatpush.bf16.msra.mxu0 %v4448
        %4484 = vmatpush.bf16.msra.mxu0 %v4445
        %4485 = vmatpush.bf16.msra.mxu0 %v4442
        %4486 = vmatpush.bf16.msra.mxu0 %v4439
        %4487 = vmatpush.bf16.msra.mxu0 %v4436
        %4488 = vmatpush.bf16.msra.mxu0 %v4433
        %4489 = vmatmul.bf16.gmra.mxu0 %v4351
        %v4490 = vpop.f32.mrf.mxu0
        %v4491 = vadd.f32 0.0, %v4490
        %v4492 = vpop.f32.mrf.mxu0
        %4493 = vdwg.mxu0
        %4494 = vmatpush.bf16.msra.mxu0 %v4455
        %4495 = vmatpush.bf16.msra.mxu0 %v4452
        %4496 = vmatpush.bf16.msra.mxu0 %v4449
        %4497 = vmatpush.bf16.msra.mxu0 %v4446
        %4498 = vmatpush.bf16.msra.mxu0 %v4443
        %4499 = vmatpush.bf16.msra.mxu0 %v4440
        %4500 = vmatpush.bf16.msra.mxu0 %v4437
        %4501 = vmatpush.bf16.msra.mxu0 %v4434
        %4502 = vmatmul.bf16.gmra.mxu0 %v4351
        %v4503 = vpop.f32.mrf.mxu0
        %v4504 = vadd.f32 0.0, %v4503
        %v4505 = vpop.f32.mrf.mxu0
        %4506 = vdwg.mxu0
        %4507 = vmatpush.bf16.msra.mxu0 %v4456
        %4508 = vmatpush.bf16.msra.mxu0 %v4453
        %4509 = vmatpush.bf16.msra.mxu0 %v4450
        %4510 = vmatpush.bf16.msra.mxu0 %v4447
        %4511 = vmatpush.bf16.msra.mxu0 %v4444
        %4512 = vmatpush.bf16.msra.mxu0 %v4441
        %4513 = vmatpush.bf16.msra.mxu0 %v4438
        %4514 = vmatpush.bf16.msra.mxu0 %v4435
        %4515 = vmatmul.bf16.gmra.mxu0 %v4351
        %v4516 = vpop.f32.mrf.mxu0
        %v4517 = vadd.f32 0.0, %v4516
        %v4518 = vpop.f32.mrf.mxu0
        %4519 = vdwg.mxu0
        %v4520 = vadd.f32 %v4303, %v4491
        %v4521 = vadd.f32 %v4304, %v4504
        %v4522 = vadd.f32 %v4305, %v4517
        %s4523 = scalar_lea.vmem %s438, 3264 [#allocation10]
        %v4524 = vld [vmem:[%s4523] sm:$0xff]
        %v4525 = vld [vmem:[%s4523 + $0x8] sm:$0xf]
        %v4526 = vld [vmem:[%s4523 + $0xc] sm:$0xff]
        %v4527 = vld [vmem:[%s4523 + $0x14] sm:$0xf]
        %v4528 = vld [vmem:[%s4523 + $0x18] sm:$0xff]
        %v4529 = vld [vmem:[%s4523 + $0x20] sm:$0xf]
        %v4530 = vld [vmem:[%s4523 + $0x24] sm:$0xff]
        %v4531 = vld [vmem:[%s4523 + $0x2c] sm:$0xf]
        %v4532 = vld [vmem:[%s4523 + $0x30] sm:$0xff]
        %v4533 = vld [vmem:[%s4523 + $0x38] sm:$0xf]
        %v4534 = vld [vmem:[%s4523 + $0x3c] sm:$0xff]
        %v4535 = vld [vmem:[%s4523 + $0x44] sm:$0xf]
        %v4536 = vld [vmem:[%s4523 + $0x48] sm:$0xff]
        %v4537 = vld [vmem:[%s4523 + $0x50] sm:$0xf]
        %v4538 = vld [vmem:[%s4523 + $0x54] sm:$0xff]
        %v4539 = vld [vmem:[%s4523 + $0x5c] sm:$0xf]
        %v4540 = vld [vmem:[%s4523 + $0x60] sm:$0xff]
        %v4541 = vld [vmem:[%s4523 + $0x68] sm:$0xf]
        %v4542 = vld [vmem:[%s4523 + $0x6c] sm:$0xff]
        %v4543 = vld [vmem:[%s4523 + $0x74] sm:$0xf]
        %v4544 = vld [vmem:[%s4523 + $0x78] sm:$0xff]
        %v4545 = vld [vmem:[%s4523 + $0x80] sm:$0xf]
        %v4546 = vld [vmem:[%s4523 + $0x84] sm:$0xff]
        %v4547 = vld [vmem:[%s4523 + $0x8c] sm:$0xf]
        %v4548 = vld [vmem:[%s4523 + $0x90] sm:$0xff]
        %v4549 = vld [vmem:[%s4523 + $0x98] sm:$0xf]
        %v4550 = vld [vmem:[%s4523 + $0x9c] sm:$0xff]
        %v4551 = vld [vmem:[%s4523 + $0xa4] sm:$0xf]
        %v4552 = vld [vmem:[%s4523 + $0xa8] sm:$0xff]
        %v4553 = vld [vmem:[%s4523 + $0xb0] sm:$0xf]
        %v4554 = vld [vmem:[%s4523 + $0xb4] sm:$0xff]
        %v4555 = vld [vmem:[%s4523 + $0xbc] sm:$0xf]
        %v4556 = vrot.slane %v4347, 1
        %v4557 = vsel %vm984, %v4348, %v4556
        %v4558 = vpack.c.b16 %v4557, %v4557
        %v4592 = vunpack.c.l.b16 %v4524
        %v4593 = vunpack.c.h.b16 %v4524
        %v4594 = vunpack.c.l.b16 %v4525
        %v4595 = vunpack.c.l.b16 %v4526
        %v4596 = vunpack.c.h.b16 %v4526
        %v4597 = vunpack.c.l.b16 %v4527
        %v4598 = vunpack.c.l.b16 %v4528
        %v4599 = vunpack.c.h.b16 %v4528
        %v4600 = vunpack.c.l.b16 %v4529
        %v4601 = vunpack.c.l.b16 %v4530
        %v4602 = vunpack.c.h.b16 %v4530
        %v4603 = vunpack.c.l.b16 %v4531
        %v4604 = vunpack.c.l.b16 %v4532
        %v4605 = vunpack.c.h.b16 %v4532
        %v4606 = vunpack.c.l.b16 %v4533
        %v4607 = vunpack.c.l.b16 %v4534
        %v4608 = vunpack.c.h.b16 %v4534
        %v4609 = vunpack.c.l.b16 %v4535
        %v4610 = vunpack.c.l.b16 %v4536
        %v4611 = vunpack.c.h.b16 %v4536
        %v4612 = vunpack.c.l.b16 %v4537
        %v4613 = vunpack.c.l.b16 %v4538
        %v4614 = vunpack.c.h.b16 %v4538
        %v4615 = vunpack.c.l.b16 %v4539
        %v4616 = vunpack.c.l.b16 %v4540
        %v4617 = vunpack.c.h.b16 %v4540
        %v4618 = vunpack.c.l.b16 %v4541
        %v4619 = vunpack.c.l.b16 %v4542
        %v4620 = vunpack.c.h.b16 %v4542
        %v4621 = vunpack.c.l.b16 %v4543
        %v4622 = vunpack.c.l.b16 %v4544
        %v4623 = vunpack.c.h.b16 %v4544
        %v4624 = vunpack.c.l.b16 %v4545
        %v4625 = vunpack.c.l.b16 %v4546
        %v4626 = vunpack.c.h.b16 %v4546
        %v4627 = vunpack.c.l.b16 %v4547
        %v4628 = vunpack.c.l.b16 %v4548
        %v4629 = vunpack.c.h.b16 %v4548
        %v4630 = vunpack.c.l.b16 %v4549
        %v4631 = vunpack.c.l.b16 %v4550
        %v4632 = vunpack.c.h.b16 %v4550
        %v4633 = vunpack.c.l.b16 %v4551
        %v4634 = vunpack.c.l.b16 %v4552
        %v4635 = vunpack.c.h.b16 %v4552
        %v4636 = vunpack.c.l.b16 %v4553
        %v4637 = vunpack.c.l.b16 %v4554
        %v4638 = vunpack.c.h.b16 %v4554
        %v4639 = vunpack.c.l.b16 %v4555
        %v4640 = vpack.c.b16 %v4595, %v4592
        %v4641 = vpack.c.b16 %v4596, %v4593
        %v4642 = vpack.c.b16 %v4597, %v4594
        %v4643 = vpack.c.b16 %v4601, %v4598
        %v4644 = vpack.c.b16 %v4602, %v4599
        %v4645 = vpack.c.b16 %v4603, %v4600
        %v4646 = vpack.c.b16 %v4607, %v4604
        %v4647 = vpack.c.b16 %v4608, %v4605
        %v4648 = vpack.c.b16 %v4609, %v4606
        %v4649 = vpack.c.b16 %v4613, %v4610
        %v4650 = vpack.c.b16 %v4614, %v4611
        %v4651 = vpack.c.b16 %v4615, %v4612
        %v4652 = vpack.c.b16 %v4619, %v4616
        %v4653 = vpack.c.b16 %v4620, %v4617
        %v4654 = vpack.c.b16 %v4621, %v4618
        %v4655 = vpack.c.b16 %v4625, %v4622
        %v4656 = vpack.c.b16 %v4626, %v4623
        %v4657 = vpack.c.b16 %v4627, %v4624
        %v4658 = vpack.c.b16 %v4631, %v4628
        %v4659 = vpack.c.b16 %v4632, %v4629
        %v4660 = vpack.c.b16 %v4633, %v4630
        %v4661 = vpack.c.b16 %v4637, %v4634
        %v4662 = vpack.c.b16 %v4638, %v4635
        %v4663 = vpack.c.b16 %v4639, %v4636
        %4688 = vmatpush.bf16.msra.mxu0 %v4661
        %4689 = vmatpush.bf16.msra.mxu0 %v4658
        %4690 = vmatpush.bf16.msra.mxu0 %v4655
        %4691 = vmatpush.bf16.msra.mxu0 %v4652
        %4692 = vmatpush.bf16.msra.mxu0 %v4649
        %4693 = vmatpush.bf16.msra.mxu0 %v4646
        %4694 = vmatpush.bf16.msra.mxu0 %v4643
        %4695 = vmatpush.bf16.msra.mxu0 %v4640
        %4696 = vmatmul.bf16.gmra.mxu0 %v4558
        %v4697 = vpop.f32.mrf.mxu0
        %v4698 = vadd.f32 0.0, %v4697
        %v4699 = vpop.f32.mrf.mxu0
        %4700 = vdwg.mxu0
        %4701 = vmatpush.bf16.msra.mxu0 %v4662
        %4702 = vmatpush.bf16.msra.mxu0 %v4659
        %4703 = vmatpush.bf16.msra.mxu0 %v4656
        %4704 = vmatpush.bf16.msra.mxu0 %v4653
        %4705 = vmatpush.bf16.msra.mxu0 %v4650
        %4706 = vmatpush.bf16.msra.mxu0 %v4647
        %4707 = vmatpush.bf16.msra.mxu0 %v4644
        %4708 = vmatpush.bf16.msra.mxu0 %v4641
        %4709 = vmatmul.bf16.gmra.mxu0 %v4558
        %v4710 = vpop.f32.mrf.mxu0
        %v4711 = vadd.f32 0.0, %v4710
        %v4712 = vpop.f32.mrf.mxu0
        %4713 = vdwg.mxu0
        %4714 = vmatpush.bf16.msra.mxu0 %v4663
        %4715 = vmatpush.bf16.msra.mxu0 %v4660
        %4716 = vmatpush.bf16.msra.mxu0 %v4657
        %4717 = vmatpush.bf16.msra.mxu0 %v4654
        %4718 = vmatpush.bf16.msra.mxu0 %v4651
        %4719 = vmatpush.bf16.msra.mxu0 %v4648
        %4720 = vmatpush.bf16.msra.mxu0 %v4645
        %4721 = vmatpush.bf16.msra.mxu0 %v4642
        %4722 = vmatmul.bf16.gmra.mxu0 %v4558
        %v4723 = vpop.f32.mrf.mxu0
        %v4724 = vadd.f32 0.0, %v4723
        %v4725 = vpop.f32.mrf.mxu0
        %4726 = vdwg.mxu0
        %v4727 = vadd.f32 %v4520, %v4698
        %v4728 = vadd.f32 %v4521, %v4711
        %v4729 = vadd.f32 %v4522, %v4724
        %v4730 = vld [vmem:[#allocation2 + $0x8] sm:$0x2]
        %v4731 = vld [vmem:[#allocation2 + $0x18] sm:$0x2]
        %s4732 = scalar_lea.vmem %s438, 3456 [#allocation10]
        %v4733 = vld [vmem:[%s4732] sm:$0xff]
        %v4734 = vld [vmem:[%s4732 + $0x8] sm:$0xf]
        %v4735 = vld [vmem:[%s4732 + $0xc] sm:$0xff]
        %v4736 = vld [vmem:[%s4732 + $0x14] sm:$0xf]
        %v4737 = vld [vmem:[%s4732 + $0x18] sm:$0xff]
        %v4738 = vld [vmem:[%s4732 + $0x20] sm:$0xf]
        %v4739 = vld [vmem:[%s4732 + $0x24] sm:$0xff]
        %v4740 = vld [vmem:[%s4732 + $0x2c] sm:$0xf]
        %v4741 = vld [vmem:[%s4732 + $0x30] sm:$0xff]
        %v4742 = vld [vmem:[%s4732 + $0x38] sm:$0xf]
        %v4743 = vld [vmem:[%s4732 + $0x3c] sm:$0xff]
        %v4744 = vld [vmem:[%s4732 + $0x44] sm:$0xf]
        %v4745 = vld [vmem:[%s4732 + $0x48] sm:$0xff]
        %v4746 = vld [vmem:[%s4732 + $0x50] sm:$0xf]
        %v4747 = vld [vmem:[%s4732 + $0x54] sm:$0xff]
        %v4748 = vld [vmem:[%s4732 + $0x5c] sm:$0xf]
        %v4749 = vld [vmem:[%s4732 + $0x60] sm:$0xff]
        %v4750 = vld [vmem:[%s4732 + $0x68] sm:$0xf]
        %v4751 = vld [vmem:[%s4732 + $0x6c] sm:$0xff]
        %v4752 = vld [vmem:[%s4732 + $0x74] sm:$0xf]
        %v4753 = vld [vmem:[%s4732 + $0x78] sm:$0xff]
        %v4754 = vld [vmem:[%s4732 + $0x80] sm:$0xf]
        %v4755 = vld [vmem:[%s4732 + $0x84] sm:$0xff]
        %v4756 = vld [vmem:[%s4732 + $0x8c] sm:$0xf]
        %v4757 = vld [vmem:[%s4732 + $0x90] sm:$0xff]
        %v4758 = vld [vmem:[%s4732 + $0x98] sm:$0xf]
        %v4759 = vld [vmem:[%s4732 + $0x9c] sm:$0xff]
        %v4760 = vld [vmem:[%s4732 + $0xa4] sm:$0xf]
        %v4761 = vld [vmem:[%s4732 + $0xa8] sm:$0xff]
        %v4762 = vld [vmem:[%s4732 + $0xb0] sm:$0xf]
        %v4763 = vld [vmem:[%s4732 + $0xb4] sm:$0xff]
        %v4764 = vld [vmem:[%s4732 + $0xbc] sm:$0xf]
        %v4767 = vunpack.c.l.b16 %v4730
        %v4768 = vunpack.c.l.b16 %v4731
        %v4769 = vpack.c.b16 %v4767, %v4767
        %v4770 = vpack.c.b16 %v4768, %v4768
        %v4771 = vunpack.c.l.b16 %v4769
        %v4772 = vunpack.c.l.b16 %v4770
        %v4773 = vrot.slane %v4771, 2
        %v4774 = vrot.slane %v4772, 1
        %v4775 = vsel %vm984, %v4774, %v4773
        %v4776 = vpack.c.b16 %v4775, %v4775
        %v4810 = vunpack.c.l.b16 %v4733
        %v4811 = vunpack.c.h.b16 %v4733
        %v4812 = vunpack.c.l.b16 %v4734
        %v4813 = vunpack.c.l.b16 %v4735
        %v4814 = vunpack.c.h.b16 %v4735
        %v4815 = vunpack.c.l.b16 %v4736
        %v4816 = vunpack.c.l.b16 %v4737
        %v4817 = vunpack.c.h.b16 %v4737
        %v4818 = vunpack.c.l.b16 %v4738
        %v4819 = vunpack.c.l.b16 %v4739
        %v4820 = vunpack.c.h.b16 %v4739
        %v4821 = vunpack.c.l.b16 %v4740
        %v4822 = vunpack.c.l.b16 %v4741
        %v4823 = vunpack.c.h.b16 %v4741
        %v4824 = vunpack.c.l.b16 %v4742
        %v4825 = vunpack.c.l.b16 %v4743
        %v4826 = vunpack.c.h.b16 %v4743
        %v4827 = vunpack.c.l.b16 %v4744
        %v4828 = vunpack.c.l.b16 %v4745
        %v4829 = vunpack.c.h.b16 %v4745
        %v4830 = vunpack.c.l.b16 %v4746
        %v4831 = vunpack.c.l.b16 %v4747
        %v4832 = vunpack.c.h.b16 %v4747
        %v4833 = vunpack.c.l.b16 %v4748
        %v4834 = vunpack.c.l.b16 %v4749
        %v4835 = vunpack.c.h.b16 %v4749
        %v4836 = vunpack.c.l.b16 %v4750
        %v4837 = vunpack.c.l.b16 %v4751
        %v4838 = vunpack.c.h.b16 %v4751
        %v4839 = vunpack.c.l.b16 %v4752
        %v4840 = vunpack.c.l.b16 %v4753
        %v4841 = vunpack.c.h.b16 %v4753
        %v4842 = vunpack.c.l.b16 %v4754
        %v4843 = vunpack.c.l.b16 %v4755
        %v4844 = vunpack.c.h.b16 %v4755
        %v4845 = vunpack.c.l.b16 %v4756
        %v4846 = vunpack.c.l.b16 %v4757
        %v4847 = vunpack.c.h.b16 %v4757
        %v4848 = vunpack.c.l.b16 %v4758
        %v4849 = vunpack.c.l.b16 %v4759
        %v4850 = vunpack.c.h.b16 %v4759
        %v4851 = vunpack.c.l.b16 %v4760
        %v4852 = vunpack.c.l.b16 %v4761
        %v4853 = vunpack.c.h.b16 %v4761
        %v4854 = vunpack.c.l.b16 %v4762
        %v4855 = vunpack.c.l.b16 %v4763
        %v4856 = vunpack.c.h.b16 %v4763
        %v4857 = vunpack.c.l.b16 %v4764
        %v4858 = vpack.c.b16 %v4813, %v4810
        %v4859 = vpack.c.b16 %v4814, %v4811
        %v4860 = vpack.c.b16 %v4815, %v4812
        %v4861 = vpack.c.b16 %v4819, %v4816
        %v4862 = vpack.c.b16 %v4820, %v4817
        %v4863 = vpack.c.b16 %v4821, %v4818
        %v4864 = vpack.c.b16 %v4825, %v4822
        %v4865 = vpack.c.b16 %v4826, %v4823
        %v4866 = vpack.c.b16 %v4827, %v4824
        %v4867 = vpack.c.b16 %v4831, %v4828
        %v4868 = vpack.c.b16 %v4832, %v4829
        %v4869 = vpack.c.b16 %v4833, %v4830
        %v4870 = vpack.c.b16 %v4837, %v4834
        %v4871 = vpack.c.b16 %v4838, %v4835
        %v4872 = vpack.c.b16 %v4839, %v4836
        %v4873 = vpack.c.b16 %v4843, %v4840
        %v4874 = vpack.c.b16 %v4844, %v4841
        %v4875 = vpack.c.b16 %v4845, %v4842
        %v4876 = vpack.c.b16 %v4849, %v4846
        %v4877 = vpack.c.b16 %v4850, %v4847
        %v4878 = vpack.c.b16 %v4851, %v4848
        %v4879 = vpack.c.b16 %v4855, %v4852
        %v4880 = vpack.c.b16 %v4856, %v4853
        %v4881 = vpack.c.b16 %v4857, %v4854
        %4906 = vmatpush.bf16.msra.mxu0 %v4879
        %4907 = vmatpush.bf16.msra.mxu0 %v4876
        %4908 = vmatpush.bf16.msra.mxu0 %v4873
        %4909 = vmatpush.bf16.msra.mxu0 %v4870
        %4910 = vmatpush.bf16.msra.mxu0 %v4867
        %4911 = vmatpush.bf16.msra.mxu0 %v4864
        %4912 = vmatpush.bf16.msra.mxu0 %v4861
        %4913 = vmatpush.bf16.msra.mxu0 %v4858
        %4914 = vmatmul.bf16.gmra.mxu0 %v4776
        %v4915 = vpop.f32.mrf.mxu0
        %v4916 = vadd.f32 0.0, %v4915
        %v4917 = vpop.f32.mrf.mxu0
        %4918 = vdwg.mxu0
        %4919 = vmatpush.bf16.msra.mxu0 %v4880
        %4920 = vmatpush.bf16.msra.mxu0 %v4877
        %4921 = vmatpush.bf16.msra.mxu0 %v4874
        %4922 = vmatpush.bf16.msra.mxu0 %v4871
        %4923 = vmatpush.bf16.msra.mxu0 %v4868
        %4924 = vmatpush.bf16.msra.mxu0 %v4865
        %4925 = vmatpush.bf16.msra.mxu0 %v4862
        %4926 = vmatpush.bf16.msra.mxu0 %v4859
        %4927 = vmatmul.bf16.gmra.mxu0 %v4776
        %v4928 = vpop.f32.mrf.mxu0
        %v4929 = vadd.f32 0.0, %v4928
        %v4930 = vpop.f32.mrf.mxu0
        %4931 = vdwg.mxu0
        %4932 = vmatpush.bf16.msra.mxu0 %v4881
        %4933 = vmatpush.bf16.msra.mxu0 %v4878
        %4934 = vmatpush.bf16.msra.mxu0 %v4875
        %4935 = vmatpush.bf16.msra.mxu0 %v4872
        %4936 = vmatpush.bf16.msra.mxu0 %v4869
        %4937 = vmatpush.bf16.msra.mxu0 %v4866
        %4938 = vmatpush.bf16.msra.mxu0 %v4863
        %4939 = vmatpush.bf16.msra.mxu0 %v4860
        %4940 = vmatmul.bf16.gmra.mxu0 %v4776
        %v4941 = vpop.f32.mrf.mxu0
        %v4942 = vadd.f32 0.0, %v4941
        %v4943 = vpop.f32.mrf.mxu0
        %4944 = vdwg.mxu0
        %v4945 = vadd.f32 %v4727, %v4916
        %v4946 = vadd.f32 %v4728, %v4929
        %v4947 = vadd.f32 %v4729, %v4942
        %s4948 = scalar_lea.vmem %s438, 3648 [#allocation10]
        %v4949 = vld [vmem:[%s4948] sm:$0xff]
        %v4950 = vld [vmem:[%s4948 + $0x8] sm:$0xf]
        %v4951 = vld [vmem:[%s4948 + $0xc] sm:$0xff]
        %v4952 = vld [vmem:[%s4948 + $0x14] sm:$0xf]
        %v4953 = vld [vmem:[%s4948 + $0x18] sm:$0xff]
        %v4954 = vld [vmem:[%s4948 + $0x20] sm:$0xf]
        %v4955 = vld [vmem:[%s4948 + $0x24] sm:$0xff]
        %v4956 = vld [vmem:[%s4948 + $0x2c] sm:$0xf]
        %v4957 = vld [vmem:[%s4948 + $0x30] sm:$0xff]
        %v4958 = vld [vmem:[%s4948 + $0x38] sm:$0xf]
        %v4959 = vld [vmem:[%s4948 + $0x3c] sm:$0xff]
        %v4960 = vld [vmem:[%s4948 + $0x44] sm:$0xf]
        %v4961 = vld [vmem:[%s4948 + $0x48] sm:$0xff]
        %v4962 = vld [vmem:[%s4948 + $0x50] sm:$0xf]
        %v4963 = vld [vmem:[%s4948 + $0x54] sm:$0xff]
        %v4964 = vld [vmem:[%s4948 + $0x5c] sm:$0xf]
        %v4965 = vld [vmem:[%s4948 + $0x60] sm:$0xff]
        %v4966 = vld [vmem:[%s4948 + $0x68] sm:$0xf]
        %v4967 = vld [vmem:[%s4948 + $0x6c] sm:$0xff]
        %v4968 = vld [vmem:[%s4948 + $0x74] sm:$0xf]
        %v4969 = vld [vmem:[%s4948 + $0x78] sm:$0xff]
        %v4970 = vld [vmem:[%s4948 + $0x80] sm:$0xf]
        %v4971 = vld [vmem:[%s4948 + $0x84] sm:$0xff]
        %v4972 = vld [vmem:[%s4948 + $0x8c] sm:$0xf]
        %v4973 = vld [vmem:[%s4948 + $0x90] sm:$0xff]
        %v4974 = vld [vmem:[%s4948 + $0x98] sm:$0xf]
        %v4975 = vld [vmem:[%s4948 + $0x9c] sm:$0xff]
        %v4976 = vld [vmem:[%s4948 + $0xa4] sm:$0xf]
        %v4977 = vld [vmem:[%s4948 + $0xa8] sm:$0xff]
        %v4978 = vld [vmem:[%s4948 + $0xb0] sm:$0xf]
        %v4979 = vld [vmem:[%s4948 + $0xb4] sm:$0xff]
        %v4980 = vld [vmem:[%s4948 + $0xbc] sm:$0xf]
        %v4981 = vrot.slane %v4771, 3
        %v4982 = vrot.slane %v4772, 2
        %v4983 = vsel %vm984, %v4982, %v4981
        %v4984 = vpack.c.b16 %v4983, %v4983
        %v5018 = vunpack.c.l.b16 %v4949
        %v5019 = vunpack.c.h.b16 %v4949
        %v5020 = vunpack.c.l.b16 %v4950
        %v5021 = vunpack.c.l.b16 %v4951
        %v5022 = vunpack.c.h.b16 %v4951
        %v5023 = vunpack.c.l.b16 %v4952
        %v5024 = vunpack.c.l.b16 %v4953
        %v5025 = vunpack.c.h.b16 %v4953
        %v5026 = vunpack.c.l.b16 %v4954
        %v5027 = vunpack.c.l.b16 %v4955
        %v5028 = vunpack.c.h.b16 %v4955
        %v5029 = vunpack.c.l.b16 %v4956
        %v5030 = vunpack.c.l.b16 %v4957
        %v5031 = vunpack.c.h.b16 %v4957
        %v5032 = vunpack.c.l.b16 %v4958
        %v5033 = vunpack.c.l.b16 %v4959
        %v5034 = vunpack.c.h.b16 %v4959
        %v5035 = vunpack.c.l.b16 %v4960
        %v5036 = vunpack.c.l.b16 %v4961
        %v5037 = vunpack.c.h.b16 %v4961
        %v5038 = vunpack.c.l.b16 %v4962
        %v5039 = vunpack.c.l.b16 %v4963
        %v5040 = vunpack.c.h.b16 %v4963
        %v5041 = vunpack.c.l.b16 %v4964
        %v5042 = vunpack.c.l.b16 %v4965
        %v5043 = vunpack.c.h.b16 %v4965
        %v5044 = vunpack.c.l.b16 %v4966
        %v5045 = vunpack.c.l.b16 %v4967
        %v5046 = vunpack.c.h.b16 %v4967
        %v5047 = vunpack.c.l.b16 %v4968
        %v5048 = vunpack.c.l.b16 %v4969
        %v5049 = vunpack.c.h.b16 %v4969
        %v5050 = vunpack.c.l.b16 %v4970
        %v5051 = vunpack.c.l.b16 %v4971
        %v5052 = vunpack.c.h.b16 %v4971
        %v5053 = vunpack.c.l.b16 %v4972
        %v5054 = vunpack.c.l.b16 %v4973
        %v5055 = vunpack.c.h.b16 %v4973
        %v5056 = vunpack.c.l.b16 %v4974
        %v5057 = vunpack.c.l.b16 %v4975
        %v5058 = vunpack.c.h.b16 %v4975
        %v5059 = vunpack.c.l.b16 %v4976
        %v5060 = vunpack.c.l.b16 %v4977
        %v5061 = vunpack.c.h.b16 %v4977
        %v5062 = vunpack.c.l.b16 %v4978
        %v5063 = vunpack.c.l.b16 %v4979
        %v5064 = vunpack.c.h.b16 %v4979
        %v5065 = vunpack.c.l.b16 %v4980
        %v5066 = vpack.c.b16 %v5021, %v5018
        %v5067 = vpack.c.b16 %v5022, %v5019
        %v5068 = vpack.c.b16 %v5023, %v5020
        %v5069 = vpack.c.b16 %v5027, %v5024
        %v5070 = vpack.c.b16 %v5028, %v5025
        %v5071 = vpack.c.b16 %v5029, %v5026
        %v5072 = vpack.c.b16 %v5033, %v5030
        %v5073 = vpack.c.b16 %v5034, %v5031
        %v5074 = vpack.c.b16 %v5035, %v5032
        %v5075 = vpack.c.b16 %v5039, %v5036
        %v5076 = vpack.c.b16 %v5040, %v5037
        %v5077 = vpack.c.b16 %v5041, %v5038
        %v5078 = vpack.c.b16 %v5045, %v5042
        %v5079 = vpack.c.b16 %v5046, %v5043
        %v5080 = vpack.c.b16 %v5047, %v5044
        %v5081 = vpack.c.b16 %v5051, %v5048
        %v5082 = vpack.c.b16 %v5052, %v5049
        %v5083 = vpack.c.b16 %v5053, %v5050
        %v5084 = vpack.c.b16 %v5057, %v5054
        %v5085 = vpack.c.b16 %v5058, %v5055
        %v5086 = vpack.c.b16 %v5059, %v5056
        %v5087 = vpack.c.b16 %v5063, %v5060
        %v5088 = vpack.c.b16 %v5064, %v5061
        %v5089 = vpack.c.b16 %v5065, %v5062
        %5114 = vmatpush.bf16.msra.mxu0 %v5087
        %5115 = vmatpush.bf16.msra.mxu0 %v5084
        %5116 = vmatpush.bf16.msra.mxu0 %v5081
        %5117 = vmatpush.bf16.msra.mxu0 %v5078
        %5118 = vmatpush.bf16.msra.mxu0 %v5075
        %5119 = vmatpush.bf16.msra.mxu0 %v5072
        %5120 = vmatpush.bf16.msra.mxu0 %v5069
        %5121 = vmatpush.bf16.msra.mxu0 %v5066
        %5122 = vmatmul.bf16.gmra.mxu0 %v4984
        %v5123 = vpop.f32.mrf.mxu0
        %v5124 = vadd.f32 0.0, %v5123
        %v5125 = vpop.f32.mrf.mxu0
        %5126 = vdwg.mxu0
        %5127 = vmatpush.bf16.msra.mxu0 %v5088
        %5128 = vmatpush.bf16.msra.mxu0 %v5085
        %5129 = vmatpush.bf16.msra.mxu0 %v5082
        %5130 = vmatpush.bf16.msra.mxu0 %v5079
        %5131 = vmatpush.bf16.msra.mxu0 %v5076
        %5132 = vmatpush.bf16.msra.mxu0 %v5073
        %5133 = vmatpush.bf16.msra.mxu0 %v5070
        %5134 = vmatpush.bf16.msra.mxu0 %v5067
        %5135 = vmatmul.bf16.gmra.mxu0 %v4984
        %v5136 = vpop.f32.mrf.mxu0
        %v5137 = vadd.f32 0.0, %v5136
        %v5138 = vpop.f32.mrf.mxu0
        %5139 = vdwg.mxu0
        %5140 = vmatpush.bf16.msra.mxu0 %v5089
        %5141 = vmatpush.bf16.msra.mxu0 %v5086
        %5142 = vmatpush.bf16.msra.mxu0 %v5083
        %5143 = vmatpush.bf16.msra.mxu0 %v5080
        %5144 = vmatpush.bf16.msra.mxu0 %v5077
        %5145 = vmatpush.bf16.msra.mxu0 %v5074
        %5146 = vmatpush.bf16.msra.mxu0 %v5071
        %5147 = vmatpush.bf16.msra.mxu0 %v5068
        %5148 = vmatmul.bf16.gmra.mxu0 %v4984
        %v5149 = vpop.f32.mrf.mxu0
        %v5150 = vadd.f32 0.0, %v5149
        %v5151 = vpop.f32.mrf.mxu0
        %5152 = vdwg.mxu0
        %v5153 = vadd.f32 %v4945, %v5124
        %v5154 = vadd.f32 %v4946, %v5137
        %v5155 = vadd.f32 %v4947, %v5150
        %v5156 = vld [vmem:[#allocation2 + $0x8] sm:$0x4]
        %v5157 = vld [vmem:[#allocation2 + $0x18] sm:$0x4]
        %s5158 = scalar_lea.vmem %s438, 3840 [#allocation10]
        %v5159 = vld [vmem:[%s5158] sm:$0xff]
        %v5160 = vld [vmem:[%s5158 + $0x8] sm:$0xf]
        %v5161 = vld [vmem:[%s5158 + $0xc] sm:$0xff]
        %v5162 = vld [vmem:[%s5158 + $0x14] sm:$0xf]
        %v5163 = vld [vmem:[%s5158 + $0x18] sm:$0xff]
        %v5164 = vld [vmem:[%s5158 + $0x20] sm:$0xf]
        %v5165 = vld [vmem:[%s5158 + $0x24] sm:$0xff]
        %v5166 = vld [vmem:[%s5158 + $0x2c] sm:$0xf]
        %v5167 = vld [vmem:[%s5158 + $0x30] sm:$0xff]
        %v5168 = vld [vmem:[%s5158 + $0x38] sm:$0xf]
        %v5169 = vld [vmem:[%s5158 + $0x3c] sm:$0xff]
        %v5170 = vld [vmem:[%s5158 + $0x44] sm:$0xf]
        %v5171 = vld [vmem:[%s5158 + $0x48] sm:$0xff]
        %v5172 = vld [vmem:[%s5158 + $0x50] sm:$0xf]
        %v5173 = vld [vmem:[%s5158 + $0x54] sm:$0xff]
        %v5174 = vld [vmem:[%s5158 + $0x5c] sm:$0xf]
        %v5175 = vld [vmem:[%s5158 + $0x60] sm:$0xff]
        %v5176 = vld [vmem:[%s5158 + $0x68] sm:$0xf]
        %v5177 = vld [vmem:[%s5158 + $0x6c] sm:$0xff]
        %v5178 = vld [vmem:[%s5158 + $0x74] sm:$0xf]
        %v5179 = vld [vmem:[%s5158 + $0x78] sm:$0xff]
        %v5180 = vld [vmem:[%s5158 + $0x80] sm:$0xf]
        %v5181 = vld [vmem:[%s5158 + $0x84] sm:$0xff]
        %v5182 = vld [vmem:[%s5158 + $0x8c] sm:$0xf]
        %v5183 = vld [vmem:[%s5158 + $0x90] sm:$0xff]
        %v5184 = vld [vmem:[%s5158 + $0x98] sm:$0xf]
        %v5185 = vld [vmem:[%s5158 + $0x9c] sm:$0xff]
        %v5186 = vld [vmem:[%s5158 + $0xa4] sm:$0xf]
        %v5187 = vld [vmem:[%s5158 + $0xa8] sm:$0xff]
        %v5188 = vld [vmem:[%s5158 + $0xb0] sm:$0xf]
        %v5189 = vld [vmem:[%s5158 + $0xb4] sm:$0xff]
        %v5190 = vld [vmem:[%s5158 + $0xbc] sm:$0xf]
        %v5193 = vunpack.c.l.b16 %v5156
        %v5194 = vunpack.c.l.b16 %v5157
        %v5195 = vpack.c.b16 %v5193, %v5193
        %v5196 = vpack.c.b16 %v5194, %v5194
        %v5197 = vunpack.c.l.b16 %v5195
        %v5198 = vunpack.c.l.b16 %v5196
        %v5199 = vrot.slane %v5197, 4
        %v5200 = vrot.slane %v5198, 3
        %v5201 = vsel %vm984, %v5200, %v5199
        %v5202 = vpack.c.b16 %v5201, %v5201
        %v5236 = vunpack.c.l.b16 %v5159
        %v5237 = vunpack.c.h.b16 %v5159
        %v5238 = vunpack.c.l.b16 %v5160
        %v5239 = vunpack.c.l.b16 %v5161
        %v5240 = vunpack.c.h.b16 %v5161
        %v5241 = vunpack.c.l.b16 %v5162
        %v5242 = vunpack.c.l.b16 %v5163
        %v5243 = vunpack.c.h.b16 %v5163
        %v5244 = vunpack.c.l.b16 %v5164
        %v5245 = vunpack.c.l.b16 %v5165
        %v5246 = vunpack.c.h.b16 %v5165
        %v5247 = vunpack.c.l.b16 %v5166
        %v5248 = vunpack.c.l.b16 %v5167
        %v5249 = vunpack.c.h.b16 %v5167
        %v5250 = vunpack.c.l.b16 %v5168
        %v5251 = vunpack.c.l.b16 %v5169
        %v5252 = vunpack.c.h.b16 %v5169
        %v5253 = vunpack.c.l.b16 %v5170
        %v5254 = vunpack.c.l.b16 %v5171
        %v5255 = vunpack.c.h.b16 %v5171
        %v5256 = vunpack.c.l.b16 %v5172
        %v5257 = vunpack.c.l.b16 %v5173
        %v5258 = vunpack.c.h.b16 %v5173
        %v5259 = vunpack.c.l.b16 %v5174
        %v5260 = vunpack.c.l.b16 %v5175
        %v5261 = vunpack.c.h.b16 %v5175
        %v5262 = vunpack.c.l.b16 %v5176
        %v5263 = vunpack.c.l.b16 %v5177
        %v5264 = vunpack.c.h.b16 %v5177
        %v5265 = vunpack.c.l.b16 %v5178
        %v5266 = vunpack.c.l.b16 %v5179
        %v5267 = vunpack.c.h.b16 %v5179
        %v5268 = vunpack.c.l.b16 %v5180
        %v5269 = vunpack.c.l.b16 %v5181
        %v5270 = vunpack.c.h.b16 %v5181
        %v5271 = vunpack.c.l.b16 %v5182
        %v5272 = vunpack.c.l.b16 %v5183
        %v5273 = vunpack.c.h.b16 %v5183
        %v5274 = vunpack.c.l.b16 %v5184
        %v5275 = vunpack.c.l.b16 %v5185
        %v5276 = vunpack.c.h.b16 %v5185
        %v5277 = vunpack.c.l.b16 %v5186
        %v5278 = vunpack.c.l.b16 %v5187
        %v5279 = vunpack.c.h.b16 %v5187
        %v5280 = vunpack.c.l.b16 %v5188
        %v5281 = vunpack.c.l.b16 %v5189
        %v5282 = vunpack.c.h.b16 %v5189
        %v5283 = vunpack.c.l.b16 %v5190
        %v5284 = vpack.c.b16 %v5239, %v5236
        %v5285 = vpack.c.b16 %v5240, %v5237
        %v5286 = vpack.c.b16 %v5241, %v5238
        %v5287 = vpack.c.b16 %v5245, %v5242
        %v5288 = vpack.c.b16 %v5246, %v5243
        %v5289 = vpack.c.b16 %v5247, %v5244
        %v5290 = vpack.c.b16 %v5251, %v5248
        %v5291 = vpack.c.b16 %v5252, %v5249
        %v5292 = vpack.c.b16 %v5253, %v5250
        %v5293 = vpack.c.b16 %v5257, %v5254
        %v5294 = vpack.c.b16 %v5258, %v5255
        %v5295 = vpack.c.b16 %v5259, %v5256
        %v5296 = vpack.c.b16 %v5263, %v5260
        %v5297 = vpack.c.b16 %v5264, %v5261
        %v5298 = vpack.c.b16 %v5265, %v5262
        %v5299 = vpack.c.b16 %v5269, %v5266
        %v5300 = vpack.c.b16 %v5270, %v5267
        %v5301 = vpack.c.b16 %v5271, %v5268
        %v5302 = vpack.c.b16 %v5275, %v5272
        %v5303 = vpack.c.b16 %v5276, %v5273
        %v5304 = vpack.c.b16 %v5277, %v5274
        %v5305 = vpack.c.b16 %v5281, %v5278
        %v5306 = vpack.c.b16 %v5282, %v5279
        %v5307 = vpack.c.b16 %v5283, %v5280
        %5332 = vmatpush.bf16.msra.mxu0 %v5305
        %5333 = vmatpush.bf16.msra.mxu0 %v5302
        %5334 = vmatpush.bf16.msra.mxu0 %v5299
        %5335 = vmatpush.bf16.msra.mxu0 %v5296
        %5336 = vmatpush.bf16.msra.mxu0 %v5293
        %5337 = vmatpush.bf16.msra.mxu0 %v5290
        %5338 = vmatpush.bf16.msra.mxu0 %v5287
        %5339 = vmatpush.bf16.msra.mxu0 %v5284
        %5340 = vmatmul.bf16.gmra.mxu0 %v5202
        %v5341 = vpop.f32.mrf.mxu0
        %v5342 = vadd.f32 0.0, %v5341
        %v5343 = vpop.f32.mrf.mxu0
        %5344 = vdwg.mxu0
        %5345 = vmatpush.bf16.msra.mxu0 %v5306
        %5346 = vmatpush.bf16.msra.mxu0 %v5303
        %5347 = vmatpush.bf16.msra.mxu0 %v5300
        %5348 = vmatpush.bf16.msra.mxu0 %v5297
        %5349 = vmatpush.bf16.msra.mxu0 %v5294
        %5350 = vmatpush.bf16.msra.mxu0 %v5291
        %5351 = vmatpush.bf16.msra.mxu0 %v5288
        %5352 = vmatpush.bf16.msra.mxu0 %v5285
        %5353 = vmatmul.bf16.gmra.mxu0 %v5202
        %v5354 = vpop.f32.mrf.mxu0
        %v5355 = vadd.f32 0.0, %v5354
        %v5356 = vpop.f32.mrf.mxu0
        %5357 = vdwg.mxu0
        %5358 = vmatpush.bf16.msra.mxu0 %v5307
        %5359 = vmatpush.bf16.msra.mxu0 %v5304
        %5360 = vmatpush.bf16.msra.mxu0 %v5301
        %5361 = vmatpush.bf16.msra.mxu0 %v5298
        %5362 = vmatpush.bf16.msra.mxu0 %v5295
        %5363 = vmatpush.bf16.msra.mxu0 %v5292
        %5364 = vmatpush.bf16.msra.mxu0 %v5289
        %5365 = vmatpush.bf16.msra.mxu0 %v5286
        %5366 = vmatmul.bf16.gmra.mxu0 %v5202
        %v5367 = vpop.f32.mrf.mxu0
        %v5368 = vadd.f32 0.0, %v5367
        %v5369 = vpop.f32.mrf.mxu0
        %5370 = vdwg.mxu0
        %v5371 = vadd.f32 %v5153, %v5342
        %v5372 = vadd.f32 %v5154, %v5355
        %v5373 = vadd.f32 %v5155, %v5368
        %s5374 = scalar_lea.vmem %s438, 4032 [#allocation10]
        %v5375 = vld [vmem:[%s5374] sm:$0xff]
        %v5376 = vld [vmem:[%s5374 + $0x8] sm:$0xf]
        %v5377 = vld [vmem:[%s5374 + $0xc] sm:$0xff]
        %v5378 = vld [vmem:[%s5374 + $0x14] sm:$0xf]
        %v5379 = vld [vmem:[%s5374 + $0x18] sm:$0xff]
        %v5380 = vld [vmem:[%s5374 + $0x20] sm:$0xf]
        %v5381 = vld [vmem:[%s5374 + $0x24] sm:$0xff]
        %v5382 = vld [vmem:[%s5374 + $0x2c] sm:$0xf]
        %v5383 = vld [vmem:[%s5374 + $0x30] sm:$0xff]
        %v5384 = vld [vmem:[%s5374 + $0x38] sm:$0xf]
        %v5385 = vld [vmem:[%s5374 + $0x3c] sm:$0xff]
        %v5386 = vld [vmem:[%s5374 + $0x44] sm:$0xf]
        %v5387 = vld [vmem:[%s5374 + $0x48] sm:$0xff]
        %v5388 = vld [vmem:[%s5374 + $0x50] sm:$0xf]
        %v5389 = vld [vmem:[%s5374 + $0x54] sm:$0xff]
        %v5390 = vld [vmem:[%s5374 + $0x5c] sm:$0xf]
        %v5391 = vld [vmem:[%s5374 + $0x60] sm:$0xff]
        %v5392 = vld [vmem:[%s5374 + $0x68] sm:$0xf]
        %v5393 = vld [vmem:[%s5374 + $0x6c] sm:$0xff]
        %v5394 = vld [vmem:[%s5374 + $0x74] sm:$0xf]
        %v5395 = vld [vmem:[%s5374 + $0x78] sm:$0xff]
        %v5396 = vld [vmem:[%s5374 + $0x80] sm:$0xf]
        %v5397 = vld [vmem:[%s5374 + $0x84] sm:$0xff]
        %v5398 = vld [vmem:[%s5374 + $0x8c] sm:$0xf]
        %v5399 = vld [vmem:[%s5374 + $0x90] sm:$0xff]
        %v5400 = vld [vmem:[%s5374 + $0x98] sm:$0xf]
        %v5401 = vld [vmem:[%s5374 + $0x9c] sm:$0xff]
        %v5402 = vld [vmem:[%s5374 + $0xa4] sm:$0xf]
        %v5403 = vld [vmem:[%s5374 + $0xa8] sm:$0xff]
        %v5404 = vld [vmem:[%s5374 + $0xb0] sm:$0xf]
        %v5405 = vld [vmem:[%s5374 + $0xb4] sm:$0xff]
        %v5406 = vld [vmem:[%s5374 + $0xbc] sm:$0xf]
        %v5407 = vrot.slane %v5197, 5
        %v5408 = vrot.slane %v5198, 4
        %v5409 = vsel %vm984, %v5408, %v5407
        %v5410 = vpack.c.b16 %v5409, %v5409
        %v5444 = vunpack.c.l.b16 %v5375
        %v5445 = vunpack.c.h.b16 %v5375
        %v5446 = vunpack.c.l.b16 %v5376
        %v5447 = vunpack.c.l.b16 %v5377
        %v5448 = vunpack.c.h.b16 %v5377
        %v5449 = vunpack.c.l.b16 %v5378
        %v5450 = vunpack.c.l.b16 %v5379
        %v5451 = vunpack.c.h.b16 %v5379
        %v5452 = vunpack.c.l.b16 %v5380
        %v5453 = vunpack.c.l.b16 %v5381
        %v5454 = vunpack.c.h.b16 %v5381
        %v5455 = vunpack.c.l.b16 %v5382
        %v5456 = vunpack.c.l.b16 %v5383
        %v5457 = vunpack.c.h.b16 %v5383
        %v5458 = vunpack.c.l.b16 %v5384
        %v5459 = vunpack.c.l.b16 %v5385
        %v5460 = vunpack.c.h.b16 %v5385
        %v5461 = vunpack.c.l.b16 %v5386
        %v5462 = vunpack.c.l.b16 %v5387
        %v5463 = vunpack.c.h.b16 %v5387
        %v5464 = vunpack.c.l.b16 %v5388
        %v5465 = vunpack.c.l.b16 %v5389
        %v5466 = vunpack.c.h.b16 %v5389
        %v5467 = vunpack.c.l.b16 %v5390
        %v5468 = vunpack.c.l.b16 %v5391
        %v5469 = vunpack.c.h.b16 %v5391
        %v5470 = vunpack.c.l.b16 %v5392
        %v5471 = vunpack.c.l.b16 %v5393
        %v5472 = vunpack.c.h.b16 %v5393
        %v5473 = vunpack.c.l.b16 %v5394
        %v5474 = vunpack.c.l.b16 %v5395
        %v5475 = vunpack.c.h.b16 %v5395
        %v5476 = vunpack.c.l.b16 %v5396
        %v5477 = vunpack.c.l.b16 %v5397
        %v5478 = vunpack.c.h.b16 %v5397
        %v5479 = vunpack.c.l.b16 %v5398
        %v5480 = vunpack.c.l.b16 %v5399
        %v5481 = vunpack.c.h.b16 %v5399
        %v5482 = vunpack.c.l.b16 %v5400
        %v5483 = vunpack.c.l.b16 %v5401
        %v5484 = vunpack.c.h.b16 %v5401
        %v5485 = vunpack.c.l.b16 %v5402
        %v5486 = vunpack.c.l.b16 %v5403
        %v5487 = vunpack.c.h.b16 %v5403
        %v5488 = vunpack.c.l.b16 %v5404
        %v5489 = vunpack.c.l.b16 %v5405
        %v5490 = vunpack.c.h.b16 %v5405
        %v5491 = vunpack.c.l.b16 %v5406
        %v5492 = vpack.c.b16 %v5447, %v5444
        %v5493 = vpack.c.b16 %v5448, %v5445
        %v5494 = vpack.c.b16 %v5449, %v5446
        %v5495 = vpack.c.b16 %v5453, %v5450
        %v5496 = vpack.c.b16 %v5454, %v5451
        %v5497 = vpack.c.b16 %v5455, %v5452
        %v5498 = vpack.c.b16 %v5459, %v5456
        %v5499 = vpack.c.b16 %v5460, %v5457
        %v5500 = vpack.c.b16 %v5461, %v5458
        %v5501 = vpack.c.b16 %v5465, %v5462
        %v5502 = vpack.c.b16 %v5466, %v5463
        %v5503 = vpack.c.b16 %v5467, %v5464
        %v5504 = vpack.c.b16 %v5471, %v5468
        %v5505 = vpack.c.b16 %v5472, %v5469
        %v5506 = vpack.c.b16 %v5473, %v5470
        %v5507 = vpack.c.b16 %v5477, %v5474
        %v5508 = vpack.c.b16 %v5478, %v5475
        %v5509 = vpack.c.b16 %v5479, %v5476
        %v5510 = vpack.c.b16 %v5483, %v5480
        %v5511 = vpack.c.b16 %v5484, %v5481
        %v5512 = vpack.c.b16 %v5485, %v5482
        %v5513 = vpack.c.b16 %v5489, %v5486
        %v5514 = vpack.c.b16 %v5490, %v5487
        %v5515 = vpack.c.b16 %v5491, %v5488
        %5540 = vmatpush.bf16.msra.mxu0 %v5513
        %5541 = vmatpush.bf16.msra.mxu0 %v5510
        %5542 = vmatpush.bf16.msra.mxu0 %v5507
        %5543 = vmatpush.bf16.msra.mxu0 %v5504
        %5544 = vmatpush.bf16.msra.mxu0 %v5501
        %5545 = vmatpush.bf16.msra.mxu0 %v5498
        %5546 = vmatpush.bf16.msra.mxu0 %v5495
        %5547 = vmatpush.bf16.msra.mxu0 %v5492
        %5548 = vmatmul.bf16.gmra.mxu0 %v5410
        %v5549 = vpop.f32.mrf.mxu0
        %v5550 = vadd.f32 0.0, %v5549
        %v5551 = vpop.f32.mrf.mxu0
        %5552 = vdwg.mxu0
        %5553 = vmatpush.bf16.msra.mxu0 %v5514
        %5554 = vmatpush.bf16.msra.mxu0 %v5511
        %5555 = vmatpush.bf16.msra.mxu0 %v5508
        %5556 = vmatpush.bf16.msra.mxu0 %v5505
        %5557 = vmatpush.bf16.msra.mxu0 %v5502
        %5558 = vmatpush.bf16.msra.mxu0 %v5499
        %5559 = vmatpush.bf16.msra.mxu0 %v5496
        %5560 = vmatpush.bf16.msra.mxu0 %v5493
        %5561 = vmatmul.bf16.gmra.mxu0 %v5410
        %v5562 = vpop.f32.mrf.mxu0
        %v5563 = vadd.f32 0.0, %v5562
        %v5564 = vpop.f32.mrf.mxu0
        %5565 = vdwg.mxu0
        %5566 = vmatpush.bf16.msra.mxu0 %v5515
        %5567 = vmatpush.bf16.msra.mxu0 %v5512
        %5568 = vmatpush.bf16.msra.mxu0 %v5509
        %5569 = vmatpush.bf16.msra.mxu0 %v5506
        %5570 = vmatpush.bf16.msra.mxu0 %v5503
        %5571 = vmatpush.bf16.msra.mxu0 %v5500
        %5572 = vmatpush.bf16.msra.mxu0 %v5497
        %5573 = vmatpush.bf16.msra.mxu0 %v5494
        %5574 = vmatmul.bf16.gmra.mxu0 %v5410
        %v5575 = vpop.f32.mrf.mxu0
        %v5576 = vadd.f32 0.0, %v5575
        %v5577 = vpop.f32.mrf.mxu0
        %5578 = vdwg.mxu0
        %v5579 = vadd.f32 %v5371, %v5550
        %v5580 = vadd.f32 %v5372, %v5563
        %v5581 = vadd.f32 %v5373, %v5576
        %v5582 = vld [vmem:[#allocation2 + $0x8] sm:$0x8]
        %v5583 = vld [vmem:[#allocation2 + $0x18] sm:$0x8]
        %s5584 = scalar_lea.vmem %s438, 4224 [#allocation10]
        %v5585 = vld [vmem:[%s5584] sm:$0xff]
        %v5586 = vld [vmem:[%s5584 + $0x8] sm:$0xf]
        %v5587 = vld [vmem:[%s5584 + $0xc] sm:$0xff]
        %v5588 = vld [vmem:[%s5584 + $0x14] sm:$0xf]
        %v5589 = vld [vmem:[%s5584 + $0x18] sm:$0xff]
        %v5590 = vld [vmem:[%s5584 + $0x20] sm:$0xf]
        %v5591 = vld [vmem:[%s5584 + $0x24] sm:$0xff]
        %v5592 = vld [vmem:[%s5584 + $0x2c] sm:$0xf]
        %v5593 = vld [vmem:[%s5584 + $0x30] sm:$0xff]
        %v5594 = vld [vmem:[%s5584 + $0x38] sm:$0xf]
        %v5595 = vld [vmem:[%s5584 + $0x3c] sm:$0xff]
        %v5596 = vld [vmem:[%s5584 + $0x44] sm:$0xf]
        %v5597 = vld [vmem:[%s5584 + $0x48] sm:$0xff]
        %v5598 = vld [vmem:[%s5584 + $0x50] sm:$0xf]
        %v5599 = vld [vmem:[%s5584 + $0x54] sm:$0xff]
        %v5600 = vld [vmem:[%s5584 + $0x5c] sm:$0xf]
        %v5601 = vld [vmem:[%s5584 + $0x60] sm:$0xff]
        %v5602 = vld [vmem:[%s5584 + $0x68] sm:$0xf]
        %v5603 = vld [vmem:[%s5584 + $0x6c] sm:$0xff]
        %v5604 = vld [vmem:[%s5584 + $0x74] sm:$0xf]
        %v5605 = vld [vmem:[%s5584 + $0x78] sm:$0xff]
        %v5606 = vld [vmem:[%s5584 + $0x80] sm:$0xf]
        %v5607 = vld [vmem:[%s5584 + $0x84] sm:$0xff]
        %v5608 = vld [vmem:[%s5584 + $0x8c] sm:$0xf]
        %v5609 = vld [vmem:[%s5584 + $0x90] sm:$0xff]
        %v5610 = vld [vmem:[%s5584 + $0x98] sm:$0xf]
        %v5611 = vld [vmem:[%s5584 + $0x9c] sm:$0xff]
        %v5612 = vld [vmem:[%s5584 + $0xa4] sm:$0xf]
        %v5613 = vld [vmem:[%s5584 + $0xa8] sm:$0xff]
        %v5614 = vld [vmem:[%s5584 + $0xb0] sm:$0xf]
        %v5615 = vld [vmem:[%s5584 + $0xb4] sm:$0xff]
        %v5616 = vld [vmem:[%s5584 + $0xbc] sm:$0xf]
        %v5619 = vunpack.c.l.b16 %v5582
        %v5620 = vunpack.c.l.b16 %v5583
        %v5621 = vpack.c.b16 %v5619, %v5619
        %v5622 = vpack.c.b16 %v5620, %v5620
        %v5623 = vunpack.c.l.b16 %v5621
        %v5624 = vunpack.c.l.b16 %v5622
        %v5625 = vrot.slane %v5623, 6
        %v5626 = vrot.slane %v5624, 5
        %v5627 = vsel %vm984, %v5626, %v5625
        %v5628 = vpack.c.b16 %v5627, %v5627
        %v5662 = vunpack.c.l.b16 %v5585
        %v5663 = vunpack.c.h.b16 %v5585
        %v5664 = vunpack.c.l.b16 %v5586
        %v5665 = vunpack.c.l.b16 %v5587
        %v5666 = vunpack.c.h.b16 %v5587
        %v5667 = vunpack.c.l.b16 %v5588
        %v5668 = vunpack.c.l.b16 %v5589
        %v5669 = vunpack.c.h.b16 %v5589
        %v5670 = vunpack.c.l.b16 %v5590
        %v5671 = vunpack.c.l.b16 %v5591
        %v5672 = vunpack.c.h.b16 %v5591
        %v5673 = vunpack.c.l.b16 %v5592
        %v5674 = vunpack.c.l.b16 %v5593
        %v5675 = vunpack.c.h.b16 %v5593
        %v5676 = vunpack.c.l.b16 %v5594
        %v5677 = vunpack.c.l.b16 %v5595
        %v5678 = vunpack.c.h.b16 %v5595
        %v5679 = vunpack.c.l.b16 %v5596
        %v5680 = vunpack.c.l.b16 %v5597
        %v5681 = vunpack.c.h.b16 %v5597
        %v5682 = vunpack.c.l.b16 %v5598
        %v5683 = vunpack.c.l.b16 %v5599
        %v5684 = vunpack.c.h.b16 %v5599
        %v5685 = vunpack.c.l.b16 %v5600
        %v5686 = vunpack.c.l.b16 %v5601
        %v5687 = vunpack.c.h.b16 %v5601
        %v5688 = vunpack.c.l.b16 %v5602
        %v5689 = vunpack.c.l.b16 %v5603
        %v5690 = vunpack.c.h.b16 %v5603
        %v5691 = vunpack.c.l.b16 %v5604
        %v5692 = vunpack.c.l.b16 %v5605
        %v5693 = vunpack.c.h.b16 %v5605
        %v5694 = vunpack.c.l.b16 %v5606
        %v5695 = vunpack.c.l.b16 %v5607
        %v5696 = vunpack.c.h.b16 %v5607
        %v5697 = vunpack.c.l.b16 %v5608
        %v5698 = vunpack.c.l.b16 %v5609
        %v5699 = vunpack.c.h.b16 %v5609
        %v5700 = vunpack.c.l.b16 %v5610
        %v5701 = vunpack.c.l.b16 %v5611
        %v5702 = vunpack.c.h.b16 %v5611
        %v5703 = vunpack.c.l.b16 %v5612
        %v5704 = vunpack.c.l.b16 %v5613
        %v5705 = vunpack.c.h.b16 %v5613
        %v5706 = vunpack.c.l.b16 %v5614
        %v5707 = vunpack.c.l.b16 %v5615
        %v5708 = vunpack.c.h.b16 %v5615
        %v5709 = vunpack.c.l.b16 %v5616
        %v5710 = vpack.c.b16 %v5665, %v5662
        %v5711 = vpack.c.b16 %v5666, %v5663
        %v5712 = vpack.c.b16 %v5667, %v5664
        %v5713 = vpack.c.b16 %v5671, %v5668
        %v5714 = vpack.c.b16 %v5672, %v5669
        %v5715 = vpack.c.b16 %v5673, %v5670
        %v5716 = vpack.c.b16 %v5677, %v5674
        %v5717 = vpack.c.b16 %v5678, %v5675
        %v5718 = vpack.c.b16 %v5679, %v5676
        %v5719 = vpack.c.b16 %v5683, %v5680
        %v5720 = vpack.c.b16 %v5684, %v5681
        %v5721 = vpack.c.b16 %v5685, %v5682
        %v5722 = vpack.c.b16 %v5689, %v5686
        %v5723 = vpack.c.b16 %v5690, %v5687
        %v5724 = vpack.c.b16 %v5691, %v5688
        %v5725 = vpack.c.b16 %v5695, %v5692
        %v5726 = vpack.c.b16 %v5696, %v5693
        %v5727 = vpack.c.b16 %v5697, %v5694
        %v5728 = vpack.c.b16 %v5701, %v5698
        %v5729 = vpack.c.b16 %v5702, %v5699
        %v5730 = vpack.c.b16 %v5703, %v5700
        %v5731 = vpack.c.b16 %v5707, %v5704
        %v5732 = vpack.c.b16 %v5708, %v5705
        %v5733 = vpack.c.b16 %v5709, %v5706
        %5758 = vmatpush.bf16.msra.mxu0 %v5731
        %5759 = vmatpush.bf16.msra.mxu0 %v5728
        %5760 = vmatpush.bf16.msra.mxu0 %v5725
        %5761 = vmatpush.bf16.msra.mxu0 %v5722
        %5762 = vmatpush.bf16.msra.mxu0 %v5719
        %5763 = vmatpush.bf16.msra.mxu0 %v5716
        %5764 = vmatpush.bf16.msra.mxu0 %v5713
        %5765 = vmatpush.bf16.msra.mxu0 %v5710
        %5766 = vmatmul.bf16.gmra.mxu0 %v5628
        %v5767 = vpop.f32.mrf.mxu0
        %v5768 = vadd.f32 0.0, %v5767
        %v5769 = vpop.f32.mrf.mxu0
        %5770 = vdwg.mxu0
        %5771 = vmatpush.bf16.msra.mxu0 %v5732
        %5772 = vmatpush.bf16.msra.mxu0 %v5729
        %5773 = vmatpush.bf16.msra.mxu0 %v5726
        %5774 = vmatpush.bf16.msra.mxu0 %v5723
        %5775 = vmatpush.bf16.msra.mxu0 %v5720
        %5776 = vmatpush.bf16.msra.mxu0 %v5717
        %5777 = vmatpush.bf16.msra.mxu0 %v5714
        %5778 = vmatpush.bf16.msra.mxu0 %v5711
        %5779 = vmatmul.bf16.gmra.mxu0 %v5628
        %v5780 = vpop.f32.mrf.mxu0
        %v5781 = vadd.f32 0.0, %v5780
        %v5782 = vpop.f32.mrf.mxu0
        %5783 = vdwg.mxu0
        %5784 = vmatpush.bf16.msra.mxu0 %v5733
        %5785 = vmatpush.bf16.msra.mxu0 %v5730
        %5786 = vmatpush.bf16.msra.mxu0 %v5727
        %5787 = vmatpush.bf16.msra.mxu0 %v5724
        %5788 = vmatpush.bf16.msra.mxu0 %v5721
        %5789 = vmatpush.bf16.msra.mxu0 %v5718
        %5790 = vmatpush.bf16.msra.mxu0 %v5715
        %5791 = vmatpush.bf16.msra.mxu0 %v5712
        %5792 = vmatmul.bf16.gmra.mxu0 %v5628
        %v5793 = vpop.f32.mrf.mxu0
        %v5794 = vadd.f32 0.0, %v5793
        %v5795 = vpop.f32.mrf.mxu0
        %5796 = vdwg.mxu0
        %v5797 = vadd.f32 %v5579, %v5768
        %v5798 = vadd.f32 %v5580, %v5781
        %v5799 = vadd.f32 %v5581, %v5794
        %s5800 = scalar_lea.vmem %s438, 4416 [#allocation10]
        %v5801 = vld [vmem:[%s5800] sm:$0xff]
        %v5802 = vld [vmem:[%s5800 + $0x8] sm:$0xf]
        %v5803 = vld [vmem:[%s5800 + $0xc] sm:$0xff]
        %v5804 = vld [vmem:[%s5800 + $0x14] sm:$0xf]
        %v5805 = vld [vmem:[%s5800 + $0x18] sm:$0xff]
        %v5806 = vld [vmem:[%s5800 + $0x20] sm:$0xf]
        %v5807 = vld [vmem:[%s5800 + $0x24] sm:$0xff]
        %v5808 = vld [vmem:[%s5800 + $0x2c] sm:$0xf]
        %v5809 = vld [vmem:[%s5800 + $0x30] sm:$0xff]
        %v5810 = vld [vmem:[%s5800 + $0x38] sm:$0xf]
        %v5811 = vld [vmem:[%s5800 + $0x3c] sm:$0xff]
        %v5812 = vld [vmem:[%s5800 + $0x44] sm:$0xf]
        %v5813 = vld [vmem:[%s5800 + $0x48] sm:$0xff]
        %v5814 = vld [vmem:[%s5800 + $0x50] sm:$0xf]
        %v5815 = vld [vmem:[%s5800 + $0x54] sm:$0xff]
        %v5816 = vld [vmem:[%s5800 + $0x5c] sm:$0xf]
        %v5817 = vld [vmem:[%s5800 + $0x60] sm:$0xff]
        %v5818 = vld [vmem:[%s5800 + $0x68] sm:$0xf]
        %v5819 = vld [vmem:[%s5800 + $0x6c] sm:$0xff]
        %v5820 = vld [vmem:[%s5800 + $0x74] sm:$0xf]
        %v5821 = vld [vmem:[%s5800 + $0x78] sm:$0xff]
        %v5822 = vld [vmem:[%s5800 + $0x80] sm:$0xf]
        %v5823 = vld [vmem:[%s5800 + $0x84] sm:$0xff]
        %v5824 = vld [vmem:[%s5800 + $0x8c] sm:$0xf]
        %v5825 = vld [vmem:[%s5800 + $0x90] sm:$0xff]
        %v5826 = vld [vmem:[%s5800 + $0x98] sm:$0xf]
        %v5827 = vld [vmem:[%s5800 + $0x9c] sm:$0xff]
        %v5828 = vld [vmem:[%s5800 + $0xa4] sm:$0xf]
        %v5829 = vld [vmem:[%s5800 + $0xa8] sm:$0xff]
        %v5830 = vld [vmem:[%s5800 + $0xb0] sm:$0xf]
        %v5831 = vld [vmem:[%s5800 + $0xb4] sm:$0xff]
        %v5832 = vld [vmem:[%s5800 + $0xbc] sm:$0xf]
        %v5833 = vrot.slane %v5623, 7
        %v5834 = vrot.slane %v5624, 6
        %v5835 = vsel %vm984, %v5834, %v5833
        %v5836 = vpack.c.b16 %v5835, %v5835
        %v5870 = vunpack.c.l.b16 %v5801
        %v5871 = vunpack.c.h.b16 %v5801
        %v5872 = vunpack.c.l.b16 %v5802
        %v5873 = vunpack.c.l.b16 %v5803
        %v5874 = vunpack.c.h.b16 %v5803
        %v5875 = vunpack.c.l.b16 %v5804
        %v5876 = vunpack.c.l.b16 %v5805
        %v5877 = vunpack.c.h.b16 %v5805
        %v5878 = vunpack.c.l.b16 %v5806
        %v5879 = vunpack.c.l.b16 %v5807
        %v5880 = vunpack.c.h.b16 %v5807
        %v5881 = vunpack.c.l.b16 %v5808
        %v5882 = vunpack.c.l.b16 %v5809
        %v5883 = vunpack.c.h.b16 %v5809
        %v5884 = vunpack.c.l.b16 %v5810
        %v5885 = vunpack.c.l.b16 %v5811
        %v5886 = vunpack.c.h.b16 %v5811
        %v5887 = vunpack.c.l.b16 %v5812
        %v5888 = vunpack.c.l.b16 %v5813
        %v5889 = vunpack.c.h.b16 %v5813
        %v5890 = vunpack.c.l.b16 %v5814
        %v5891 = vunpack.c.l.b16 %v5815
        %v5892 = vunpack.c.h.b16 %v5815
        %v5893 = vunpack.c.l.b16 %v5816
        %v5894 = vunpack.c.l.b16 %v5817
        %v5895 = vunpack.c.h.b16 %v5817
        %v5896 = vunpack.c.l.b16 %v5818
        %v5897 = vunpack.c.l.b16 %v5819
        %v5898 = vunpack.c.h.b16 %v5819
        %v5899 = vunpack.c.l.b16 %v5820
        %v5900 = vunpack.c.l.b16 %v5821
        %v5901 = vunpack.c.h.b16 %v5821
        %v5902 = vunpack.c.l.b16 %v5822
        %v5903 = vunpack.c.l.b16 %v5823
        %v5904 = vunpack.c.h.b16 %v5823
        %v5905 = vunpack.c.l.b16 %v5824
        %v5906 = vunpack.c.l.b16 %v5825
        %v5907 = vunpack.c.h.b16 %v5825
        %v5908 = vunpack.c.l.b16 %v5826
        %v5909 = vunpack.c.l.b16 %v5827
        %v5910 = vunpack.c.h.b16 %v5827
        %v5911 = vunpack.c.l.b16 %v5828
        %v5912 = vunpack.c.l.b16 %v5829
        %v5913 = vunpack.c.h.b16 %v5829
        %v5914 = vunpack.c.l.b16 %v5830
        %v5915 = vunpack.c.l.b16 %v5831
        %v5916 = vunpack.c.h.b16 %v5831
        %v5917 = vunpack.c.l.b16 %v5832
        %v5918 = vpack.c.b16 %v5873, %v5870
        %v5919 = vpack.c.b16 %v5874, %v5871
        %v5920 = vpack.c.b16 %v5875, %v5872
        %v5921 = vpack.c.b16 %v5879, %v5876
        %v5922 = vpack.c.b16 %v5880, %v5877
        %v5923 = vpack.c.b16 %v5881, %v5878
        %v5924 = vpack.c.b16 %v5885, %v5882
        %v5925 = vpack.c.b16 %v5886, %v5883
        %v5926 = vpack.c.b16 %v5887, %v5884
        %v5927 = vpack.c.b16 %v5891, %v5888
        %v5928 = vpack.c.b16 %v5892, %v5889
        %v5929 = vpack.c.b16 %v5893, %v5890
        %v5930 = vpack.c.b16 %v5897, %v5894
        %v5931 = vpack.c.b16 %v5898, %v5895
        %v5932 = vpack.c.b16 %v5899, %v5896
        %v5933 = vpack.c.b16 %v5903, %v5900
        %v5934 = vpack.c.b16 %v5904, %v5901
        %v5935 = vpack.c.b16 %v5905, %v5902
        %v5936 = vpack.c.b16 %v5909, %v5906
        %v5937 = vpack.c.b16 %v5910, %v5907
        %v5938 = vpack.c.b16 %v5911, %v5908
        %v5939 = vpack.c.b16 %v5915, %v5912
        %v5940 = vpack.c.b16 %v5916, %v5913
        %v5941 = vpack.c.b16 %v5917, %v5914
        %5966 = vmatpush.bf16.msra.mxu0 %v5939
        %5967 = vmatpush.bf16.msra.mxu0 %v5936
        %5968 = vmatpush.bf16.msra.mxu0 %v5933
        %5969 = vmatpush.bf16.msra.mxu0 %v5930
        %5970 = vmatpush.bf16.msra.mxu0 %v5927
        %5971 = vmatpush.bf16.msra.mxu0 %v5924
        %5972 = vmatpush.bf16.msra.mxu0 %v5921
        %5973 = vmatpush.bf16.msra.mxu0 %v5918
        %5974 = vmatmul.bf16.gmra.mxu0 %v5836
        %v5975 = vpop.f32.mrf.mxu0
        %v5976 = vadd.f32 0.0, %v5975
        %v5977 = vpop.f32.mrf.mxu0
        %5978 = vdwg.mxu0
        %5979 = vmatpush.bf16.msra.mxu0 %v5940
        %5980 = vmatpush.bf16.msra.mxu0 %v5937
        %5981 = vmatpush.bf16.msra.mxu0 %v5934
        %5982 = vmatpush.bf16.msra.mxu0 %v5931
        %5983 = vmatpush.bf16.msra.mxu0 %v5928
        %5984 = vmatpush.bf16.msra.mxu0 %v5925
        %5985 = vmatpush.bf16.msra.mxu0 %v5922
        %5986 = vmatpush.bf16.msra.mxu0 %v5919
        %5987 = vmatmul.bf16.gmra.mxu0 %v5836
        %v5988 = vpop.f32.mrf.mxu0
        %v5989 = vadd.f32 0.0, %v5988
        %v5990 = vpop.f32.mrf.mxu0
        %5991 = vdwg.mxu0
        %5992 = vmatpush.bf16.msra.mxu0 %v5941
        %5993 = vmatpush.bf16.msra.mxu0 %v5938
        %5994 = vmatpush.bf16.msra.mxu0 %v5935
        %5995 = vmatpush.bf16.msra.mxu0 %v5932
        %5996 = vmatpush.bf16.msra.mxu0 %v5929
        %5997 = vmatpush.bf16.msra.mxu0 %v5926
        %5998 = vmatpush.bf16.msra.mxu0 %v5923
        %5999 = vmatpush.bf16.msra.mxu0 %v5920
        %6000 = vmatmul.bf16.gmra.mxu0 %v5836
        %v6001 = vpop.f32.mrf.mxu0
        %v6002 = vadd.f32 0.0, %v6001
        %v6003 = vpop.f32.mrf.mxu0
        %6004 = vdwg.mxu0
        %v6005 = vadd.f32 %v5797, %v5976
        %v6006 = vadd.f32 %v5798, %v5989
        %v6007 = vadd.f32 %v5799, %v6002
        %v6008 = vld [vmem:[#allocation2 + $0xc] sm:$0x1]
        %v6009 = vld [vmem:[#allocation2 + $0x1c] sm:$0x1]
        %s6010 = scalar_lea.vmem %s438, 4608 [#allocation10]
        %v6011 = vld [vmem:[%s6010] sm:$0xff]
        %v6012 = vld [vmem:[%s6010 + $0x8] sm:$0xf]
        %v6013 = vld [vmem:[%s6010 + $0xc] sm:$0xff]
        %v6014 = vld [vmem:[%s6010 + $0x14] sm:$0xf]
        %v6015 = vld [vmem:[%s6010 + $0x18] sm:$0xff]
        %v6016 = vld [vmem:[%s6010 + $0x20] sm:$0xf]
        %v6017 = vld [vmem:[%s6010 + $0x24] sm:$0xff]
        %v6018 = vld [vmem:[%s6010 + $0x2c] sm:$0xf]
        %v6019 = vld [vmem:[%s6010 + $0x30] sm:$0xff]
        %v6020 = vld [vmem:[%s6010 + $0x38] sm:$0xf]
        %v6021 = vld [vmem:[%s6010 + $0x3c] sm:$0xff]
        %v6022 = vld [vmem:[%s6010 + $0x44] sm:$0xf]
        %v6023 = vld [vmem:[%s6010 + $0x48] sm:$0xff]
        %v6024 = vld [vmem:[%s6010 + $0x50] sm:$0xf]
        %v6025 = vld [vmem:[%s6010 + $0x54] sm:$0xff]
        %v6026 = vld [vmem:[%s6010 + $0x5c] sm:$0xf]
        %v6027 = vld [vmem:[%s6010 + $0x60] sm:$0xff]
        %v6028 = vld [vmem:[%s6010 + $0x68] sm:$0xf]
        %v6029 = vld [vmem:[%s6010 + $0x6c] sm:$0xff]
        %v6030 = vld [vmem:[%s6010 + $0x74] sm:$0xf]
        %v6031 = vld [vmem:[%s6010 + $0x78] sm:$0xff]
        %v6032 = vld [vmem:[%s6010 + $0x80] sm:$0xf]
        %v6033 = vld [vmem:[%s6010 + $0x84] sm:$0xff]
        %v6034 = vld [vmem:[%s6010 + $0x8c] sm:$0xf]
        %v6035 = vld [vmem:[%s6010 + $0x90] sm:$0xff]
        %v6036 = vld [vmem:[%s6010 + $0x98] sm:$0xf]
        %v6037 = vld [vmem:[%s6010 + $0x9c] sm:$0xff]
        %v6038 = vld [vmem:[%s6010 + $0xa4] sm:$0xf]
        %v6039 = vld [vmem:[%s6010 + $0xa8] sm:$0xff]
        %v6040 = vld [vmem:[%s6010 + $0xb0] sm:$0xf]
        %v6041 = vld [vmem:[%s6010 + $0xb4] sm:$0xff]
        %v6042 = vld [vmem:[%s6010 + $0xbc] sm:$0xf]
        %v6045 = vunpack.c.l.b16 %v6008
        %v6046 = vunpack.c.l.b16 %v6009
        %v6047 = vpack.c.b16 %v6045, %v6045
        %v6048 = vpack.c.b16 %v6046, %v6046
        %v6049 = vunpack.c.l.b16 %v6047
        %v6050 = vunpack.c.l.b16 %v6048
        %v6051 = vrot.slane %v6050, 7
        %v6052 = vsel %vm984, %v6051, %v6049
        %v6053 = vpack.c.b16 %v6052, %v6052
        %v6087 = vunpack.c.l.b16 %v6011
        %v6088 = vunpack.c.h.b16 %v6011
        %v6089 = vunpack.c.l.b16 %v6012
        %v6090 = vunpack.c.l.b16 %v6013
        %v6091 = vunpack.c.h.b16 %v6013
        %v6092 = vunpack.c.l.b16 %v6014
        %v6093 = vunpack.c.l.b16 %v6015
        %v6094 = vunpack.c.h.b16 %v6015
        %v6095 = vunpack.c.l.b16 %v6016
        %v6096 = vunpack.c.l.b16 %v6017
        %v6097 = vunpack.c.h.b16 %v6017
        %v6098 = vunpack.c.l.b16 %v6018
        %v6099 = vunpack.c.l.b16 %v6019
        %v6100 = vunpack.c.h.b16 %v6019
        %v6101 = vunpack.c.l.b16 %v6020
        %v6102 = vunpack.c.l.b16 %v6021
        %v6103 = vunpack.c.h.b16 %v6021
        %v6104 = vunpack.c.l.b16 %v6022
        %v6105 = vunpack.c.l.b16 %v6023
        %v6106 = vunpack.c.h.b16 %v6023
        %v6107 = vunpack.c.l.b16 %v6024
        %v6108 = vunpack.c.l.b16 %v6025
        %v6109 = vunpack.c.h.b16 %v6025
        %v6110 = vunpack.c.l.b16 %v6026
        %v6111 = vunpack.c.l.b16 %v6027
        %v6112 = vunpack.c.h.b16 %v6027
        %v6113 = vunpack.c.l.b16 %v6028
        %v6114 = vunpack.c.l.b16 %v6029
        %v6115 = vunpack.c.h.b16 %v6029
        %v6116 = vunpack.c.l.b16 %v6030
        %v6117 = vunpack.c.l.b16 %v6031
        %v6118 = vunpack.c.h.b16 %v6031
        %v6119 = vunpack.c.l.b16 %v6032
        %v6120 = vunpack.c.l.b16 %v6033
        %v6121 = vunpack.c.h.b16 %v6033
        %v6122 = vunpack.c.l.b16 %v6034
        %v6123 = vunpack.c.l.b16 %v6035
        %v6124 = vunpack.c.h.b16 %v6035
        %v6125 = vunpack.c.l.b16 %v6036
        %v6126 = vunpack.c.l.b16 %v6037
        %v6127 = vunpack.c.h.b16 %v6037
        %v6128 = vunpack.c.l.b16 %v6038
        %v6129 = vunpack.c.l.b16 %v6039
        %v6130 = vunpack.c.h.b16 %v6039
        %v6131 = vunpack.c.l.b16 %v6040
        %v6132 = vunpack.c.l.b16 %v6041
        %v6133 = vunpack.c.h.b16 %v6041
        %v6134 = vunpack.c.l.b16 %v6042
        %v6135 = vpack.c.b16 %v6090, %v6087
        %v6136 = vpack.c.b16 %v6091, %v6088
        %v6137 = vpack.c.b16 %v6092, %v6089
        %v6138 = vpack.c.b16 %v6096, %v6093
        %v6139 = vpack.c.b16 %v6097, %v6094
        %v6140 = vpack.c.b16 %v6098, %v6095
        %v6141 = vpack.c.b16 %v6102, %v6099
        %v6142 = vpack.c.b16 %v6103, %v6100
        %v6143 = vpack.c.b16 %v6104, %v6101
        %v6144 = vpack.c.b16 %v6108, %v6105
        %v6145 = vpack.c.b16 %v6109, %v6106
        %v6146 = vpack.c.b16 %v6110, %v6107
        %v6147 = vpack.c.b16 %v6114, %v6111
        %v6148 = vpack.c.b16 %v6115, %v6112
        %v6149 = vpack.c.b16 %v6116, %v6113
        %v6150 = vpack.c.b16 %v6120, %v6117
        %v6151 = vpack.c.b16 %v6121, %v6118
        %v6152 = vpack.c.b16 %v6122, %v6119
        %v6153 = vpack.c.b16 %v6126, %v6123
        %v6154 = vpack.c.b16 %v6127, %v6124
        %v6155 = vpack.c.b16 %v6128, %v6125
        %v6156 = vpack.c.b16 %v6132, %v6129
        %v6157 = vpack.c.b16 %v6133, %v6130
        %v6158 = vpack.c.b16 %v6134, %v6131
        %6183 = vmatpush.bf16.msra.mxu0 %v6156
        %6184 = vmatpush.bf16.msra.mxu0 %v6153
        %6185 = vmatpush.bf16.msra.mxu0 %v6150
        %6186 = vmatpush.bf16.msra.mxu0 %v6147
        %6187 = vmatpush.bf16.msra.mxu0 %v6144
        %6188 = vmatpush.bf16.msra.mxu0 %v6141
        %6189 = vmatpush.bf16.msra.mxu0 %v6138
        %6190 = vmatpush.bf16.msra.mxu0 %v6135
        %6191 = vmatmul.bf16.gmra.mxu0 %v6053
        %v6192 = vpop.f32.mrf.mxu0
        %v6193 = vadd.f32 0.0, %v6192
        %v6194 = vpop.f32.mrf.mxu0
        %6195 = vdwg.mxu0
        %6196 = vmatpush.bf16.msra.mxu0 %v6157
        %6197 = vmatpush.bf16.msra.mxu0 %v6154
        %6198 = vmatpush.bf16.msra.mxu0 %v6151
        %6199 = vmatpush.bf16.msra.mxu0 %v6148
        %6200 = vmatpush.bf16.msra.mxu0 %v6145
        %6201 = vmatpush.bf16.msra.mxu0 %v6142
        %6202 = vmatpush.bf16.msra.mxu0 %v6139
        %6203 = vmatpush.bf16.msra.mxu0 %v6136
        %6204 = vmatmul.bf16.gmra.mxu0 %v6053
        %v6205 = vpop.f32.mrf.mxu0
        %v6206 = vadd.f32 0.0, %v6205
        %v6207 = vpop.f32.mrf.mxu0
        %6208 = vdwg.mxu0
        %6209 = vmatpush.bf16.msra.mxu0 %v6158
        %6210 = vmatpush.bf16.msra.mxu0 %v6155
        %6211 = vmatpush.bf16.msra.mxu0 %v6152
        %6212 = vmatpush.bf16.msra.mxu0 %v6149
        %6213 = vmatpush.bf16.msra.mxu0 %v6146
        %6214 = vmatpush.bf16.msra.mxu0 %v6143
        %6215 = vmatpush.bf16.msra.mxu0 %v6140
        %6216 = vmatpush.bf16.msra.mxu0 %v6137
        %6217 = vmatmul.bf16.gmra.mxu0 %v6053
        %v6218 = vpop.f32.mrf.mxu0
        %v6219 = vadd.f32 0.0, %v6218
        %v6220 = vpop.f32.mrf.mxu0
        %6221 = vdwg.mxu0
        %v6222 = vadd.f32 %v6005, %v6193
        %v6223 = vadd.f32 %v6006, %v6206
        %v6224 = vadd.f32 %v6007, %v6219
        %v6225 = vld [vmem:[%s448] sm:$0x7]
        %v6227 = vperm.slane %v6225, 0
        %v6228 = vperm.slane %v6225, 1
        %v6229 = vperm.slane %v6225, 2
        %v6233 = vmul.f32 %v6222, %v6227
        %v6234 = vmul.f32 %v6223, %v6228
        %v6235 = vmul.f32 %v6224, %v6229
        %v6236 = vld [vmem:[%s458] sm:$0x7]
        %v6238 = vperm.slane %v6236, 0
        %v6239 = vperm.slane %v6236, 1
        %v6240 = vperm.slane %v6236, 2
        %v6244 = vadd.f32 %v6233, %v6238
        %v6245 = vadd.f32 %v6234, %v6239
        %v6246 = vadd.f32 %v6235, %v6240
        %v6247 = vmax.f32 %v6244, 0.0
        %v6248 = vmax.f32 %v6245, 0.0
        %v6249 = vmax.f32 %v6246, 0.0
        %v6250 = vld [vmem:[%s468] sm:$0xff]
        %v6251 = vld [vmem:[%s468 + $0x8] sm:$0xff]
        %v6252 = vld [vmem:[%s468 + $0x10] sm:$0xff]
        %v6253 = vld [vmem:[%s468 + $0x18] sm:$0xff]
        %v6254 = vld [vmem:[%s468 + $0x20] sm:$0xff]
        %v6255 = vld [vmem:[%s468 + $0x28] sm:$0xff]
        %v6256 = vld [vmem:[%s468 + $0x30] sm:$0xff]
        %v6257 = vld [vmem:[%s468 + $0x38] sm:$0xff]
        %v6258 = vld [vmem:[%s468 + $0x40] sm:$0xff]
        %v6259 = vld [vmem:[%s468 + $0x48] sm:$0xff]
        %v6260 = vld [vmem:[%s468 + $0x50] sm:$0xff]
        %v6261 = vld [vmem:[%s468 + $0x58] sm:$0xff]
        %v6262 = vld [vmem:[%s468 + $0x60] sm:$0xff]
        %v6263 = vld [vmem:[%s468 + $0x68] sm:$0xff]
        %v6264 = vld [vmem:[%s468 + $0x70] sm:$0xff]
        %v6265 = vld [vmem:[%s468 + $0x78] sm:$0xff]
        %v6266 = vld [vmem:[%s468 + $0x80] sm:$0xff]
        %v6267 = vld [vmem:[%s468 + $0x88] sm:$0xff]
        %v6268 = vld [vmem:[%s468 + $0x90] sm:$0xff]
        %v6269 = vld [vmem:[%s468 + $0x98] sm:$0xff]
        %v6270 = vld [vmem:[%s468 + $0xa0] sm:$0xff]
        %v6271 = vld [vmem:[%s468 + $0xa8] sm:$0xff]
        %v6272 = vld [vmem:[%s468 + $0xb0] sm:$0xff]
        %v6273 = vld [vmem:[%s468 + $0xb8] sm:$0xff]
        %v6274 = vld [vmem:[%s468 + $0xc0] sm:$0xff]
        %v6275 = vld [vmem:[%s468 + $0xc8] sm:$0xff]
        %v6276 = vld [vmem:[%s468 + $0xd0] sm:$0xff]
        %v6277 = vld [vmem:[%s468 + $0xd8] sm:$0xff]
        %v6278 = vld [vmem:[%s468 + $0xe0] sm:$0xff]
        %v6279 = vld [vmem:[%s468 + $0xe8] sm:$0xff]
        %v6280 = vld [vmem:[%s468 + $0xf0] sm:$0xff]
        %v6281 = vld [vmem:[%s468 + $0xf8] sm:$0xff]
        %v6282 = vld [vmem:[%s468 + $0x100] sm:$0xff]
        %v6283 = vld [vmem:[%s468 + $0x108] sm:$0xff]
        %v6284 = vld [vmem:[%s468 + $0x110] sm:$0xff]
        %v6285 = vld [vmem:[%s468 + $0x118] sm:$0xff]
        %v6286 = vld [vmem:[%s468 + $0x120] sm:$0xff]
        %v6287 = vld [vmem:[%s468 + $0x128] sm:$0xff]
        %v6288 = vld [vmem:[%s468 + $0x130] sm:$0xff]
        %v6289 = vld [vmem:[%s468 + $0x138] sm:$0xff]
        %v6290 = vld [vmem:[%s468 + $0x140] sm:$0xff]
        %v6291 = vld [vmem:[%s468 + $0x148] sm:$0xff]
        %v6292 = vld [vmem:[%s468 + $0x150] sm:$0xff]
        %v6293 = vld [vmem:[%s468 + $0x158] sm:$0xff]
        %v6294 = vld [vmem:[%s468 + $0x160] sm:$0xff]
        %v6295 = vld [vmem:[%s468 + $0x168] sm:$0xff]
        %v6296 = vld [vmem:[%s468 + $0x170] sm:$0xff]
        %v6297 = vld [vmem:[%s468 + $0x178] sm:$0xff]
        %6298 = vmatpush.msra.mxu0 %v6265
        %6299 = vmatpush.msra.mxu0 %v6264
        %6300 = vmatpush.msra.mxu0 %v6263
        %6301 = vmatpush.msra.mxu0 %v6262
        %6302 = vmatpush.msra.mxu0 %v6261
        %6303 = vmatpush.msra.mxu0 %v6260
        %6304 = vmatpush.msra.mxu0 %v6259
        %6305 = vmatpush.msra.mxu0 %v6258
        %6306 = vmatpush.msra.mxu0 %v6257
        %6307 = vmatpush.msra.mxu0 %v6256
        %6308 = vmatpush.msra.mxu0 %v6255
        %6309 = vmatpush.msra.mxu0 %v6254
        %6310 = vmatpush.msra.mxu0 %v6253
        %6311 = vmatpush.msra.mxu0 %v6252
        %6312 = vmatpush.msra.mxu0 %v6251
        %6313 = vmatpush.msra.mxu0 %v6250
        %6314 = vmatmul.f32.gmra.mxu0 %v6247
        %v6315 = vpop.f32.mrf.mxu0
        %v6316 = vadd.f32 0.0, %v6315
        %6317 = vdwg.mxu0
        %6318 = vmatpush.msra.mxu0 %v6281
        %6319 = vmatpush.msra.mxu0 %v6280
        %6320 = vmatpush.msra.mxu0 %v6279
        %6321 = vmatpush.msra.mxu0 %v6278
        %6322 = vmatpush.msra.mxu0 %v6277
        %6323 = vmatpush.msra.mxu0 %v6276
        %6324 = vmatpush.msra.mxu0 %v6275
        %6325 = vmatpush.msra.mxu0 %v6274
        %6326 = vmatpush.msra.mxu0 %v6273
        %6327 = vmatpush.msra.mxu0 %v6272
        %6328 = vmatpush.msra.mxu0 %v6271
        %6329 = vmatpush.msra.mxu0 %v6270
        %6330 = vmatpush.msra.mxu0 %v6269
        %6331 = vmatpush.msra.mxu0 %v6268
        %6332 = vmatpush.msra.mxu0 %v6267
        %6333 = vmatpush.msra.mxu0 %v6266
        %6334 = vmatmul.f32.gmra.mxu0 %v6248
        %v6335 = vpop.f32.mrf.mxu0
        %v6336 = vadd.f32 %v6316, %v6335
        %6337 = vdwg.mxu0
        %6338 = vmatpush.msra.mxu0 %v6297
        %6339 = vmatpush.msra.mxu0 %v6296
        %6340 = vmatpush.msra.mxu0 %v6295
        %6341 = vmatpush.msra.mxu0 %v6294
        %6342 = vmatpush.msra.mxu0 %v6293
        %6343 = vmatpush.msra.mxu0 %v6292
        %6344 = vmatpush.msra.mxu0 %v6291
        %6345 = vmatpush.msra.mxu0 %v6290
        %6346 = vmatpush.msra.mxu0 %v6289
        %6347 = vmatpush.msra.mxu0 %v6288
        %6348 = vmatpush.msra.mxu0 %v6287
        %6349 = vmatpush.msra.mxu0 %v6286
        %6350 = vmatpush.msra.mxu0 %v6285
        %6351 = vmatpush.msra.mxu0 %v6284
        %6352 = vmatpush.msra.mxu0 %v6283
        %6353 = vmatpush.msra.mxu0 %v6282
        %6354 = vmatmul.f32.gmra.mxu0 %v6249
        %v6355 = vpop.f32.mrf.mxu0
        %v6356 = vadd.f32 %v6336, %v6355
        %6357 = vdwg.mxu0
        %vm6358 = vcmask 58368
        %6359 = vst.msk [vmem:[%s525] sm:$0x3] %vm6358, %v6356
        %p6360 = scmp.lt.s32.totalorder %s23, 1
        %s6361 = scalar_select %p6360, %s23, 1
        %s6362 = smul.addr %s6361, 2
        %s6363 = scalar_lea.vmem %s9, %s6362
        // Predicated region
        $region89: #{inception_aux_forward.1} parent=55 // pred_check
          %p6364 = pneg %p250
        $region90: #{inception_aux_forward.1} parent=55 // pred_check_branch
          %6366 = sbr.rel (%p6364) target = $region92
        $region91: #{inception_aux_forward.1} parent=55 // pred_region
          _
        $region92: #{inception_aux_forward.1} parent=55 // pred_fallthru
          _
      $region56: #{inception_aux_forward.1} parent=5 // pred_fallthru
        _
      %p6367 = scmp.le.s32.totalorder 2, %s18
      // Predicated region
      $region93: #{inception_aux_forward.1} parent=5 // pred_check
        %p6368 = pneg %p6367
      $region94: #{inception_aux_forward.1} parent=5 // pred_check_branch
        %6370 = sbr.rel (%p6368) target = $region96
      $region95: #{inception_aux_forward.1} parent=5 // pred_region
        %s6371 = ssub.s32 %s18, 2
        // Predicated region
        $region97: #{inception_aux_forward.1} parent=95 // pred_check
          %p6372 = pneg %p256
        $region98: #{inception_aux_forward.1} parent=95 // pred_check_branch
          %6374 = sbr.rel (%p6372) target = $region100
        $region99: #{inception_aux_forward.1} parent=95 // pred_region
          %p6375 = scmp.lt.s32.totalorder %s24, 1
          %s6376 = scalar_select %p6375, %s24, 1
          %s6377 = smul.addr %s6376, 2
          %s6378 = scalar_lea.vmem %s9, %s6377
        $region100: #{inception_aux_forward.1} parent=95 // pred_fallthru
          _
      $region96: #{inception_aux_forward.1} parent=5 // pred_fallthru
        _
    $region6: #{inception_aux_forward.1} parent=1 // loop_footer
      %s22 = sadd.s32 1, %s18
    $region7: #{inception_aux_forward.1} parent=1 // loop_footer_branch
      %17 = sbr.rel target = $region3
    $region8: #{inception_aux_forward.1} parent=1 // loop_exit
      _
    %6379 = vsyncpa [#allocation4], 1
    %s6380 = scalar_lea.sflag [#allocation4], 1
    %6381 = vsyncpa %s6380, 1
    %6382 = vsyncpa [#allocation6], 1
    %6383 = vsyncpa [#allocation9], 1

</llo_original>
